<compile_context>
chip_gen: v7x
topology: tpu7x:2x2x1
jax: 0.10.0
libtpu: 0.0.40
codegen_flags: <defaults>
</compile_context>

<pallas_src>
import jax
import jax.numpy as jnp
from jax import lax
from jax.experimental import pallas as pl
from jax.experimental.pallas import tpu as pltpu

# config stand-ins (the reference module reads these from `config`)
IMAGE_SIZE = 16
NUM_CLASSES = 10

# MXU operand dtype.  bfloat16 is the native MXU path on v5e/v6e/v7x;
# accumulation is kept in f32 via preferred_element_type.  Set jnp.float32 for
# exact parity with an fp32 PyTorch reference.
MXU_DTYPE = jnp.bfloat16

# Images per grid step.  Lane-padded cost is ~0.9 MiB/image (input block +
# pad scratch + temporaries), so 8 images/step stays ~10-12 MiB of VMEM.
B_TILE_MAX = 8

# Leading "parallel" grid axis of size 2: v7x's two TensorCores each get one
# contiguous half of the batch blocks; harmless on single-core chips.
CORE_SPLIT = 2

VMEM_LIMIT_BYTES = 32 * 1024 * 1024


# ---------------------------------------------------------------------------
# Fused conv block: pad(1) -> 3x3 conv (im2col, one dot) -> bias -> ReLU
# -> 2x2 maxpool.  Operates on a (B_TILE, H, W, Cin) activation block.
# ---------------------------------------------------------------------------
def _conv_relu_pool(x, w_ref, b_ref, pad_ref, first_step):
    # x:       (B, H, W, Cin) f32 value (NHWC, channels on lanes)
    # w_ref:   (9*Cin, Cout)  im2col weight, K order = (dy, dx, cin), MXU dtype
    # b_ref:   (1, Cout)      f32
    # pad_ref: (B, H+2, W+16, Cin) persistent VMEM scratch for zero padding
    B, H, W, Cin = x.shape
    Cout = w_ref.shape[1]

    # Zero the padded scratch only on the first step executed by this core.
    # The interior store below overwrites every non-border element on every
    # step, and scratch persists across grid steps, so the zero border
    # survives.  program_id(1)==0 occurs once per "parallel" index, i.e. once
    # per TensorCore, so this is megacore-safe.
    @pl.when(first_step)
    def _():
        pad_ref[...] = jnp.zeros_like(pad_ref)

    # Interior at row offset 1 and (tile-aligned) sublane offset 8, so the
    # store is aligned; only the 9 tap *loads* below are unaligned.
    pad_ref[:, 1:H + 1, 8:8 + W, :] = x

    # im2col: 9 shifted views concatenated on the lane axis -> one big-K dot.
    # TODO(synk): if a bundle profile shows XLU/VALU saturating, replace the
    # Cin=3 (conv1) lane concat with VPU broadcast-MACs; conv2/conv3 are fine.
    taps = [pad_ref[:, dy:dy + H, 7 + dx:7 + dx + W, :]
            for dy in range(3) for dx in range(3)]
    patches = jnp.concatenate(taps, axis=-1).reshape(B * H * W, 9 * Cin)

    y = jnp.dot(patches.astype(w_ref.dtype), w_ref[...],
                preferred_element_type=jnp.float32)
    y = jnp.maximum(y + b_ref[...], 0.0)               # bias + ReLU (f32 VPU)

    # 2x2 max pool, stride 2.
    y = y.reshape(B * (H // 2), 2, W // 2, 2, Cout)
    y = jnp.max(y, axis=(1, 3))                        # (B*H/2, W/2, Cout)
    return y.reshape(B, H // 2, W // 2, Cout)


# ---------------------------------------------------------------------------
# One fused kernel for the whole forward (B_TILE images per grid step)
# ---------------------------------------------------------------------------
def fused_cnn_kernel(x_ref, w1, b1, w2, b2, w3, b3, fw1, fb1, fw2, fb2,
                     o_ref, pad1, pad2, pad3):
    first_step = pl.program_id(1) == 0

    a = x_ref[...]                                     # (B, H, W, 3)
    a = _conv_relu_pool(a, w1, b1, pad1, first_step)   # (B, H/2, W/2, 32)
    a = _conv_relu_pool(a, w2, b2, pad2, first_step)   # (B, H/4, W/4, 64)
    a = _conv_relu_pool(a, w3, b3, pad3, first_step)   # (B, H/8, W/8, 128)
    # dropout1: identity in eval/inference mode.
    # TODO(synk): training-mode dropout (pltpu.prng_*) not implemented.

    B, hh, ww, co = a.shape
    hw = hh * ww
    feat = a.reshape(B, hw, co)                        # NHWC (h, w, c) order

    # fc1 + bias + ReLU as `hw` aligned (B, co) x (co, 512) dots; fc1 weight
    # rows are stored in NHWC flatten order at init so no transpose is needed.
    h = fb1[...]                                       # (1, 512) f32
    for k in range(hw):
        h = h + jnp.dot(feat[:, k, :].astype(fw1.dtype),
                        fw1[k * co:(k + 1) * co, :],
                        preferred_element_type=jnp.float32)
    h = jnp.maximum(h, 0.0)
    # dropout2: identity in eval/inference mode.

    out = jnp.dot(h.astype(fw2.dtype), fw2[...],
                  preferred_element_type=jnp.float32) + fb2[...]
    o_ref[...] = out[None].astype(o_ref.dtype)         # (1, B, ncls_pad)


# ---------------------------------------------------------------------------
# Wrapper: single pallas_call for the whole network
# ---------------------------------------------------------------------------
@jax.jit
def simple_cnn_forward(params, x_nchw):
    N, C, H, W = x_nchw.shape
    x = jnp.transpose(x_nchw, (0, 2, 3, 1))            # NCHW -> NHWC

    num_classes = params["fc2_w"].shape[1]
    ncls_pad = -(-num_classes // 128) * 128            # lane-dense logits

    # Batch tiling: B_TILE images per step, block count rounded up to a
    # multiple of CORE_SPLIT so the parallel axis divides evenly.
    b_tile = min(B_TILE_MAX, max(1, -(-N // CORE_SPLIT)))
    n_blocks = -(-N // b_tile)
    n_blocks = -(-n_blocks // CORE_SPLIT) * CORE_SPLIT
    bps = n_blocks // CORE_SPLIT                       # blocks per core split
    n_pad = n_blocks * b_tile
    if n_pad != N:
        x = jnp.pad(x, ((0, n_pad - N), (0, 0), (0, 0), (0, 0)))

    # Weights: cast to the MXU dtype ONCE here (not per grid step).
    w1 = params["conv1_w"].astype(MXU_DTYPE)
    w2 = params["conv2_w"].astype(MXU_DTYPE)
    w3 = params["conv3_w"].astype(MXU_DTYPE)
    fw1 = params["fc1_w"].astype(MXU_DTYPE)
    # fc2 weight/bias padded to a full 128-lane tile -> unmasked stores; the
    # real classes are sliced back out below.
    fw2 = jnp.zeros((params["fc2_w"].shape[0], ncls_pad), MXU_DTYPE)
    fw2 = fw2.at[:, :num_classes].set(params["fc2_w"].astype(MXU_DTYPE))
    fb2 = jnp.zeros((1, ncls_pad), jnp.float32)
    fb2 = fb2.at[:, :num_classes].set(params["fc2_b"])
    b1, b2, b3, fb1 = (params["conv1_b"], params["conv2_b"],
                       params["conv3_b"], params["fc1_b"])

    c1o = params["conv1_w"].shape[1]
    c2o = params["conv2_w"].shape[1]

    def batch_map(i, j):
        return (i * bps + j, 0, 0, 0)

    def out_map(i, j):
        return (i * bps + j, 0, 0)

    def wmap(i, j):
        return (0, 0)

    def wspec(a):
        return pl.BlockSpec(a.shape, wmap)

    out = pl.pallas_call(
        fused_cnn_kernel,
        out_shape=jax.ShapeDtypeStruct((n_blocks, b_tile, ncls_pad),
                                       jnp.float32),
        grid=(CORE_SPLIT, bps),
        in_specs=[
            pl.BlockSpec((b_tile, H, W, C), batch_map),
            wspec(w1), wspec(b1),
            wspec(w2), wspec(b2),
            wspec(w3), wspec(b3),
            wspec(fw1), wspec(fb1),
            wspec(fw2), wspec(fb2),
        ],
        out_specs=pl.BlockSpec((1, b_tile, ncls_pad), out_map),
        scratch_shapes=[
            pltpu.VMEM((b_tile, H + 2, W + 16, C), jnp.float32),
            pltpu.VMEM((b_tile, H // 2 + 2, W // 2 + 16, c1o), jnp.float32),
            pltpu.VMEM((b_tile, H // 4 + 2, W // 4 + 16, c2o), jnp.float32),
        ],
        compiler_params=pltpu.CompilerParams(
            dimension_semantics=("parallel", "arbitrary"),
            vmem_limit_bytes=VMEM_LIMIT_BYTES),
    )(x, w1, b1, w2, b2, w3, b3, fw1, fb1, fw2, fb2)

    return out.reshape(n_pad, ncls_pad)[:N, :num_classes]


# ---------------------------------------------------------------------------
# Parameter construction (deterministic, synthetic) in kernel-friendly layouts
# ---------------------------------------------------------------------------
def init_params(key):
    ks = jax.random.split(key, 10)
    conv_out = IMAGE_SIZE // 8
    flat = 128 * conv_out * conv_out

    def conv_w(k, cin, cout):
        # im2col layout (9*Cin, Cout), K order (dy, dx, cin).
        # From a torch Conv2d weight (Cout, Cin, 3, 3):
        #   w.permute(2, 3, 1, 0).reshape(9*Cin, Cout)
        w = jax.random.normal(k, (3, 3, cin, cout), jnp.float32) * 0.05
        return w.reshape(9 * cin, cout)

    return {
        "conv1_w": conv_w(ks[0], 3, 32),
        "conv1_b": jax.random.normal(ks[1], (1, 32), jnp.float32) * 0.05,
        "conv2_w": conv_w(ks[2], 32, 64),
        "conv2_b": jax.random.normal(ks[3], (1, 64), jnp.float32) * 0.05,
        "conv3_w": conv_w(ks[4], 64, 128),
        "conv3_b": jax.random.normal(ks[5], (1, 128), jnp.float32) * 0.05,
        # fc1 weight stored (flat, 512) with rows in NHWC (h, w, c) flatten
        # order.  From torch fc1.weight (512, C*H*W):
        #   w.T.reshape(C, Hc, Wc, 512).transpose(1, 2, 0, 3).reshape(flat, 512)
        "fc1_w": jax.random.normal(ks[6], (flat, 512), jnp.float32) * 0.02,
        "fc1_b": jax.random.normal(ks[7], (1, 512), jnp.float32) * 0.02,
        "fc2_w": jax.random.normal(ks[8], (512, NUM_CLASSES), jnp.float32) * 0.02,
        "fc2_b": jax.random.normal(ks[9], (1, NUM_CLASSES), jnp.float32) * 0.02,
    }


# ---------------------------------------------------------------------------
# Pure-JAX f32 reference (same layouts) for a correctness spot-check
# ---------------------------------------------------------------------------
def _reference_forward(params, x_nchw):
    N = x_nchw.shape[0]
    x = jnp.transpose(x_nchw, (0, 2, 3, 1))            # NHWC

    def conv_block(x, w_flat, b):
        cin = x.shape[-1]
        w = w_flat.reshape(3, 3, cin, -1)               # HWIO
        y = lax.conv_general_dilated(
            x, w, (1, 1), "SAME",
            dimension_numbers=("NHWC", "HWIO", "NHWC"))
        y = jnp.maximum(y + b.reshape(1, 1, 1, -1), 0.0)
        return lax.reduce_window(y, -jnp.inf, lax.max,
                                 (1, 2, 2, 1), (1, 2, 2, 1), "VALID")

    x = conv_block(x, params["conv1_w"], params["conv1_b"])
    x = conv_block(x, params["conv2_w"], params["conv2_b"])
    x = conv_block(x, params["conv3_w"], params["conv3_b"])
    x = x.reshape(N, -1)                                # NHWC flatten order
    x = jnp.maximum(x @ params["fc1_w"] + params["fc1_b"], 0.0)
    return x @ params["fc2_w"] + params["fc2_b"]


if __name__ == "__main__":
    key = jax.random.PRNGKey(0)
    pkey, xkey = jax.random.split(key)
    params = init_params(pkey)

    # NCHW input, same convention as the PyTorch module.
    x = jax.random.normal(xkey, (2, 3, IMAGE_SIZE, IMAGE_SIZE), jnp.float32)

    out = simple_cnn_forward(params, x)
    jax.block_until_ready(out)
    assert out.shape == (2, NUM_CLASSES), out.shape

    ref = _reference_forward(params, x)
    # Tolerance deliberately loosened vs the f32 reference because the kernel
    # uses bf16 MXU operands (f32 accumulation); observed error is ~1e-3.
    assert bool(jnp.allclose(out, ref, atol=3e-2, rtol=3e-2)), (
        float(jnp.max(jnp.abs(out - ref))))
    print("KERNEL_OK")
</pallas_src>

<mosaic_0001>
module attributes {stable_mosaic.version = 11 : i64} {
  func.func @fused_cnn_kernel(%arg0: i32, %arg1: i32, %arg2: memref<1x16x16x3xf32, #tpu.memory_space<vmem>>, %arg3: memref<27x32xbf16, #tpu.memory_space<vmem>>, %arg4: memref<1x32xf32, #tpu.memory_space<vmem>>, %arg5: memref<288x64xbf16, #tpu.memory_space<vmem>>, %arg6: memref<1x64xf32, #tpu.memory_space<vmem>>, %arg7: memref<576x128xbf16, #tpu.memory_space<vmem>>, %arg8: memref<1x128xf32, #tpu.memory_space<vmem>>, %arg9: memref<512x512xbf16, #tpu.memory_space<vmem>>, %arg10: memref<1x512xf32, #tpu.memory_space<vmem>>, %arg11: memref<512x128xbf16, #tpu.memory_space<vmem>>, %arg12: memref<1x128xf32, #tpu.memory_space<vmem>>, %arg13: memref<1x1x128xf32, #tpu.memory_space<vmem>>, %arg14: memref<1x18x32x3xf32, #tpu.memory_space<vmem>>, %arg15: memref<1x10x24x32xf32, #tpu.memory_space<vmem>>, %arg16: memref<1x6x20x64xf32, #tpu.memory_space<vmem>>) attributes {dimension_semantics = [#tpu.dimension_semantics<parallel>, #tpu.dimension_semantics<arbitrary>], iteration_bounds = array<i64: 2, 1>, scalar_prefetch = 0 : i64, scratch_operands = 3 : i64, tpu.core_type = #tpu.core_type<tc>, window_params = [{transform_indices = @transform_0, window_bounds = array<i64: 1, 16, 16, 3>}, {pipeline_mode = #tpu.pipeline_mode<synchronous>, transform_indices = @transform_1, window_bounds = array<i64: 27, 32>}, {pipeline_mode = #tpu.pipeline_mode<synchronous>, transform_indices = @transform_2, window_bounds = array<i64: 1, 32>}, {pipeline_mode = #tpu.pipeline_mode<synchronous>, transform_indices = @transform_3, window_bounds = array<i64: 288, 64>}, {pipeline_mode = #tpu.pipeline_mode<synchronous>, transform_indices = @transform_4, window_bounds = array<i64: 1, 64>}, {pipeline_mode = #tpu.pipeline_mode<synchronous>, transform_indices = @transform_5, window_bounds = array<i64: 576, 128>}, {pipeline_mode = #tpu.pipeline_mode<synchronous>, transform_indices = @transform_6, window_bounds = array<i64: 1, 128>}, {pipeline_mode = #tpu.pipeline_mode<synchronous>, transform_indices = @transform_7, window_bounds = array<i64: 512, 512>}, {pipeline_mode = #tpu.pipeline_mode<synchronous>, transform_indices = @transform_8, window_bounds = array<i64: 1, 512>}, {pipeline_mode = #tpu.pipeline_mode<synchronous>, transform_indices = @transform_9, window_bounds = array<i64: 512, 128>}, {pipeline_mode = #tpu.pipeline_mode<synchronous>, transform_indices = @transform_10, window_bounds = array<i64: 1, 128>}, {transform_indices = @transform_11, window_bounds = array<i64: 1, 1, 128>}]} {
    %c0_i32 = arith.constant 0 : i32
    %0 = arith.cmpi eq, %arg1, %c0_i32 : i32
    %c0 = arith.constant 0 : index
    %c0_0 = arith.constant 0 : index
    %c0_1 = arith.constant 0 : index
    %c0_2 = arith.constant 0 : index
    %1 = vector.load %arg2[%c0, %c0_0, %c0_1, %c0_2] : memref<1x16x16x3xf32, #tpu.memory_space<vmem>>, vector<1x16x16x3xf32>
    %2 = arith.extui %0 : i1 to i32
    %c0_i32_3 = arith.constant 0 : i32
    %3 = arith.cmpi ne, %2, %c0_i32_3 : i32
    scf.if %3 {
      %cst_161 = arith.constant 0.000000e+00 : f32
      %112 = vector.broadcast %cst_161 : f32 to vector<1x18x32x3xf32>
      %c0_162 = arith.constant 0 : index
      %c0_163 = arith.constant 0 : index
      %c0_164 = arith.constant 0 : index
      %c0_165 = arith.constant 0 : index
      %113 = vector.load %arg14[%c0_162, %c0_163, %c0_164, %c0_165] : memref<1x18x32x3xf32, #tpu.memory_space<vmem>>, vector<1x18x32x3xf32>
      tpu.vector_store %arg14[%c0_162, %c0_163, %c0_164, %c0_165], %112 {strides = array<i32>} : memref<1x18x32x3xf32, #tpu.memory_space<vmem>>, vector<1x18x32x3xf32>,
    } else {
    }
    %c0_4 = arith.constant 0 : index
    %c1 = arith.constant 1 : index
    %c8 = arith.constant 8 : index
    %c0_5 = arith.constant 0 : index
    %4 = vector.load %arg14[%c0_4, %c1, %c8, %c0_5] : memref<1x18x32x3xf32, #tpu.memory_space<vmem>>, vector<1x16x16x3xf32>
    tpu.vector_store %arg14[%c0_4, %c1, %c8, %c0_5], %1 {strides = array<i32>} : memref<1x18x32x3xf32, #tpu.memory_space<vmem>>, vector<1x16x16x3xf32>,
    %c0_6 = arith.constant 0 : index
    %c0_7 = arith.constant 0 : index
    %c7 = arith.constant 7 : index
    %c0_8 = arith.constant 0 : index
    %5 = vector.load %arg14[%c0_6, %c0_7, %c7, %c0_8] : memref<1x18x32x3xf32, #tpu.memory_space<vmem>>, vector<1x16x16x3xf32>
    %c0_9 = arith.constant 0 : index
    %c0_10 = arith.constant 0 : index
    %c8_11 = arith.constant 8 : index
    %c0_12 = arith.constant 0 : index
    %6 = vector.load %arg14[%c0_9, %c0_10, %c8_11, %c0_12] : memref<1x18x32x3xf32, #tpu.memory_space<vmem>>, vector<1x16x16x3xf32>
    %c0_13 = arith.constant 0 : index
    %c0_14 = arith.constant 0 : index
    %c9 = arith.constant 9 : index
    %c0_15 = arith.constant 0 : index
    %7 = vector.load %arg14[%c0_13, %c0_14, %c9, %c0_15] : memref<1x18x32x3xf32, #tpu.memory_space<vmem>>, vector<1x16x16x3xf32>
    %c0_16 = arith.constant 0 : index
    %c1_17 = arith.constant 1 : index
    %c7_18 = arith.constant 7 : index
    %c0_19 = arith.constant 0 : index
    %8 = vector.load %arg14[%c0_16, %c1_17, %c7_18, %c0_19] : memref<1x18x32x3xf32, #tpu.memory_space<vmem>>, vector<1x16x16x3xf32>
    %c0_20 = arith.constant 0 : index
    %c1_21 = arith.constant 1 : index
    %c8_22 = arith.constant 8 : index
    %c0_23 = arith.constant 0 : index
    %9 = vector.load %arg14[%c0_20, %c1_21, %c8_22, %c0_23] : memref<1x18x32x3xf32, #tpu.memory_space<vmem>>, vector<1x16x16x3xf32>
    %c0_24 = arith.constant 0 : index
    %c1_25 = arith.constant 1 : index
    %c9_26 = arith.constant 9 : index
    %c0_27 = arith.constant 0 : index
    %10 = vector.load %arg14[%c0_24, %c1_25, %c9_26, %c0_27] : memref<1x18x32x3xf32, #tpu.memory_space<vmem>>, vector<1x16x16x3xf32>
    %c0_28 = arith.constant 0 : index
    %c2 = arith.constant 2 : index
    %c7_29 = arith.constant 7 : index
    %c0_30 = arith.constant 0 : index
    %11 = vector.load %arg14[%c0_28, %c2, %c7_29, %c0_30] : memref<1x18x32x3xf32, #tpu.memory_space<vmem>>, vector<1x16x16x3xf32>
    %c0_31 = arith.constant 0 : index
    %c2_32 = arith.constant 2 : index
    %c8_33 = arith.constant 8 : index
    %c0_34 = arith.constant 0 : index
    %12 = vector.load %arg14[%c0_31, %c2_32, %c8_33, %c0_34] : memref<1x18x32x3xf32, #tpu.memory_space<vmem>>, vector<1x16x16x3xf32>
    %c0_35 = arith.constant 0 : index
    %c2_36 = arith.constant 2 : index
    %c9_37 = arith.constant 9 : index
    %c0_38 = arith.constant 0 : index
    %13 = vector.load %arg14[%c0_35, %c2_36, %c9_37, %c0_38] : memref<1x18x32x3xf32, #tpu.memory_space<vmem>>, vector<1x16x16x3xf32>
    %14 = tpu.concatenate %5, %6, %7, %8, %9, %10, %11, %12, %13 in 3 : vector<1x16x16x3xf32>, vector<1x16x16x3xf32>, vector<1x16x16x3xf32>, vector<1x16x16x3xf32>, vector<1x16x16x3xf32>, vector<1x16x16x3xf32>, vector<1x16x16x3xf32>, vector<1x16x16x3xf32>, vector<1x16x16x3xf32> -> vector<1x16x16x27xf32>
    %15 = vector.shape_cast %14 : vector<1x16x16x27xf32> to vector<256x27xf32>
    %16 = arith.truncf %15 : vector<256x27xf32> to vector<256x27xbf16>
    %c0_39 = arith.constant 0 : index
    %c0_40 = arith.constant 0 : index
    %17 = vector.load %arg3[%c0_39, %c0_40] : memref<27x32xbf16, #tpu.memory_space<vmem>>, vector<27x32xbf16>
    %cst = arith.constant dense<0.000000e+00> : vector<256x32xf32>
    %18 = tpu.matmul %16, %17, %cst {dimension_numbers = #tpu.dot_dimension_numbers<[1], [0], [0], [1], [0, 0, 1, 1], [], []>} : vector<256x27xbf16>, vector<27x32xbf16>, vector<256x32xf32> -> vector<256x32xf32>
    %c0_41 = arith.constant 0 : index
    %c0_42 = arith.constant 0 : index
    %19 = vector.load %arg4[%c0_41, %c0_42] : memref<1x32xf32, #tpu.memory_space<vmem>>, vector<1x32xf32>
    %20 = vector.broadcast %19 : vector<1x32xf32> to vector<256x32xf32>
    %21 = arith.addf %18, %20 : vector<256x32xf32>
    %cst_43 = arith.constant 0.000000e+00 : f32
    %22 = vector.broadcast %cst_43 : f32 to vector<256x32xf32>
    %23 = arith.maximumf %21, %22 : vector<256x32xf32>
    %24 = vector.shape_cast %23 : vector<256x32xf32> to vector<8x2x8x2x32xf32>
    %cst_44 = arith.constant dense<0xFF800000> : vector<8x8x32xf32>
    %25 = vector.multi_reduction <maximumf>, %24, %cst_44 [1, 3] : vector<8x2x8x2x32xf32> to vector<8x8x32xf32>
    %26 = vector.shape_cast %25 : vector<8x8x32xf32> to vector<1x8x8x32xf32>
    %27 = arith.extui %0 : i1 to i32
    %c0_i32_45 = arith.constant 0 : i32
    %28 = arith.cmpi ne, %27, %c0_i32_45 : i32
    scf.if %28 {
      %cst_161 = arith.constant 0.000000e+00 : f32
      %112 = vector.broadcast %cst_161 : f32 to vector<1x10x24x32xf32>
      %c0_162 = arith.constant 0 : index
      %c0_163 = arith.constant 0 : index
      %c0_164 = arith.constant 0 : index
      %c0_165 = arith.constant 0 : index
      %113 = vector.load %arg15[%c0_162, %c0_163, %c0_164, %c0_165] : memref<1x10x24x32xf32, #tpu.memory_space<vmem>>, vector<1x10x24x32xf32>
      tpu.vector_store %arg15[%c0_162, %c0_163, %c0_164, %c0_165], %112 {strides = array<i32>} : memref<1x10x24x32xf32, #tpu.memory_space<vmem>>, vector<1x10x24x32xf32>,
    } else {
    }
    %c0_46 = arith.constant 0 : index
    %c1_47 = arith.constant 1 : index
    %c8_48 = arith.constant 8 : index
    %c0_49 = arith.constant 0 : index
    %29 = vector.load %arg15[%c0_46, %c1_47, %c8_48, %c0_49] : memref<1x10x24x32xf32, #tpu.memory_space<vmem>>, vector<1x8x8x32xf32>
    tpu.vector_store %arg15[%c0_46, %c1_47, %c8_48, %c0_49], %26 {strides = array<i32>} : memref<1x10x24x32xf32, #tpu.memory_space<vmem>>, vector<1x8x8x32xf32>,
    %c0_50 = arith.constant 0 : index
    %c0_51 = arith.constant 0 : index
    %c7_52 = arith.constant 7 : index
    %c0_53 = arith.constant 0 : index
    %30 = vector.load %arg15[%c0_50, %c0_51, %c7_52, %c0_53] : memref<1x10x24x32xf32, #tpu.memory_space<vmem>>, vector<1x8x8x32xf32>
    %c0_54 = arith.constant 0 : index
    %c0_55 = arith.constant 0 : index
    %c8_56 = arith.constant 8 : index
    %c0_57 = arith.constant 0 : index
    %31 = vector.load %arg15[%c0_54, %c0_55, %c8_56, %c0_57] : memref<1x10x24x32xf32, #tpu.memory_space<vmem>>, vector<1x8x8x32xf32>
    %c0_58 = arith.constant 0 : index
    %c0_59 = arith.constant 0 : index
    %c9_60 = arith.constant 9 : index
    %c0_61 = arith.constant 0 : index
    %32 = vector.load %arg15[%c0_58, %c0_59, %c9_60, %c0_61] : memref<1x10x24x32xf32, #tpu.memory_space<vmem>>, vector<1x8x8x32xf32>
    %c0_62 = arith.constant 0 : index
    %c1_63 = arith.constant 1 : index
    %c7_64 = arith.constant 7 : index
    %c0_65 = arith.constant 0 : index
    %33 = vector.load %arg15[%c0_62, %c1_63, %c7_64, %c0_65] : memref<1x10x24x32xf32, #tpu.memory_space<vmem>>, vector<1x8x8x32xf32>
    %c0_66 = arith.constant 0 : index
    %c1_67 = arith.constant 1 : index
    %c8_68 = arith.constant 8 : index
    %c0_69 = arith.constant 0 : index
    %34 = vector.load %arg15[%c0_66, %c1_67, %c8_68, %c0_69] : memref<1x10x24x32xf32, #tpu.memory_space<vmem>>, vector<1x8x8x32xf32>
    %c0_70 = arith.constant 0 : index
    %c1_71 = arith.constant 1 : index
    %c9_72 = arith.constant 9 : index
    %c0_73 = arith.constant 0 : index
    %35 = vector.load %arg15[%c0_70, %c1_71, %c9_72, %c0_73] : memref<1x10x24x32xf32, #tpu.memory_space<vmem>>, vector<1x8x8x32xf32>
    %c0_74 = arith.constant 0 : index
    %c2_75 = arith.constant 2 : index
    %c7_76 = arith.constant 7 : index
    %c0_77 = arith.constant 0 : index
    %36 = vector.load %arg15[%c0_74, %c2_75, %c7_76, %c0_77] : memref<1x10x24x32xf32, #tpu.memory_space<vmem>>, vector<1x8x8x32xf32>
    %c0_78 = arith.constant 0 : index
    %c2_79 = arith.constant 2 : index
    %c8_80 = arith.constant 8 : index
    %c0_81 = arith.constant 0 : index
    %37 = vector.load %arg15[%c0_78, %c2_79, %c8_80, %c0_81] : memref<1x10x24x32xf32, #tpu.memory_space<vmem>>, vector<1x8x8x32xf32>
    %c0_82 = arith.constant 0 : index
    %c2_83 = arith.constant 2 : index
    %c9_84 = arith.constant 9 : index
    %c0_85 = arith.constant 0 : index
    %38 = vector.load %arg15[%c0_82, %c2_83, %c9_84, %c0_85] : memref<1x10x24x32xf32, #tpu.memory_space<vmem>>, vector<1x8x8x32xf32>
    %39 = tpu.concatenate %30, %31, %32, %33, %34, %35, %36, %37, %38 in 3 : vector<1x8x8x32xf32>, vector<1x8x8x32xf32>, vector<1x8x8x32xf32>, vector<1x8x8x32xf32>, vector<1x8x8x32xf32>, vector<1x8x8x32xf32>, vector<1x8x8x32xf32>, vector<1x8x8x32xf32>, vector<1x8x8x32xf32> -> vector<1x8x8x288xf32>
    %40 = vector.shape_cast %39 : vector<1x8x8x288xf32> to vector<64x288xf32>
    %41 = arith.truncf %40 : vector<64x288xf32> to vector<64x288xbf16>
    %c0_86 = arith.constant 0 : index
    %c0_87 = arith.constant 0 : index
    %42 = vector.load %arg5[%c0_86, %c0_87] : memref<288x64xbf16, #tpu.memory_space<vmem>>, vector<288x64xbf16>
    %cst_88 = arith.constant dense<0.000000e+00> : vector<64x64xf32>
    %43 = tpu.matmul %41, %42, %cst_88 {dimension_numbers = #tpu.dot_dimension_numbers<[1], [0], [0], [1], [0, 0, 1, 1], [], []>} : vector<64x288xbf16>, vector<288x64xbf16>, vector<64x64xf32> -> vector<64x64xf32>
    %c0_89 = arith.constant 0 : index
    %c0_90 = arith.constant 0 : index
    %44 = vector.load %arg6[%c0_89, %c0_90] : memref<1x64xf32, #tpu.memory_space<vmem>>, vector<1x64xf32>
    %45 = vector.broadcast %44 : vector<1x64xf32> to vector<64x64xf32>
    %46 = arith.addf %43, %45 : vector<64x64xf32>
    %cst_91 = arith.constant 0.000000e+00 : f32
    %47 = vector.broadcast %cst_91 : f32 to vector<64x64xf32>
    %48 = arith.maximumf %46, %47 : vector<64x64xf32>
    %49 = vector.shape_cast %48 : vector<64x64xf32> to vector<4x2x4x2x64xf32>
    %cst_92 = arith.constant dense<0xFF800000> : vector<4x4x64xf32>
    %50 = vector.multi_reduction <maximumf>, %49, %cst_92 [1, 3] : vector<4x2x4x2x64xf32> to vector<4x4x64xf32>
    %51 = vector.shape_cast %50 : vector<4x4x64xf32> to vector<1x4x4x64xf32>
    %52 = arith.extui %0 : i1 to i32
    %c0_i32_93 = arith.constant 0 : i32
    %53 = arith.cmpi ne, %52, %c0_i32_93 : i32
    scf.if %53 {
      %cst_161 = arith.constant 0.000000e+00 : f32
      %112 = vector.broadcast %cst_161 : f32 to vector<1x6x20x64xf32>
      %c0_162 = arith.constant 0 : index
      %c0_163 = arith.constant 0 : index
      %c0_164 = arith.constant 0 : index
      %c0_165 = arith.constant 0 : index
      %113 = vector.load %arg16[%c0_162, %c0_163, %c0_164, %c0_165] : memref<1x6x20x64xf32, #tpu.memory_space<vmem>>, vector<1x6x20x64xf32>
      tpu.vector_store %arg16[%c0_162, %c0_163, %c0_164, %c0_165], %112 {strides = array<i32>} : memref<1x6x20x64xf32, #tpu.memory_space<vmem>>, vector<1x6x20x64xf32>,
    } else {
    }
    %c0_94 = arith.constant 0 : index
    %c1_95 = arith.constant 1 : index
    %c8_96 = arith.constant 8 : index
    %c0_97 = arith.constant 0 : index
    %54 = vector.load %arg16[%c0_94, %c1_95, %c8_96, %c0_97] : memref<1x6x20x64xf32, #tpu.memory_space<vmem>>, vector<1x4x4x64xf32>
    tpu.vector_store %arg16[%c0_94, %c1_95, %c8_96, %c0_97], %51 {strides = array<i32>} : memref<1x6x20x64xf32, #tpu.memory_space<vmem>>, vector<1x4x4x64xf32>,
    %c0_98 = arith.constant 0 : index
    %c0_99 = arith.constant 0 : index
    %c7_100 = arith.constant 7 : index
    %c0_101 = arith.constant 0 : index
    %55 = vector.load %arg16[%c0_98, %c0_99, %c7_100, %c0_101] : memref<1x6x20x64xf32, #tpu.memory_space<vmem>>, vector<1x4x4x64xf32>
    %c0_102 = arith.constant 0 : index
    %c0_103 = arith.constant 0 : index
    %c8_104 = arith.constant 8 : index
    %c0_105 = arith.constant 0 : index
    %56 = vector.load %arg16[%c0_102, %c0_103, %c8_104, %c0_105] : memref<1x6x20x64xf32, #tpu.memory_space<vmem>>, vector<1x4x4x64xf32>
    %c0_106 = arith.constant 0 : index
    %c0_107 = arith.constant 0 : index
    %c9_108 = arith.constant 9 : index
    %c0_109 = arith.constant 0 : index
    %57 = vector.load %arg16[%c0_106, %c0_107, %c9_108, %c0_109] : memref<1x6x20x64xf32, #tpu.memory_space<vmem>>, vector<1x4x4x64xf32>
    %c0_110 = arith.constant 0 : index
    %c1_111 = arith.constant 1 : index
    %c7_112 = arith.constant 7 : index
    %c0_113 = arith.constant 0 : index
    %58 = vector.load %arg16[%c0_110, %c1_111, %c7_112, %c0_113] : memref<1x6x20x64xf32, #tpu.memory_space<vmem>>, vector<1x4x4x64xf32>
    %c0_114 = arith.constant 0 : index
    %c1_115 = arith.constant 1 : index
    %c8_116 = arith.constant 8 : index
    %c0_117 = arith.constant 0 : index
    %59 = vector.load %arg16[%c0_114, %c1_115, %c8_116, %c0_117] : memref<1x6x20x64xf32, #tpu.memory_space<vmem>>, vector<1x4x4x64xf32>
    %c0_118 = arith.constant 0 : index
    %c1_119 = arith.constant 1 : index
    %c9_120 = arith.constant 9 : index
    %c0_121 = arith.constant 0 : index
    %60 = vector.load %arg16[%c0_118, %c1_119, %c9_120, %c0_121] : memref<1x6x20x64xf32, #tpu.memory_space<vmem>>, vector<1x4x4x64xf32>
    %c0_122 = arith.constant 0 : index
    %c2_123 = arith.constant 2 : index
    %c7_124 = arith.constant 7 : index
    %c0_125 = arith.constant 0 : index
    %61 = vector.load %arg16[%c0_122, %c2_123, %c7_124, %c0_125] : memref<1x6x20x64xf32, #tpu.memory_space<vmem>>, vector<1x4x4x64xf32>
    %c0_126 = arith.constant 0 : index
    %c2_127 = arith.constant 2 : index
    %c8_128 = arith.constant 8 : index
    %c0_129 = arith.constant 0 : index
    %62 = vector.load %arg16[%c0_126, %c2_127, %c8_128, %c0_129] : memref<1x6x20x64xf32, #tpu.memory_space<vmem>>, vector<1x4x4x64xf32>
    %c0_130 = arith.constant 0 : index
    %c2_131 = arith.constant 2 : index
    %c9_132 = arith.constant 9 : index
    %c0_133 = arith.constant 0 : index
    %63 = vector.load %arg16[%c0_130, %c2_131, %c9_132, %c0_133] : memref<1x6x20x64xf32, #tpu.memory_space<vmem>>, vector<1x4x4x64xf32>
    %64 = tpu.concatenate %55, %56, %57, %58, %59, %60, %61, %62, %63 in 3 : vector<1x4x4x64xf32>, vector<1x4x4x64xf32>, vector<1x4x4x64xf32>, vector<1x4x4x64xf32>, vector<1x4x4x64xf32>, vector<1x4x4x64xf32>, vector<1x4x4x64xf32>, vector<1x4x4x64xf32>, vector<1x4x4x64xf32> -> vector<1x4x4x576xf32>
    %65 = vector.shape_cast %64 : vector<1x4x4x576xf32> to vector<16x576xf32>
    %66 = arith.truncf %65 : vector<16x576xf32> to vector<16x576xbf16>
    %c0_134 = arith.constant 0 : index
    %c0_135 = arith.constant 0 : index
    %67 = vector.load %arg7[%c0_134, %c0_135] : memref<576x128xbf16, #tpu.memory_space<vmem>>, vector<576x128xbf16>
    %cst_136 = arith.constant dense<0.000000e+00> : vector<16x128xf32>
    %68 = tpu.matmul %66, %67, %cst_136 {dimension_numbers = #tpu.dot_dimension_numbers<[1], [0], [0], [1], [0, 0, 1, 1], [], []>} : vector<16x576xbf16>, vector<576x128xbf16>, vector<16x128xf32> -> vector<16x128xf32>
    %c0_137 = arith.constant 0 : index
    %c0_138 = arith.constant 0 : index
    %69 = vector.load %arg8[%c0_137, %c0_138] : memref<1x128xf32, #tpu.memory_space<vmem>>, vector<1x128xf32>
    %70 = vector.broadcast %69 : vector<1x128xf32> to vector<16x128xf32>
    %71 = arith.addf %68, %70 : vector<16x128xf32>
    %cst_139 = arith.constant 0.000000e+00 : f32
    %72 = vector.broadcast %cst_139 : f32 to vector<16x128xf32>
    %73 = arith.maximumf %71, %72 : vector<16x128xf32>
    %74 = vector.shape_cast %73 : vector<16x128xf32> to vector<2x2x2x2x128xf32>
    %cst_140 = arith.constant dense<0xFF800000> : vector<2x2x128xf32>
    %75 = vector.multi_reduction <maximumf>, %74, %cst_140 [1, 3] : vector<2x2x2x2x128xf32> to vector<2x2x128xf32>
    %76 = vector.shape_cast %75 : vector<2x2x128xf32> to vector<1x2x2x128xf32>
    %77 = vector.shape_cast %76 : vector<1x2x2x128xf32> to vector<1x4x128xf32>
    %c0_141 = arith.constant 0 : index
    %c0_142 = arith.constant 0 : index
    %78 = vector.load %arg10[%c0_141, %c0_142] : memref<1x512xf32, #tpu.memory_space<vmem>>, vector<1x512xf32>
    %79 = vector.extract_strided_slice %77 {offsets = [0, 0, 0], sizes = [1, 1, 128], strides = [1, 1, 1]} : vector<1x4x128xf32> to vector<1x1x128xf32>
    %80 = vector.shape_cast %79 : vector<1x1x128xf32> to vector<1x128xf32>
    %81 = arith.truncf %80 : vector<1x128xf32> to vector<1x128xbf16>
    %c0_143 = arith.constant 0 : index
    %c0_144 = arith.constant 0 : index
    %82 = vector.load %arg9[%c0_143, %c0_144] : memref<512x512xbf16, #tpu.memory_space<vmem>>, vector<128x512xbf16>
    %cst_145 = arith.constant dense<0.000000e+00> : vector<1x512xf32>
    %83 = tpu.matmul %81, %82, %cst_145 {dimension_numbers = #tpu.dot_dimension_numbers<[1], [0], [0], [1], [0, 0, 1, 1], [], []>} : vector<1x128xbf16>, vector<128x512xbf16>, vector<1x512xf32> -> vector<1x512xf32>
    %84 = arith.addf %78, %83 : vector<1x512xf32>
    %85 = vector.extract_strided_slice %77 {offsets = [0, 1, 0], sizes = [1, 1, 128], strides = [1, 1, 1]} : vector<1x4x128xf32> to vector<1x1x128xf32>
    %86 = vector.shape_cast %85 : vector<1x1x128xf32> to vector<1x128xf32>
    %87 = arith.truncf %86 : vector<1x128xf32> to vector<1x128xbf16>
    %c128 = arith.constant 128 : index
    %c0_146 = arith.constant 0 : index
    %88 = vector.load %arg9[%c128, %c0_146] : memref<512x512xbf16, #tpu.memory_space<vmem>>, vector<128x512xbf16>
    %cst_147 = arith.constant dense<0.000000e+00> : vector<1x512xf32>
    %89 = tpu.matmul %87, %88, %cst_147 {dimension_numbers = #tpu.dot_dimension_numbers<[1], [0], [0], [1], [0, 0, 1, 1], [], []>} : vector<1x128xbf16>, vector<128x512xbf16>, vector<1x512xf32> -> vector<1x512xf32>
    %90 = arith.addf %84, %89 : vector<1x512xf32>
    %91 = vector.extract_strided_slice %77 {offsets = [0, 2, 0], sizes = [1, 1, 128], strides = [1, 1, 1]} : vector<1x4x128xf32> to vector<1x1x128xf32>
    %92 = vector.shape_cast %91 : vector<1x1x128xf32> to vector<1x128xf32>
    %93 = arith.truncf %92 : vector<1x128xf32> to vector<1x128xbf16>
    %c256 = arith.constant 256 : index
    %c0_148 = arith.constant 0 : index
    %94 = vector.load %arg9[%c256, %c0_148] : memref<512x512xbf16, #tpu.memory_space<vmem>>, vector<128x512xbf16>
    %cst_149 = arith.constant dense<0.000000e+00> : vector<1x512xf32>
    %95 = tpu.matmul %93, %94, %cst_149 {dimension_numbers = #tpu.dot_dimension_numbers<[1], [0], [0], [1], [0, 0, 1, 1], [], []>} : vector<1x128xbf16>, vector<128x512xbf16>, vector<1x512xf32> -> vector<1x512xf32>
    %96 = arith.addf %90, %95 : vector<1x512xf32>
    %97 = vector.extract_strided_slice %77 {offsets = [0, 3, 0], sizes = [1, 1, 128], strides = [1, 1, 1]} : vector<1x4x128xf32> to vector<1x1x128xf32>
    %98 = vector.shape_cast %97 : vector<1x1x128xf32> to vector<1x128xf32>
    %99 = arith.truncf %98 : vector<1x128xf32> to vector<1x128xbf16>
    %c384 = arith.constant 384 : index
    %c0_150 = arith.constant 0 : index
    %100 = vector.load %arg9[%c384, %c0_150] : memref<512x512xbf16, #tpu.memory_space<vmem>>, vector<128x512xbf16>
    %cst_151 = arith.constant dense<0.000000e+00> : vector<1x512xf32>
    %101 = tpu.matmul %99, %100, %cst_151 {dimension_numbers = #tpu.dot_dimension_numbers<[1], [0], [0], [1], [0, 0, 1, 1], [], []>} : vector<1x128xbf16>, vector<128x512xbf16>, vector<1x512xf32> -> vector<1x512xf32>
    %102 = arith.addf %96, %101 : vector<1x512xf32>
    %cst_152 = arith.constant 0.000000e+00 : f32
    %103 = vector.broadcast %cst_152 : f32 to vector<1x512xf32>
    %104 = arith.maximumf %102, %103 : vector<1x512xf32>
    %105 = arith.truncf %104 : vector<1x512xf32> to vector<1x512xbf16>
    %c0_153 = arith.constant 0 : index
    %c0_154 = arith.constant 0 : index
    %106 = vector.load %arg11[%c0_153, %c0_154] : memref<512x128xbf16, #tpu.memory_space<vmem>>, vector<512x128xbf16>
    %cst_155 = arith.constant dense<0.000000e+00> : vector<1x128xf32>
    %107 = tpu.matmul %105, %106, %cst_155 {dimension_numbers = #tpu.dot_dimension_numbers<[1], [0], [0], [1], [0, 0, 1, 1], [], []>} : vector<1x512xbf16>, vector<512x128xbf16>, vector<1x128xf32> -> vector<1x128xf32>
    %c0_156 = arith.constant 0 : index
    %c0_157 = arith.constant 0 : index
    %108 = vector.load %arg12[%c0_156, %c0_157] : memref<1x128xf32, #tpu.memory_space<vmem>>, vector<1x128xf32>
    %109 = arith.addf %107, %108 : vector<1x128xf32>
    %110 = vector.shape_cast %109 : vector<1x128xf32> to vector<1x1x128xf32>
    %c0_158 = arith.constant 0 : index
    %c0_159 = arith.constant 0 : index
    %c0_160 = arith.constant 0 : index
    %111 = vector.load %arg13[%c0_158, %c0_159, %c0_160] : memref<1x1x128xf32, #tpu.memory_space<vmem>>, vector<1x1x128xf32>
    tpu.vector_store %arg13[%c0_158, %c0_159, %c0_160], %110 {strides = array<i32>} : memref<1x1x128xf32, #tpu.memory_space<vmem>>, vector<1x1x128xf32>,
    return
  }
  func.func @transform_0(%arg0: i32, %arg1: i32) -> (i32, i32, i32, i32) {
    %c1_i32 = arith.constant 1 : i32
    %0 = arith.muli %arg0, %c1_i32 : i32
    %1 = arith.addi %0, %arg1 : i32
    %c0_i32 = arith.constant 0 : i32
    %c0_i32_0 = arith.constant 0 : i32
    %c0_i32_1 = arith.constant 0 : i32
    %c0_i32_2 = arith.constant 0 : i32
    return %1, %c0_i32, %c0_i32_0, %c0_i32_1 : i32, i32, i32, i32
  }
  func.func @transform_1(%arg0: i32, %arg1: i32) -> (i32, i32) {
    %c0_i32 = arith.constant 0 : i32
    %c0_i32_0 = arith.constant 0 : i32
    %c0_i32_1 = arith.constant 0 : i32
    return %c0_i32, %c0_i32_0 : i32, i32
  }
  func.func @transform_2(%arg0: i32, %arg1: i32) -> (i32, i32) {
    %c0_i32 = arith.constant 0 : i32
    %c0_i32_0 = arith.constant 0 : i32
    %c0_i32_1 = arith.constant 0 : i32
    return %c0_i32, %c0_i32_0 : i32, i32
  }
  func.func @transform_3(%arg0: i32, %arg1: i32) -> (i32, i32) {
    %c0_i32 = arith.constant 0 : i32
    %c0_i32_0 = arith.constant 0 : i32
    %c0_i32_1 = arith.constant 0 : i32
    return %c0_i32, %c0_i32_0 : i32, i32
  }
  func.func @transform_4(%arg0: i32, %arg1: i32) -> (i32, i32) {
    %c0_i32 = arith.constant 0 : i32
    %c0_i32_0 = arith.constant 0 : i32
    %c0_i32_1 = arith.constant 0 : i32
    return %c0_i32, %c0_i32_0 : i32, i32
  }
  func.func @transform_5(%arg0: i32, %arg1: i32) -> (i32, i32) {
    %c0_i32 = arith.constant 0 : i32
    %c0_i32_0 = arith.constant 0 : i32
    %c0_i32_1 = arith.constant 0 : i32
    return %c0_i32, %c0_i32_0 : i32, i32
  }
  func.func @transform_6(%arg0: i32, %arg1: i32) -> (i32, i32) {
    %c0_i32 = arith.constant 0 : i32
    %c0_i32_0 = arith.constant 0 : i32
    %c0_i32_1 = arith.constant 0 : i32
    return %c0_i32, %c0_i32_0 : i32, i32
  }
  func.func @transform_7(%arg0: i32, %arg1: i32) -> (i32, i32) {
    %c0_i32 = arith.constant 0 : i32
    %c0_i32_0 = arith.constant 0 : i32
    %c0_i32_1 = arith.constant 0 : i32
    return %c0_i32, %c0_i32_0 : i32, i32
  }
  func.func @transform_8(%arg0: i32, %arg1: i32) -> (i32, i32) {
    %c0_i32 = arith.constant 0 : i32
    %c0_i32_0 = arith.constant 0 : i32
    %c0_i32_1 = arith.constant 0 : i32
    return %c0_i32, %c0_i32_0 : i32, i32
  }
  func.func @transform_9(%arg0: i32, %arg1: i32) -> (i32, i32) {
    %c0_i32 = arith.constant 0 : i32
    %c0_i32_0 = arith.constant 0 : i32
    %c0_i32_1 = arith.constant 0 : i32
    return %c0_i32, %c0_i32_0 : i32, i32
  }
  func.func @transform_10(%arg0: i32, %arg1: i32) -> (i32, i32) {
    %c0_i32 = arith.constant 0 : i32
    %c0_i32_0 = arith.constant 0 : i32
    %c0_i32_1 = arith.constant 0 : i32
    return %c0_i32, %c0_i32_0 : i32, i32
  }
  func.func @transform_11(%arg0: i32, %arg1: i32) -> (i32, i32, i32) {
    %c1_i32 = arith.constant 1 : i32
    %0 = arith.muli %arg0, %c1_i32 : i32
    %1 = arith.addi %0, %arg1 : i32
    %c0_i32 = arith.constant 0 : i32
    %c0_i32_0 = arith.constant 0 : i32
    %c0_i32_1 = arith.constant 0 : i32
    return %1, %c0_i32, %c0_i32_0 : i32, i32, i32
  }
}

</mosaic_0001>

<llo_original>
// kernel: simple_cnn_forward.1
$region0: #{simple_cnn_forward.1}
  #allocation0 [shape = 'u32[]', space=smem, size = 0x4, offset = 0x4, fixed_abs, tag = 'smem constant byte address 0x4 - core index']
  #allocation1 [shape = 'u32[144,128]{1,0:T(1,128)}', space=vmem, size = 0x12000, scoped, tag = 'internal scratch']
  #allocation2 [shape = 'f32[1,18,32,3]{3,2,1,0:T(8,128)}', space=vmem, size = 0x48000, scoped, tag = 'scratch operand']
  #allocation3 [shape = 'f32[1,10,24,32]{3,2,1,0:T(8,128)}', space=vmem, size = 0x1e000, scoped, tag = 'scratch operand']
  #allocation4 [shape = 'f32[1,6,20,64]{3,2,1,0:T(8,128)}', space=vmem, size = 0x12000, scoped, tag = 'scratch operand']
  %s0 = inlined_call_operand.vmem [shape: f32[2,16,16,3], index: 0, kind: input, shape index: {}]
  %s1 = inlined_call_operand.vmem [shape: bf16[27,32], index: 1, kind: input, shape index: {}]
  %s2 = inlined_call_operand.vmem [shape: f32[1,32], index: 2, kind: input, shape index: {}]
  %s3 = inlined_call_operand.vmem [shape: bf16[288,64], index: 3, kind: input, shape index: {}]
  %s4 = inlined_call_operand.vmem [shape: f32[1,64], index: 4, kind: input, shape index: {}]
  %s5 = inlined_call_operand.vmem [shape: bf16[576,128], index: 5, kind: input, shape index: {}]
  %s6 = inlined_call_operand.vmem [shape: f32[1,128], index: 6, kind: input, shape index: {}]
  %s7 = inlined_call_operand.vmem [shape: bf16[512,512], index: 7, kind: input, shape index: {}]
  %s8 = inlined_call_operand.vmem [shape: f32[1,512], index: 8, kind: input, shape index: {}]
  %s9 = inlined_call_operand.vmem [shape: bf16[512,128], index: 9, kind: input, shape index: {}]
  %s10 = inlined_call_operand.vmem [shape: f32[1,128], index: 10, kind: input, shape index: {}]
  %s11 = inlined_call_operand.hbm [shape: f32[2,1,128], index: 11, kind: output, shape index: {}]
  %s12 = sld [smem:[#allocation0]]
  $region89: #{simple_cnn_forward.1} parent=0
    _
  %s14 = ssub.s32 1, %s12
  %s15 = scalar_select 0, %s14, %s12
  $region1: #{simple_cnn_forward.1} parent=0
    #allocation5 [shape = 'u8[1024]{0}', space=vmem, size = 0x400, scoped, tag = 'output window, operand 0']
    #allocation6 [shape = 's32[2]{0}', space=sflag, size = 0x8, scoped, tag = 'scoped memory for simple_cnn_forward.1']
    %16 = vsyncpa [#allocation6], 0
    %s17 = scalar_lea.sflag [#allocation6], 1
    %18 = vsyncpa %s17, 0
    loop: start=0, step=1, limit=4
    $region2: #{simple_cnn_forward.1} parent=1 // loop_pre_header
      _
    $region3: #{simple_cnn_forward.1} parent=1 // loop_header
      %s20 = sphi 0, %s24
      %p21 = scmp.ge.s32.totalorder %s20, 4
      %s27 = sphi 0, %s39
      %s28 = sphi 0, %s35
      %s29 = sphi 0, %s27
      %s30 = sphi 0, %s28
      %s31 = sphi 0, %s29
      %s32 = sphi 0, %s30
      %s44 = sphi 0, %s46
      %s47 = sphi 0, %s44
      %s48 = sphi 0, %s47
      %s64 = sphi 0, %s48
      %s68 = sphi 0, %s68
      %s70 = sphi 0, %s68
      %s71 = sphi 0, %s70
      %s85 = sphi 0, %s71
      %s89 = sphi 0, %s89
      %s91 = sphi 0, %s89
      %s92 = sphi 0, %s91
      %s106 = sphi 0, %s92
      %s110 = sphi 0, %s110
      %s112 = sphi 0, %s110
      %s113 = sphi 0, %s112
      %s127 = sphi 0, %s113
      %s131 = sphi 0, %s131
      %s133 = sphi 0, %s131
      %s134 = sphi 0, %s133
      %s148 = sphi 0, %s134
      %s152 = sphi 0, %s152
      %s154 = sphi 0, %s152
      %s155 = sphi 0, %s154
      %s169 = sphi 0, %s155
      %s173 = sphi 0, %s173
      %s175 = sphi 0, %s173
      %s176 = sphi 0, %s175
      %s190 = sphi 0, %s176
      %s194 = sphi 0, %s194
      %s196 = sphi 0, %s194
      %s197 = sphi 0, %s196
      %s211 = sphi 0, %s197
      %s215 = sphi 0, %s215
      %s217 = sphi 0, %s215
      %s218 = sphi 0, %s217
      %s232 = sphi 0, %s218
      %s236 = sphi 0, %s236
      %s238 = sphi 0, %s236
      %s239 = sphi 0, %s238
      %s253 = sphi 0, %s239
      %s257 = sphi 0, %s257
      %s259 = sphi 0, %s257
      %s260 = sphi 0, %s259
      %s274 = sphi 0, %s260
      %s282 = sphi 0, %s284
      %s285 = sphi 0, %s282
      %s286 = sphi 0, %s285
      %s302 = sphi 0, %s286
    $region4: #{simple_cnn_forward.1} parent=1 // loop_header_branch
      %23 = sbr.rel (%p21) target = $region8
    $region5: #{simple_cnn_forward.1} parent=1 // loop_body
      %s25 = ssub.s32 %s20, 1
      %s26 = ssub.s32 %s20, 2
      %s33 = sadd.s32 1, %s28
      %p34 = scmp.ge.s32.totalorder %s33, 1
      %s35 = scalar_select %p34, 0, %s33
      %s36 = sadd.s32 1, %s27
      %s37 = scalar_select %p34, %s36, %s27
      %p38 = scmp.ge.s32.totalorder %s37, 2
      %s39 = scalar_select %p38, 0, %s37
      %s40 = sadd.s32 %s27, %s28
      %s41 = sadd.s32 %s39, %s35
      %s42 = ssub.s32 %s40, %s41
      %p43 = scmp.eq.s32.totalorder %s42, 0
      %s45 = sadd.s32 %s44, 1
      %s46 = scalar_select %p43, %s44, %s45
      %p49 = pneg %p43
      %p50 = scmp.eq.s32.totalorder %s20, 1
      %p51 = por %p49, %p50
      %p52 = scmp.ne.s32.totalorder %s44, %s47
      %p53 = scmp.eq.s32.totalorder %s20, 0
      %p54 = por %p52, %p53
      %p55 = scmp.ne.s32.totalorder %s44, %s47
      %p56 = scmp.eq.s32.totalorder %s25, 1
      %p57 = por %p55, %p56
      %p58 = scmp.ne.s32.totalorder %s47, %s48
      %p59 = scmp.eq.s32.totalorder %s25, 0
      %p60 = por %p58, %p59
      %p61 = scmp.ne.s32.totalorder %s47, %s48
      %p62 = scmp.eq.s32.totalorder %s26, 1
      %p63 = por %p61, %p62
      %p65 = scmp.ne.s32.totalorder %s48, %s64
      %p66 = scmp.eq.s32.totalorder %s26, 0
      %p67 = por %p65, %p66
      %s69 = sadd.s32 %s68, 1
      %p72 = scmp.eq.s32.totalorder %s20, 1
      %p73 = scmp.ne.s32.totalorder %s68, %s70
      %p74 = scmp.eq.s32.totalorder %s20, 0
      %p75 = por %p73, %p74
      %p76 = scmp.ne.s32.totalorder %s68, %s70
      %p77 = scmp.eq.s32.totalorder %s25, 1
      %p78 = por %p76, %p77
      %p79 = scmp.ne.s32.totalorder %s70, %s71
      %p80 = scmp.eq.s32.totalorder %s25, 0
      %p81 = por %p79, %p80
      %p82 = scmp.ne.s32.totalorder %s70, %s71
      %p83 = scmp.eq.s32.totalorder %s26, 1
      %p84 = por %p82, %p83
      %p86 = scmp.ne.s32.totalorder %s71, %s85
      %p87 = scmp.eq.s32.totalorder %s26, 0
      %p88 = por %p86, %p87
      %s90 = sadd.s32 %s89, 1
      %p93 = scmp.eq.s32.totalorder %s20, 1
      %p94 = scmp.ne.s32.totalorder %s89, %s91
      %p95 = scmp.eq.s32.totalorder %s20, 0
      %p96 = por %p94, %p95
      %p97 = scmp.ne.s32.totalorder %s89, %s91
      %p98 = scmp.eq.s32.totalorder %s25, 1
      %p99 = por %p97, %p98
      %p100 = scmp.ne.s32.totalorder %s91, %s92
      %p101 = scmp.eq.s32.totalorder %s25, 0
      %p102 = por %p100, %p101
      %p103 = scmp.ne.s32.totalorder %s91, %s92
      %p104 = scmp.eq.s32.totalorder %s26, 1
      %p105 = por %p103, %p104
      %p107 = scmp.ne.s32.totalorder %s92, %s106
      %p108 = scmp.eq.s32.totalorder %s26, 0
      %p109 = por %p107, %p108
      %s111 = sadd.s32 %s110, 1
      %p114 = scmp.eq.s32.totalorder %s20, 1
      %p115 = scmp.ne.s32.totalorder %s110, %s112
      %p116 = scmp.eq.s32.totalorder %s20, 0
      %p117 = por %p115, %p116
      %p118 = scmp.ne.s32.totalorder %s110, %s112
      %p119 = scmp.eq.s32.totalorder %s25, 1
      %p120 = por %p118, %p119
      %p121 = scmp.ne.s32.totalorder %s112, %s113
      %p122 = scmp.eq.s32.totalorder %s25, 0
      %p123 = por %p121, %p122
      %p124 = scmp.ne.s32.totalorder %s112, %s113
      %p125 = scmp.eq.s32.totalorder %s26, 1
      %p126 = por %p124, %p125
      %p128 = scmp.ne.s32.totalorder %s113, %s127
      %p129 = scmp.eq.s32.totalorder %s26, 0
      %p130 = por %p128, %p129
      %s132 = sadd.s32 %s131, 1
      %p135 = scmp.eq.s32.totalorder %s20, 1
      %p136 = scmp.ne.s32.totalorder %s131, %s133
      %p137 = scmp.eq.s32.totalorder %s20, 0
      %p138 = por %p136, %p137
      %p139 = scmp.ne.s32.totalorder %s131, %s133
      %p140 = scmp.eq.s32.totalorder %s25, 1
      %p141 = por %p139, %p140
      %p142 = scmp.ne.s32.totalorder %s133, %s134
      %p143 = scmp.eq.s32.totalorder %s25, 0
      %p144 = por %p142, %p143
      %p145 = scmp.ne.s32.totalorder %s133, %s134
      %p146 = scmp.eq.s32.totalorder %s26, 1
      %p147 = por %p145, %p146
      %p149 = scmp.ne.s32.totalorder %s134, %s148
      %p150 = scmp.eq.s32.totalorder %s26, 0
      %p151 = por %p149, %p150
      %s153 = sadd.s32 %s152, 1
      %p156 = scmp.eq.s32.totalorder %s20, 1
      %p157 = scmp.ne.s32.totalorder %s152, %s154
      %p158 = scmp.eq.s32.totalorder %s20, 0
      %p159 = por %p157, %p158
      %p160 = scmp.ne.s32.totalorder %s152, %s154
      %p161 = scmp.eq.s32.totalorder %s25, 1
      %p162 = por %p160, %p161
      %p163 = scmp.ne.s32.totalorder %s154, %s155
      %p164 = scmp.eq.s32.totalorder %s25, 0
      %p165 = por %p163, %p164
      %p166 = scmp.ne.s32.totalorder %s154, %s155
      %p167 = scmp.eq.s32.totalorder %s26, 1
      %p168 = por %p166, %p167
      %p170 = scmp.ne.s32.totalorder %s155, %s169
      %p171 = scmp.eq.s32.totalorder %s26, 0
      %p172 = por %p170, %p171
      %s174 = sadd.s32 %s173, 1
      %p177 = scmp.eq.s32.totalorder %s20, 1
      %p178 = scmp.ne.s32.totalorder %s173, %s175
      %p179 = scmp.eq.s32.totalorder %s20, 0
      %p180 = por %p178, %p179
      %p181 = scmp.ne.s32.totalorder %s173, %s175
      %p182 = scmp.eq.s32.totalorder %s25, 1
      %p183 = por %p181, %p182
      %p184 = scmp.ne.s32.totalorder %s175, %s176
      %p185 = scmp.eq.s32.totalorder %s25, 0
      %p186 = por %p184, %p185
      %p187 = scmp.ne.s32.totalorder %s175, %s176
      %p188 = scmp.eq.s32.totalorder %s26, 1
      %p189 = por %p187, %p188
      %p191 = scmp.ne.s32.totalorder %s176, %s190
      %p192 = scmp.eq.s32.totalorder %s26, 0
      %p193 = por %p191, %p192
      %s195 = sadd.s32 %s194, 1
      %p198 = scmp.eq.s32.totalorder %s20, 1
      %p199 = scmp.ne.s32.totalorder %s194, %s196
      %p200 = scmp.eq.s32.totalorder %s20, 0
      %p201 = por %p199, %p200
      %p202 = scmp.ne.s32.totalorder %s194, %s196
      %p203 = scmp.eq.s32.totalorder %s25, 1
      %p204 = por %p202, %p203
      %p205 = scmp.ne.s32.totalorder %s196, %s197
      %p206 = scmp.eq.s32.totalorder %s25, 0
      %p207 = por %p205, %p206
      %p208 = scmp.ne.s32.totalorder %s196, %s197
      %p209 = scmp.eq.s32.totalorder %s26, 1
      %p210 = por %p208, %p209
      %p212 = scmp.ne.s32.totalorder %s197, %s211
      %p213 = scmp.eq.s32.totalorder %s26, 0
      %p214 = por %p212, %p213
      %s216 = sadd.s32 %s215, 1
      %p219 = scmp.eq.s32.totalorder %s20, 1
      %p220 = scmp.ne.s32.totalorder %s215, %s217
      %p221 = scmp.eq.s32.totalorder %s20, 0
      %p222 = por %p220, %p221
      %p223 = scmp.ne.s32.totalorder %s215, %s217
      %p224 = scmp.eq.s32.totalorder %s25, 1
      %p225 = por %p223, %p224
      %p226 = scmp.ne.s32.totalorder %s217, %s218
      %p227 = scmp.eq.s32.totalorder %s25, 0
      %p228 = por %p226, %p227
      %p229 = scmp.ne.s32.totalorder %s217, %s218
      %p230 = scmp.eq.s32.totalorder %s26, 1
      %p231 = por %p229, %p230
      %p233 = scmp.ne.s32.totalorder %s218, %s232
      %p234 = scmp.eq.s32.totalorder %s26, 0
      %p235 = por %p233, %p234
      %s237 = sadd.s32 %s236, 1
      %p240 = scmp.eq.s32.totalorder %s20, 1
      %p241 = scmp.ne.s32.totalorder %s236, %s238
      %p242 = scmp.eq.s32.totalorder %s20, 0
      %p243 = por %p241, %p242
      %p244 = scmp.ne.s32.totalorder %s236, %s238
      %p245 = scmp.eq.s32.totalorder %s25, 1
      %p246 = por %p244, %p245
      %p247 = scmp.ne.s32.totalorder %s238, %s239
      %p248 = scmp.eq.s32.totalorder %s25, 0
      %p249 = por %p247, %p248
      %p250 = scmp.ne.s32.totalorder %s238, %s239
      %p251 = scmp.eq.s32.totalorder %s26, 1
      %p252 = por %p250, %p251
      %p254 = scmp.ne.s32.totalorder %s239, %s253
      %p255 = scmp.eq.s32.totalorder %s26, 0
      %p256 = por %p254, %p255
      %s258 = sadd.s32 %s257, 1
      %p261 = scmp.eq.s32.totalorder %s20, 1
      %p262 = scmp.ne.s32.totalorder %s257, %s259
      %p263 = scmp.eq.s32.totalorder %s20, 0
      %p264 = por %p262, %p263
      %p265 = scmp.ne.s32.totalorder %s257, %s259
      %p266 = scmp.eq.s32.totalorder %s25, 1
      %p267 = por %p265, %p266
      %p268 = scmp.ne.s32.totalorder %s259, %s260
      %p269 = scmp.eq.s32.totalorder %s25, 0
      %p270 = por %p268, %p269
      %p271 = scmp.ne.s32.totalorder %s259, %s260
      %p272 = scmp.eq.s32.totalorder %s26, 1
      %p273 = por %p271, %p272
      %p275 = scmp.ne.s32.totalorder %s260, %s274
      %p276 = scmp.eq.s32.totalorder %s26, 0
      %p277 = por %p275, %p276
      %s278 = sadd.s32 %s27, %s28
      %s279 = sadd.s32 %s39, %s35
      %s280 = ssub.s32 %s278, %s279
      %p281 = scmp.eq.s32.totalorder %s280, 0
      %s283 = sadd.s32 %s282, 1
      %s284 = scalar_select %p281, %s282, %s283
      %p287 = pneg %p281
      %p288 = scmp.eq.s32.totalorder %s20, 1
      %p289 = por %p287, %p288
      %p290 = scmp.ne.s32.totalorder %s282, %s285
      %p291 = scmp.eq.s32.totalorder %s20, 0
      %p292 = por %p290, %p291
      %p293 = scmp.ne.s32.totalorder %s282, %s285
      %p294 = scmp.eq.s32.totalorder %s25, 1
      %p295 = por %p293, %p294
      %p296 = scmp.ne.s32.totalorder %s285, %s286
      %p297 = scmp.eq.s32.totalorder %s25, 0
      %p298 = por %p296, %p297
      %p299 = scmp.ne.s32.totalorder %s285, %s286
      %p300 = scmp.eq.s32.totalorder %s26, 1
      %p301 = por %p299, %p300
      %p303 = scmp.ne.s32.totalorder %s286, %s302
      %p304 = scmp.eq.s32.totalorder %s26, 0
      %p305 = por %p303, %p304
      %p306 = scmp.le.s32.totalorder 1, %s20
      %p307 = scmp.lt.s32.totalorder %s20, 3
      %p308 = pnand %p306, %p307
      %p309 = pneg %p308
      // Predicated region
      $region9: #{simple_cnn_forward.1} parent=5 // pred_check
        _
      $region10: #{simple_cnn_forward.1} parent=5 // pred_check_branch
        %311 = sbr.rel (%p308) target = $region12
      $region11: #{simple_cnn_forward.1} parent=5 // pred_region
        %s312 = ssub.s32 %s20, 1
        // Predicated region
        $region13: #{simple_cnn_forward.1} parent=11 // pred_check
          %p313 = pneg %p81
        $region14: #{simple_cnn_forward.1} parent=11 // pred_check_branch
          %315 = sbr.rel (%p313) target = $region16
        $region15: #{simple_cnn_forward.1} parent=11 // pred_region
          _
        $region16: #{simple_cnn_forward.1} parent=11 // pred_fallthru
          _
        // Predicated region
        $region17: #{simple_cnn_forward.1} parent=11 // pred_check
          %p316 = pneg %p102
        $region18: #{simple_cnn_forward.1} parent=11 // pred_check_branch
          %318 = sbr.rel (%p316) target = $region20
        $region19: #{simple_cnn_forward.1} parent=11 // pred_region
          _
        $region20: #{simple_cnn_forward.1} parent=11 // pred_fallthru
          _
        // Predicated region
        $region21: #{simple_cnn_forward.1} parent=11 // pred_check
          %p319 = pneg %p123
        $region22: #{simple_cnn_forward.1} parent=11 // pred_check_branch
          %321 = sbr.rel (%p319) target = $region24
        $region23: #{simple_cnn_forward.1} parent=11 // pred_region
          _
        $region24: #{simple_cnn_forward.1} parent=11 // pred_fallthru
          _
        // Predicated region
        $region25: #{simple_cnn_forward.1} parent=11 // pred_check
          %p322 = pneg %p144
        $region26: #{simple_cnn_forward.1} parent=11 // pred_check_branch
          %324 = sbr.rel (%p322) target = $region28
        $region27: #{simple_cnn_forward.1} parent=11 // pred_region
          _
        $region28: #{simple_cnn_forward.1} parent=11 // pred_fallthru
          _
        // Predicated region
        $region29: #{simple_cnn_forward.1} parent=11 // pred_check
          %p325 = pneg %p165
        $region30: #{simple_cnn_forward.1} parent=11 // pred_check_branch
          %327 = sbr.rel (%p325) target = $region32
        $region31: #{simple_cnn_forward.1} parent=11 // pred_region
          _
        $region32: #{simple_cnn_forward.1} parent=11 // pred_fallthru
          _
        // Predicated region
        $region33: #{simple_cnn_forward.1} parent=11 // pred_check
          %p328 = pneg %p186
        $region34: #{simple_cnn_forward.1} parent=11 // pred_check_branch
          %330 = sbr.rel (%p328) target = $region36
        $region35: #{simple_cnn_forward.1} parent=11 // pred_region
          _
        $region36: #{simple_cnn_forward.1} parent=11 // pred_fallthru
          _
        // Predicated region
        $region37: #{simple_cnn_forward.1} parent=11 // pred_check
          %p331 = pneg %p207
        $region38: #{simple_cnn_forward.1} parent=11 // pred_check_branch
          %333 = sbr.rel (%p331) target = $region40
        $region39: #{simple_cnn_forward.1} parent=11 // pred_region
          _
        $region40: #{simple_cnn_forward.1} parent=11 // pred_fallthru
          _
        // Predicated region
        $region41: #{simple_cnn_forward.1} parent=11 // pred_check
          %p334 = pneg %p228
        $region42: #{simple_cnn_forward.1} parent=11 // pred_check_branch
          %336 = sbr.rel (%p334) target = $region44
        $region43: #{simple_cnn_forward.1} parent=11 // pred_region
          _
        $region44: #{simple_cnn_forward.1} parent=11 // pred_fallthru
          _
        // Predicated region
        $region45: #{simple_cnn_forward.1} parent=11 // pred_check
          %p337 = pneg %p249
        $region46: #{simple_cnn_forward.1} parent=11 // pred_check_branch
          %339 = sbr.rel (%p337) target = $region48
        $region47: #{simple_cnn_forward.1} parent=11 // pred_region
          _
        $region48: #{simple_cnn_forward.1} parent=11 // pred_fallthru
          _
        // Predicated region
        $region49: #{simple_cnn_forward.1} parent=11 // pred_check
          %p340 = pneg %p270
        $region50: #{simple_cnn_forward.1} parent=11 // pred_check_branch
          %342 = sbr.rel (%p340) target = $region52
        $region51: #{simple_cnn_forward.1} parent=11 // pred_region
          _
        $region52: #{simple_cnn_forward.1} parent=11 // pred_fallthru
          _
      $region12: #{simple_cnn_forward.1} parent=5 // pred_fallthru
        _
      %p343 = scmp.lt.s32.totalorder %s20, 2
      // Predicated region
      $region53: #{simple_cnn_forward.1} parent=5 // pred_check
        %p344 = pneg %p343
      $region54: #{simple_cnn_forward.1} parent=5 // pred_check_branch
        %346 = sbr.rel (%p344) target = $region56
      $region55: #{simple_cnn_forward.1} parent=5 // pred_region
        // Predicated region
        $region57: #{simple_cnn_forward.1} parent=55 // pred_check
          %p347 = pneg %p54
        $region58: #{simple_cnn_forward.1} parent=55 // pred_check_branch
          %349 = sbr.rel (%p347) target = $region60
        $region59: #{simple_cnn_forward.1} parent=55 // pred_region
          %s350 = sadd.s32 %s27, %s28
          %p351 = scmp.lt.s32.totalorder %s350, 1
          %s352 = scalar_select %p351, %s350, 1
          %s353 = smul.addr %s352, 32
          %s354 = smul.addr %s353, 8
          %s355 = scalar_lea.vmem %s0, %s354
          %s356 = sadd.s32 %s27, %s28
        $region60: #{simple_cnn_forward.1} parent=55 // pred_fallthru
          _
      $region56: #{simple_cnn_forward.1} parent=5 // pred_fallthru
        _
      %p357 = scmp.le.s32.totalorder 1, %s20
      %p358 = scmp.lt.s32.totalorder %s20, 3
      %p359 = pnand %p357, %p358
      %p360 = pneg %p359
      // Predicated region
      $region61: #{simple_cnn_forward.1} parent=5 // pred_check
        _
      $region62: #{simple_cnn_forward.1} parent=5 // pred_check_branch
        %362 = sbr.rel (%p359) target = $region64
      $region63: #{simple_cnn_forward.1} parent=5 // pred_region
        %s363 = ssub.s32 %s20, 1
        %s364 = sadd.s32 %s29, %s30
        %p365 = scmp.lt.s32.totalorder %s364, 1
        %s366 = scalar_select %p365, %s364, 1
        %s367 = smul.addr %s366, 32
        %s368 = smul.addr %s367, 8
        %s369 = scalar_lea.vmem %s0, %s368
        %p370 = pneg %p60
        %p371 = pneg %p57
        %p372 = pneg %p81
        %p373 = pneg %p78
        %p374 = pneg %p102
        %p375 = pneg %p99
        %p376 = pneg %p123
        %p377 = pneg %p120
        %p378 = pneg %p144
        %p379 = pneg %p141
        %p380 = pneg %p165
        %p381 = pneg %p162
        %p382 = pneg %p186
        %p383 = pneg %p183
        %p384 = pneg %p207
        %p385 = pneg %p204
        %p386 = pneg %p228
        %p387 = pneg %p225
        %p388 = pneg %p249
        %p389 = pneg %p246
        %p390 = pneg %p270
        %p391 = pneg %p267
        %p392 = pneg %p298
        %p393 = pneg %p295
        %s394 = sand.u32 %s285, 1
        %s395 = scalar_lea.sflag [#allocation6], %s394
        %s396 = sand.u32 %s285, 1
        %s397 = scalar_lea.vmem [#allocation5], %s396
        %s398 = sadd.s32 %s29, %s30
        %p399 = scmp.lt.s32.totalorder %s398, 1
        %s400 = scalar_select %p399, %s398, 1
        %s401 = smul.addr %s400, 32
        %s402 = smul.addr %s401, 8
        %s403 = scalar_lea.vmem %s0, %s402
        %s404 = sadd.s32 %s29, %s30
        %s405 = sadd.s32 %s29, %s30
        %p407 = scmp.eq.s32.totalorder %s30, 0
        %v408 = vld [vmem:[%s403] sm:$0xff]
        %v409 = vld [vmem:[%s403 + $0x8] sm:$0xff]
        %v410 = vld [vmem:[%s403 + $0x10] sm:$0xff]
        %v411 = vld [vmem:[%s403 + $0x18] sm:$0xff]
        %v412 = vld [vmem:[%s403 + $0x20] sm:$0xff]
        %v413 = vld [vmem:[%s403 + $0x28] sm:$0xff]
        %v414 = vld [vmem:[%s403 + $0x30] sm:$0xff]
        %v415 = vld [vmem:[%s403 + $0x38] sm:$0xff]
        %v416 = vld [vmem:[%s403 + $0x40] sm:$0xff]
        %v417 = vld [vmem:[%s403 + $0x48] sm:$0xff]
        %v418 = vld [vmem:[%s403 + $0x50] sm:$0xff]
        %v419 = vld [vmem:[%s403 + $0x58] sm:$0xff]
        %v420 = vld [vmem:[%s403 + $0x60] sm:$0xff]
        %v421 = vld [vmem:[%s403 + $0x68] sm:$0xff]
        %v422 = vld [vmem:[%s403 + $0x70] sm:$0xff]
        %v423 = vld [vmem:[%s403 + $0x78] sm:$0xff]
        %v424 = vld [vmem:[%s403 + $0x80] sm:$0xff]
        %v425 = vld [vmem:[%s403 + $0x88] sm:$0xff]
        %v426 = vld [vmem:[%s403 + $0x90] sm:$0xff]
        %v427 = vld [vmem:[%s403 + $0x98] sm:$0xff]
        %v428 = vld [vmem:[%s403 + $0xa0] sm:$0xff]
        %v429 = vld [vmem:[%s403 + $0xa8] sm:$0xff]
        %v430 = vld [vmem:[%s403 + $0xb0] sm:$0xff]
        %v431 = vld [vmem:[%s403 + $0xb8] sm:$0xff]
        %v432 = vld [vmem:[%s403 + $0xc0] sm:$0xff]
        %v433 = vld [vmem:[%s403 + $0xc8] sm:$0xff]
        %v434 = vld [vmem:[%s403 + $0xd0] sm:$0xff]
        %v435 = vld [vmem:[%s403 + $0xd8] sm:$0xff]
        %v436 = vld [vmem:[%s403 + $0xe0] sm:$0xff]
        %v437 = vld [vmem:[%s403 + $0xe8] sm:$0xff]
        %v438 = vld [vmem:[%s403 + $0xf0] sm:$0xff]
        %v439 = vld [vmem:[%s403 + $0xf8] sm:$0xff]
        // Predicated region
        $region65: #{simple_cnn_forward.1} parent=63 // pred_check
          %p440 = pneg %p407
        $region66: #{simple_cnn_forward.1} parent=63 // pred_check_branch
          %442 = sbr.rel (%p440) target = $region68
        $region67: #{simple_cnn_forward.1} parent=63 // pred_region
          %vm443 = vcmask 23552
          %444 = vst.msk [vmem:[#allocation2] sm:$0xff] %vm443, 0.0
          %445 = vst.msk [vmem:[#allocation2 + $0x8] sm:$0xff] %vm443, 0.0
          %446 = vst.msk [vmem:[#allocation2 + $0x10] sm:$0xff] %vm443, 0.0
          %447 = vst.msk [vmem:[#allocation2 + $0x18] sm:$0xff] %vm443, 0.0
          %448 = vst.msk [vmem:[#allocation2 + $0x20] sm:$0xff] %vm443, 0.0
          %449 = vst.msk [vmem:[#allocation2 + $0x28] sm:$0xff] %vm443, 0.0
          %450 = vst.msk [vmem:[#allocation2 + $0x30] sm:$0xff] %vm443, 0.0
          %451 = vst.msk [vmem:[#allocation2 + $0x38] sm:$0xff] %vm443, 0.0
          %452 = vst.msk [vmem:[#allocation2 + $0x40] sm:$0xff] %vm443, 0.0
          %453 = vst.msk [vmem:[#allocation2 + $0x48] sm:$0xff] %vm443, 0.0
          %454 = vst.msk [vmem:[#allocation2 + $0x50] sm:$0xff] %vm443, 0.0
          %455 = vst.msk [vmem:[#allocation2 + $0x58] sm:$0xff] %vm443, 0.0
          %456 = vst.msk [vmem:[#allocation2 + $0x60] sm:$0xff] %vm443, 0.0
          %457 = vst.msk [vmem:[#allocation2 + $0x68] sm:$0xff] %vm443, 0.0
          %458 = vst.msk [vmem:[#allocation2 + $0x70] sm:$0xff] %vm443, 0.0
          %459 = vst.msk [vmem:[#allocation2 + $0x78] sm:$0xff] %vm443, 0.0
          %460 = vst.msk [vmem:[#allocation2 + $0x80] sm:$0xff] %vm443, 0.0
          %461 = vst.msk [vmem:[#allocation2 + $0x88] sm:$0xff] %vm443, 0.0
          %462 = vst.msk [vmem:[#allocation2 + $0x90] sm:$0xff] %vm443, 0.0
          %463 = vst.msk [vmem:[#allocation2 + $0x98] sm:$0xff] %vm443, 0.0
          %464 = vst.msk [vmem:[#allocation2 + $0xa0] sm:$0xff] %vm443, 0.0
          %465 = vst.msk [vmem:[#allocation2 + $0xa8] sm:$0xff] %vm443, 0.0
          %466 = vst.msk [vmem:[#allocation2 + $0xb0] sm:$0xff] %vm443, 0.0
          %467 = vst.msk [vmem:[#allocation2 + $0xb8] sm:$0xff] %vm443, 0.0
          %468 = vst.msk [vmem:[#allocation2 + $0xc0] sm:$0xff] %vm443, 0.0
          %469 = vst.msk [vmem:[#allocation2 + $0xc8] sm:$0xff] %vm443, 0.0
          %470 = vst.msk [vmem:[#allocation2 + $0xd0] sm:$0xff] %vm443, 0.0
          %471 = vst.msk [vmem:[#allocation2 + $0xd8] sm:$0xff] %vm443, 0.0
          %472 = vst.msk [vmem:[#allocation2 + $0xe0] sm:$0xff] %vm443, 0.0
          %473 = vst.msk [vmem:[#allocation2 + $0xe8] sm:$0xff] %vm443, 0.0
          %474 = vst.msk [vmem:[#allocation2 + $0xf0] sm:$0xff] %vm443, 0.0
          %475 = vst.msk [vmem:[#allocation2 + $0xf8] sm:$0xff] %vm443, 0.0
          %476 = vst.msk [vmem:[#allocation2 + $0x100] sm:$0xff] %vm443, 0.0
          %477 = vst.msk [vmem:[#allocation2 + $0x108] sm:$0xff] %vm443, 0.0
          %478 = vst.msk [vmem:[#allocation2 + $0x110] sm:$0xff] %vm443, 0.0
          %479 = vst.msk [vmem:[#allocation2 + $0x118] sm:$0xff] %vm443, 0.0
          %480 = vst.msk [vmem:[#allocation2 + $0x120] sm:$0xff] %vm443, 0.0
          %481 = vst.msk [vmem:[#allocation2 + $0x128] sm:$0xff] %vm443, 0.0
          %482 = vst.msk [vmem:[#allocation2 + $0x130] sm:$0xff] %vm443, 0.0
          %483 = vst.msk [vmem:[#allocation2 + $0x138] sm:$0xff] %vm443, 0.0
          %484 = vst.msk [vmem:[#allocation2 + $0x140] sm:$0xff] %vm443, 0.0
          %485 = vst.msk [vmem:[#allocation2 + $0x148] sm:$0xff] %vm443, 0.0
          %486 = vst.msk [vmem:[#allocation2 + $0x150] sm:$0xff] %vm443, 0.0
          %487 = vst.msk [vmem:[#allocation2 + $0x158] sm:$0xff] %vm443, 0.0
          %488 = vst.msk [vmem:[#allocation2 + $0x160] sm:$0xff] %vm443, 0.0
          %489 = vst.msk [vmem:[#allocation2 + $0x168] sm:$0xff] %vm443, 0.0
          %490 = vst.msk [vmem:[#allocation2 + $0x170] sm:$0xff] %vm443, 0.0
          %491 = vst.msk [vmem:[#allocation2 + $0x178] sm:$0xff] %vm443, 0.0
          %492 = vst.msk [vmem:[#allocation2 + $0x180] sm:$0xff] %vm443, 0.0
          %493 = vst.msk [vmem:[#allocation2 + $0x188] sm:$0xff] %vm443, 0.0
          %494 = vst.msk [vmem:[#allocation2 + $0x190] sm:$0xff] %vm443, 0.0
          %495 = vst.msk [vmem:[#allocation2 + $0x198] sm:$0xff] %vm443, 0.0
          %496 = vst.msk [vmem:[#allocation2 + $0x1a0] sm:$0xff] %vm443, 0.0
          %497 = vst.msk [vmem:[#allocation2 + $0x1a8] sm:$0xff] %vm443, 0.0
          %498 = vst.msk [vmem:[#allocation2 + $0x1b0] sm:$0xff] %vm443, 0.0
          %499 = vst.msk [vmem:[#allocation2 + $0x1b8] sm:$0xff] %vm443, 0.0
          %500 = vst.msk [vmem:[#allocation2 + $0x1c0] sm:$0xff] %vm443, 0.0
          %501 = vst.msk [vmem:[#allocation2 + $0x1c8] sm:$0xff] %vm443, 0.0
          %502 = vst.msk [vmem:[#allocation2 + $0x1d0] sm:$0xff] %vm443, 0.0
          %503 = vst.msk [vmem:[#allocation2 + $0x1d8] sm:$0xff] %vm443, 0.0
          %504 = vst.msk [vmem:[#allocation2 + $0x1e0] sm:$0xff] %vm443, 0.0
          %505 = vst.msk [vmem:[#allocation2 + $0x1e8] sm:$0xff] %vm443, 0.0
          %506 = vst.msk [vmem:[#allocation2 + $0x1f0] sm:$0xff] %vm443, 0.0
          %507 = vst.msk [vmem:[#allocation2 + $0x1f8] sm:$0xff] %vm443, 0.0
          %508 = vst.msk [vmem:[#allocation2 + $0x200] sm:$0xff] %vm443, 0.0
          %509 = vst.msk [vmem:[#allocation2 + $0x208] sm:$0xff] %vm443, 0.0
          %510 = vst.msk [vmem:[#allocation2 + $0x210] sm:$0xff] %vm443, 0.0
          %511 = vst.msk [vmem:[#allocation2 + $0x218] sm:$0xff] %vm443, 0.0
          %512 = vst.msk [vmem:[#allocation2 + $0x220] sm:$0xff] %vm443, 0.0
          %513 = vst.msk [vmem:[#allocation2 + $0x228] sm:$0xff] %vm443, 0.0
          %514 = vst.msk [vmem:[#allocation2 + $0x230] sm:$0xff] %vm443, 0.0
          %515 = vst.msk [vmem:[#allocation2 + $0x238] sm:$0xff] %vm443, 0.0
        $region68: #{simple_cnn_forward.1} parent=63 // pred_fallthru
          _
        %s516 = scalar_lea.vmem [#allocation2], 32
        %vm517 = vcmask 23552
        %518 = vst.msk [vmem:[%s516 + $0x8] sm:$0xff] %vm517, %v408
        %519 = vst.msk [vmem:[%s516 + $0x10] sm:$0xff] %vm517, %v409
        %520 = vst.msk [vmem:[%s516 + $0x28] sm:$0xff] %vm517, %v410
        %521 = vst.msk [vmem:[%s516 + $0x30] sm:$0xff] %vm517, %v411
        %522 = vst.msk [vmem:[%s516 + $0x48] sm:$0xff] %vm517, %v412
        %523 = vst.msk [vmem:[%s516 + $0x50] sm:$0xff] %vm517, %v413
        %524 = vst.msk [vmem:[%s516 + $0x68] sm:$0xff] %vm517, %v414
        %525 = vst.msk [vmem:[%s516 + $0x70] sm:$0xff] %vm517, %v415
        %526 = vst.msk [vmem:[%s516 + $0x88] sm:$0xff] %vm517, %v416
        %527 = vst.msk [vmem:[%s516 + $0x90] sm:$0xff] %vm517, %v417
        %528 = vst.msk [vmem:[%s516 + $0xa8] sm:$0xff] %vm517, %v418
        %529 = vst.msk [vmem:[%s516 + $0xb0] sm:$0xff] %vm517, %v419
        %530 = vst.msk [vmem:[%s516 + $0xc8] sm:$0xff] %vm517, %v420
        %531 = vst.msk [vmem:[%s516 + $0xd0] sm:$0xff] %vm517, %v421
        %532 = vst.msk [vmem:[%s516 + $0xe8] sm:$0xff] %vm517, %v422
        %533 = vst.msk [vmem:[%s516 + $0xf0] sm:$0xff] %vm517, %v423
        %534 = vst.msk [vmem:[%s516 + $0x108] sm:$0xff] %vm517, %v424
        %535 = vst.msk [vmem:[%s516 + $0x110] sm:$0xff] %vm517, %v425
        %536 = vst.msk [vmem:[%s516 + $0x128] sm:$0xff] %vm517, %v426
        %537 = vst.msk [vmem:[%s516 + $0x130] sm:$0xff] %vm517, %v427
        %538 = vst.msk [vmem:[%s516 + $0x148] sm:$0xff] %vm517, %v428
        %539 = vst.msk [vmem:[%s516 + $0x150] sm:$0xff] %vm517, %v429
        %540 = vst.msk [vmem:[%s516 + $0x168] sm:$0xff] %vm517, %v430
        %541 = vst.msk [vmem:[%s516 + $0x170] sm:$0xff] %vm517, %v431
        %542 = vst.msk [vmem:[%s516 + $0x188] sm:$0xff] %vm517, %v432
        %543 = vst.msk [vmem:[%s516 + $0x190] sm:$0xff] %vm517, %v433
        %544 = vst.msk [vmem:[%s516 + $0x1a8] sm:$0xff] %vm517, %v434
        %545 = vst.msk [vmem:[%s516 + $0x1b0] sm:$0xff] %vm517, %v435
        %546 = vst.msk [vmem:[%s516 + $0x1c8] sm:$0xff] %vm517, %v436
        %547 = vst.msk [vmem:[%s516 + $0x1d0] sm:$0xff] %vm517, %v437
        %548 = vst.msk [vmem:[%s516 + $0x1e8] sm:$0xff] %vm517, %v438
        %549 = vst.msk [vmem:[%s516 + $0x1f0] sm:$0xff] %vm517, %v439
        %v550 = vld [vmem:[#allocation2 + $0x7] sm:$0xff]
        %v551 = vld [vmem:[#allocation2 + $0xf] sm:$0xff]
        %v552 = vld [vmem:[#allocation2 + $0x27] sm:$0xff]
        %v553 = vld [vmem:[#allocation2 + $0x2f] sm:$0xff]
        %v554 = vld [vmem:[#allocation2 + $0x47] sm:$0xff]
        %v555 = vld [vmem:[#allocation2 + $0x4f] sm:$0xff]
        %v556 = vld [vmem:[#allocation2 + $0x67] sm:$0xff]
        %v557 = vld [vmem:[#allocation2 + $0x6f] sm:$0xff]
        %v558 = vld [vmem:[#allocation2 + $0x87] sm:$0xff]
        %v559 = vld [vmem:[#allocation2 + $0x8f] sm:$0xff]
        %v560 = vld [vmem:[#allocation2 + $0xa7] sm:$0xff]
        %v561 = vld [vmem:[#allocation2 + $0xaf] sm:$0xff]
        %v562 = vld [vmem:[#allocation2 + $0xc7] sm:$0xff]
        %v563 = vld [vmem:[#allocation2 + $0xcf] sm:$0xff]
        %v564 = vld [vmem:[#allocation2 + $0xe7] sm:$0xff]
        %v565 = vld [vmem:[#allocation2 + $0xef] sm:$0xff]
        %v566 = vld [vmem:[#allocation2 + $0x107] sm:$0xff]
        %v567 = vld [vmem:[#allocation2 + $0x10f] sm:$0xff]
        %v568 = vld [vmem:[#allocation2 + $0x127] sm:$0xff]
        %v569 = vld [vmem:[#allocation2 + $0x12f] sm:$0xff]
        %v570 = vld [vmem:[#allocation2 + $0x147] sm:$0xff]
        %v571 = vld [vmem:[#allocation2 + $0x14f] sm:$0xff]
        %v572 = vld [vmem:[#allocation2 + $0x167] sm:$0xff]
        %v573 = vld [vmem:[#allocation2 + $0x16f] sm:$0xff]
        %v574 = vld [vmem:[#allocation2 + $0x187] sm:$0xff]
        %v575 = vld [vmem:[#allocation2 + $0x18f] sm:$0xff]
        %v576 = vld [vmem:[#allocation2 + $0x1a7] sm:$0xff]
        %v577 = vld [vmem:[#allocation2 + $0x1af] sm:$0xff]
        %v578 = vld [vmem:[#allocation2 + $0x1c7] sm:$0xff]
        %v579 = vld [vmem:[#allocation2 + $0x1cf] sm:$0xff]
        %v580 = vld [vmem:[#allocation2 + $0x1e7] sm:$0xff]
        %v581 = vld [vmem:[#allocation2 + $0x1ef] sm:$0xff]
        %v582 = vld [vmem:[#allocation2 + $0x8] sm:$0xff]
        %v583 = vld [vmem:[#allocation2 + $0x10] sm:$0xff]
        %v584 = vld [vmem:[#allocation2 + $0x28] sm:$0xff]
        %v585 = vld [vmem:[#allocation2 + $0x30] sm:$0xff]
        %v586 = vld [vmem:[#allocation2 + $0x48] sm:$0xff]
        %v587 = vld [vmem:[#allocation2 + $0x50] sm:$0xff]
        %v588 = vld [vmem:[#allocation2 + $0x68] sm:$0xff]
        %v589 = vld [vmem:[#allocation2 + $0x70] sm:$0xff]
        %v590 = vld [vmem:[#allocation2 + $0x88] sm:$0xff]
        %v591 = vld [vmem:[#allocation2 + $0x90] sm:$0xff]
        %v592 = vld [vmem:[#allocation2 + $0xa8] sm:$0xff]
        %v593 = vld [vmem:[#allocation2 + $0xb0] sm:$0xff]
        %v594 = vld [vmem:[#allocation2 + $0xc8] sm:$0xff]
        %v595 = vld [vmem:[#allocation2 + $0xd0] sm:$0xff]
        %v596 = vld [vmem:[#allocation2 + $0xe8] sm:$0xff]
        %v597 = vld [vmem:[#allocation2 + $0xf0] sm:$0xff]
        %v598 = vld [vmem:[#allocation2 + $0x108] sm:$0xff]
        %v599 = vld [vmem:[#allocation2 + $0x110] sm:$0xff]
        %v600 = vld [vmem:[#allocation2 + $0x128] sm:$0xff]
        %v601 = vld [vmem:[#allocation2 + $0x130] sm:$0xff]
        %v602 = vld [vmem:[#allocation2 + $0x148] sm:$0xff]
        %v603 = vld [vmem:[#allocation2 + $0x150] sm:$0xff]
        %v604 = vld [vmem:[#allocation2 + $0x168] sm:$0xff]
        %v605 = vld [vmem:[#allocation2 + $0x170] sm:$0xff]
        %v606 = vld [vmem:[#allocation2 + $0x188] sm:$0xff]
        %v607 = vld [vmem:[#allocation2 + $0x190] sm:$0xff]
        %v608 = vld [vmem:[#allocation2 + $0x1a8] sm:$0xff]
        %v609 = vld [vmem:[#allocation2 + $0x1b0] sm:$0xff]
        %v610 = vld [vmem:[#allocation2 + $0x1c8] sm:$0xff]
        %v611 = vld [vmem:[#allocation2 + $0x1d0] sm:$0xff]
        %v612 = vld [vmem:[#allocation2 + $0x1e8] sm:$0xff]
        %v613 = vld [vmem:[#allocation2 + $0x1f0] sm:$0xff]
        %v614 = vld [vmem:[#allocation2 + $0x9] sm:$0xff]
        %v615 = vld [vmem:[#allocation2 + $0x11] sm:$0xff]
        %v616 = vld [vmem:[#allocation2 + $0x29] sm:$0xff]
        %v617 = vld [vmem:[#allocation2 + $0x31] sm:$0xff]
        %v618 = vld [vmem:[#allocation2 + $0x49] sm:$0xff]
        %v619 = vld [vmem:[#allocation2 + $0x51] sm:$0xff]
        %v620 = vld [vmem:[#allocation2 + $0x69] sm:$0xff]
        %v621 = vld [vmem:[#allocation2 + $0x71] sm:$0xff]
        %v622 = vld [vmem:[#allocation2 + $0x89] sm:$0xff]
        %v623 = vld [vmem:[#allocation2 + $0x91] sm:$0xff]
        %v624 = vld [vmem:[#allocation2 + $0xa9] sm:$0xff]
        %v625 = vld [vmem:[#allocation2 + $0xb1] sm:$0xff]
        %v626 = vld [vmem:[#allocation2 + $0xc9] sm:$0xff]
        %v627 = vld [vmem:[#allocation2 + $0xd1] sm:$0xff]
        %v628 = vld [vmem:[#allocation2 + $0xe9] sm:$0xff]
        %v629 = vld [vmem:[#allocation2 + $0xf1] sm:$0xff]
        %v630 = vld [vmem:[#allocation2 + $0x109] sm:$0xff]
        %v631 = vld [vmem:[#allocation2 + $0x111] sm:$0xff]
        %v632 = vld [vmem:[#allocation2 + $0x129] sm:$0xff]
        %v633 = vld [vmem:[#allocation2 + $0x131] sm:$0xff]
        %v634 = vld [vmem:[#allocation2 + $0x149] sm:$0xff]
        %v635 = vld [vmem:[#allocation2 + $0x151] sm:$0xff]
        %v636 = vld [vmem:[#allocation2 + $0x169] sm:$0xff]
        %v637 = vld [vmem:[#allocation2 + $0x171] sm:$0xff]
        %v638 = vld [vmem:[#allocation2 + $0x189] sm:$0xff]
        %v639 = vld [vmem:[#allocation2 + $0x191] sm:$0xff]
        %v640 = vld [vmem:[#allocation2 + $0x1a9] sm:$0xff]
        %v641 = vld [vmem:[#allocation2 + $0x1b1] sm:$0xff]
        %v642 = vld [vmem:[#allocation2 + $0x1c9] sm:$0xff]
        %v643 = vld [vmem:[#allocation2 + $0x1d1] sm:$0xff]
        %v644 = vld [vmem:[#allocation2 + $0x1e9] sm:$0xff]
        %v645 = vld [vmem:[#allocation2 + $0x1f1] sm:$0xff]
        %v646 = vld [vmem:[%s516 + $0x7] sm:$0xff]
        %v647 = vld [vmem:[%s516 + $0xf] sm:$0xff]
        %v648 = vld [vmem:[%s516 + $0x27] sm:$0xff]
        %v649 = vld [vmem:[%s516 + $0x2f] sm:$0xff]
        %v650 = vld [vmem:[%s516 + $0x47] sm:$0xff]
        %v651 = vld [vmem:[%s516 + $0x4f] sm:$0xff]
        %v652 = vld [vmem:[%s516 + $0x67] sm:$0xff]
        %v653 = vld [vmem:[%s516 + $0x6f] sm:$0xff]
        %v654 = vld [vmem:[%s516 + $0x87] sm:$0xff]
        %v655 = vld [vmem:[%s516 + $0x8f] sm:$0xff]
        %v656 = vld [vmem:[%s516 + $0xa7] sm:$0xff]
        %v657 = vld [vmem:[%s516 + $0xaf] sm:$0xff]
        %v658 = vld [vmem:[%s516 + $0xc7] sm:$0xff]
        %v659 = vld [vmem:[%s516 + $0xcf] sm:$0xff]
        %v660 = vld [vmem:[%s516 + $0xe7] sm:$0xff]
        %v661 = vld [vmem:[%s516 + $0xef] sm:$0xff]
        %v662 = vld [vmem:[%s516 + $0x107] sm:$0xff]
        %v663 = vld [vmem:[%s516 + $0x10f] sm:$0xff]
        %v664 = vld [vmem:[%s516 + $0x127] sm:$0xff]
        %v665 = vld [vmem:[%s516 + $0x12f] sm:$0xff]
        %v666 = vld [vmem:[%s516 + $0x147] sm:$0xff]
        %v667 = vld [vmem:[%s516 + $0x14f] sm:$0xff]
        %v668 = vld [vmem:[%s516 + $0x167] sm:$0xff]
        %v669 = vld [vmem:[%s516 + $0x16f] sm:$0xff]
        %v670 = vld [vmem:[%s516 + $0x187] sm:$0xff]
        %v671 = vld [vmem:[%s516 + $0x18f] sm:$0xff]
        %v672 = vld [vmem:[%s516 + $0x1a7] sm:$0xff]
        %v673 = vld [vmem:[%s516 + $0x1af] sm:$0xff]
        %v674 = vld [vmem:[%s516 + $0x1c7] sm:$0xff]
        %v675 = vld [vmem:[%s516 + $0x1cf] sm:$0xff]
        %v676 = vld [vmem:[%s516 + $0x1e7] sm:$0xff]
        %v677 = vld [vmem:[%s516 + $0x1ef] sm:$0xff]
        %v678 = vld [vmem:[%s516 + $0x8] sm:$0xff]
        %v679 = vld [vmem:[%s516 + $0x10] sm:$0xff]
        %v680 = vld [vmem:[%s516 + $0x28] sm:$0xff]
        %v681 = vld [vmem:[%s516 + $0x30] sm:$0xff]
        %v682 = vld [vmem:[%s516 + $0x48] sm:$0xff]
        %v683 = vld [vmem:[%s516 + $0x50] sm:$0xff]
        %v684 = vld [vmem:[%s516 + $0x68] sm:$0xff]
        %v685 = vld [vmem:[%s516 + $0x70] sm:$0xff]
        %v686 = vld [vmem:[%s516 + $0x88] sm:$0xff]
        %v687 = vld [vmem:[%s516 + $0x90] sm:$0xff]
        %v688 = vld [vmem:[%s516 + $0xa8] sm:$0xff]
        %v689 = vld [vmem:[%s516 + $0xb0] sm:$0xff]
        %v690 = vld [vmem:[%s516 + $0xc8] sm:$0xff]
        %v691 = vld [vmem:[%s516 + $0xd0] sm:$0xff]
        %v692 = vld [vmem:[%s516 + $0xe8] sm:$0xff]
        %v693 = vld [vmem:[%s516 + $0xf0] sm:$0xff]
        %v694 = vld [vmem:[%s516 + $0x108] sm:$0xff]
        %v695 = vld [vmem:[%s516 + $0x110] sm:$0xff]
        %v696 = vld [vmem:[%s516 + $0x128] sm:$0xff]
        %v697 = vld [vmem:[%s516 + $0x130] sm:$0xff]
        %v698 = vld [vmem:[%s516 + $0x148] sm:$0xff]
        %v699 = vld [vmem:[%s516 + $0x150] sm:$0xff]
        %v700 = vld [vmem:[%s516 + $0x168] sm:$0xff]
        %v701 = vld [vmem:[%s516 + $0x170] sm:$0xff]
        %v702 = vld [vmem:[%s516 + $0x188] sm:$0xff]
        %v703 = vld [vmem:[%s516 + $0x190] sm:$0xff]
        %v704 = vld [vmem:[%s516 + $0x1a8] sm:$0xff]
        %v705 = vld [vmem:[%s516 + $0x1b0] sm:$0xff]
        %v706 = vld [vmem:[%s516 + $0x1c8] sm:$0xff]
        %v707 = vld [vmem:[%s516 + $0x1d0] sm:$0xff]
        %v708 = vld [vmem:[%s516 + $0x1e8] sm:$0xff]
        %v709 = vld [vmem:[%s516 + $0x1f0] sm:$0xff]
        %v710 = vld [vmem:[%s516 + $0x9] sm:$0xff]
        %v711 = vld [vmem:[%s516 + $0x11] sm:$0xff]
        %v712 = vld [vmem:[%s516 + $0x29] sm:$0xff]
        %v713 = vld [vmem:[%s516 + $0x31] sm:$0xff]
        %v714 = vld [vmem:[%s516 + $0x49] sm:$0xff]
        %v715 = vld [vmem:[%s516 + $0x51] sm:$0xff]
        %v716 = vld [vmem:[%s516 + $0x69] sm:$0xff]
        %v717 = vld [vmem:[%s516 + $0x71] sm:$0xff]
        %v718 = vld [vmem:[%s516 + $0x89] sm:$0xff]
        %v719 = vld [vmem:[%s516 + $0x91] sm:$0xff]
        %v720 = vld [vmem:[%s516 + $0xa9] sm:$0xff]
        %v721 = vld [vmem:[%s516 + $0xb1] sm:$0xff]
        %v722 = vld [vmem:[%s516 + $0xc9] sm:$0xff]
        %v723 = vld [vmem:[%s516 + $0xd1] sm:$0xff]
        %v724 = vld [vmem:[%s516 + $0xe9] sm:$0xff]
        %v725 = vld [vmem:[%s516 + $0xf1] sm:$0xff]
        %v726 = vld [vmem:[%s516 + $0x109] sm:$0xff]
        %v727 = vld [vmem:[%s516 + $0x111] sm:$0xff]
        %v728 = vld [vmem:[%s516 + $0x129] sm:$0xff]
        %v729 = vld [vmem:[%s516 + $0x131] sm:$0xff]
        %v730 = vld [vmem:[%s516 + $0x149] sm:$0xff]
        %v731 = vld [vmem:[%s516 + $0x151] sm:$0xff]
        %v732 = vld [vmem:[%s516 + $0x169] sm:$0xff]
        %v733 = vld [vmem:[%s516 + $0x171] sm:$0xff]
        %v734 = vld [vmem:[%s516 + $0x189] sm:$0xff]
        %v735 = vld [vmem:[%s516 + $0x191] sm:$0xff]
        %v736 = vld [vmem:[%s516 + $0x1a9] sm:$0xff]
        %v737 = vld [vmem:[%s516 + $0x1b1] sm:$0xff]
        %v738 = vld [vmem:[%s516 + $0x1c9] sm:$0xff]
        %v739 = vld [vmem:[%s516 + $0x1d1] sm:$0xff]
        %v740 = vld [vmem:[%s516 + $0x1e9] sm:$0xff]
        %v741 = vld [vmem:[%s516 + $0x1f1] sm:$0xff]
        %s742 = scalar_lea.vmem [#allocation2], 64
        %v743 = vld [vmem:[%s742 + $0x7] sm:$0xff]
        %v744 = vld [vmem:[%s742 + $0xf] sm:$0xff]
        %v745 = vld [vmem:[%s742 + $0x27] sm:$0xff]
        %v746 = vld [vmem:[%s742 + $0x2f] sm:$0xff]
        %v747 = vld [vmem:[%s742 + $0x47] sm:$0xff]
        %v748 = vld [vmem:[%s742 + $0x4f] sm:$0xff]
        %v749 = vld [vmem:[%s742 + $0x67] sm:$0xff]
        %v750 = vld [vmem:[%s742 + $0x6f] sm:$0xff]
        %v751 = vld [vmem:[%s742 + $0x87] sm:$0xff]
        %v752 = vld [vmem:[%s742 + $0x8f] sm:$0xff]
        %v753 = vld [vmem:[%s742 + $0xa7] sm:$0xff]
        %v754 = vld [vmem:[%s742 + $0xaf] sm:$0xff]
        %v755 = vld [vmem:[%s742 + $0xc7] sm:$0xff]
        %v756 = vld [vmem:[%s742 + $0xcf] sm:$0xff]
        %v757 = vld [vmem:[%s742 + $0xe7] sm:$0xff]
        %v758 = vld [vmem:[%s742 + $0xef] sm:$0xff]
        %v759 = vld [vmem:[%s742 + $0x107] sm:$0xff]
        %v760 = vld [vmem:[%s742 + $0x10f] sm:$0xff]
        %v761 = vld [vmem:[%s742 + $0x127] sm:$0xff]
        %v762 = vld [vmem:[%s742 + $0x12f] sm:$0xff]
        %v763 = vld [vmem:[%s742 + $0x147] sm:$0xff]
        %v764 = vld [vmem:[%s742 + $0x14f] sm:$0xff]
        %v765 = vld [vmem:[%s742 + $0x167] sm:$0xff]
        %v766 = vld [vmem:[%s742 + $0x16f] sm:$0xff]
        %v767 = vld [vmem:[%s742 + $0x187] sm:$0xff]
        %v768 = vld [vmem:[%s742 + $0x18f] sm:$0xff]
        %v769 = vld [vmem:[%s742 + $0x1a7] sm:$0xff]
        %v770 = vld [vmem:[%s742 + $0x1af] sm:$0xff]
        %v771 = vld [vmem:[%s742 + $0x1c7] sm:$0xff]
        %v772 = vld [vmem:[%s742 + $0x1cf] sm:$0xff]
        %v773 = vld [vmem:[%s742 + $0x1e7] sm:$0xff]
        %v774 = vld [vmem:[%s742 + $0x1ef] sm:$0xff]
        %v775 = vld [vmem:[%s742 + $0x8] sm:$0xff]
        %v776 = vld [vmem:[%s742 + $0x10] sm:$0xff]
        %v777 = vld [vmem:[%s742 + $0x28] sm:$0xff]
        %v778 = vld [vmem:[%s742 + $0x30] sm:$0xff]
        %v779 = vld [vmem:[%s742 + $0x48] sm:$0xff]
        %v780 = vld [vmem:[%s742 + $0x50] sm:$0xff]
        %v781 = vld [vmem:[%s742 + $0x68] sm:$0xff]
        %v782 = vld [vmem:[%s742 + $0x70] sm:$0xff]
        %v783 = vld [vmem:[%s742 + $0x88] sm:$0xff]
        %v784 = vld [vmem:[%s742 + $0x90] sm:$0xff]
        %v785 = vld [vmem:[%s742 + $0xa8] sm:$0xff]
        %v786 = vld [vmem:[%s742 + $0xb0] sm:$0xff]
        %v787 = vld [vmem:[%s742 + $0xc8] sm:$0xff]
        %v788 = vld [vmem:[%s742 + $0xd0] sm:$0xff]
        %v789 = vld [vmem:[%s742 + $0xe8] sm:$0xff]
        %v790 = vld [vmem:[%s742 + $0xf0] sm:$0xff]
        %v791 = vld [vmem:[%s742 + $0x108] sm:$0xff]
        %v792 = vld [vmem:[%s742 + $0x110] sm:$0xff]
        %v793 = vld [vmem:[%s742 + $0x128] sm:$0xff]
        %v794 = vld [vmem:[%s742 + $0x130] sm:$0xff]
        %v795 = vld [vmem:[%s742 + $0x148] sm:$0xff]
        %v796 = vld [vmem:[%s742 + $0x150] sm:$0xff]
        %v797 = vld [vmem:[%s742 + $0x168] sm:$0xff]
        %v798 = vld [vmem:[%s742 + $0x170] sm:$0xff]
        %v799 = vld [vmem:[%s742 + $0x188] sm:$0xff]
        %v800 = vld [vmem:[%s742 + $0x190] sm:$0xff]
        %v801 = vld [vmem:[%s742 + $0x1a8] sm:$0xff]
        %v802 = vld [vmem:[%s742 + $0x1b0] sm:$0xff]
        %v803 = vld [vmem:[%s742 + $0x1c8] sm:$0xff]
        %v804 = vld [vmem:[%s742 + $0x1d0] sm:$0xff]
        %v805 = vld [vmem:[%s742 + $0x1e8] sm:$0xff]
        %v806 = vld [vmem:[%s742 + $0x1f0] sm:$0xff]
        %v807 = vld [vmem:[%s742 + $0x9] sm:$0xff]
        %v808 = vld [vmem:[%s742 + $0x11] sm:$0xff]
        %v809 = vld [vmem:[%s742 + $0x29] sm:$0xff]
        %v810 = vld [vmem:[%s742 + $0x31] sm:$0xff]
        %v811 = vld [vmem:[%s742 + $0x49] sm:$0xff]
        %v812 = vld [vmem:[%s742 + $0x51] sm:$0xff]
        %v813 = vld [vmem:[%s742 + $0x69] sm:$0xff]
        %v814 = vld [vmem:[%s742 + $0x71] sm:$0xff]
        %v815 = vld [vmem:[%s742 + $0x89] sm:$0xff]
        %v816 = vld [vmem:[%s742 + $0x91] sm:$0xff]
        %v817 = vld [vmem:[%s742 + $0xa9] sm:$0xff]
        %v818 = vld [vmem:[%s742 + $0xb1] sm:$0xff]
        %v819 = vld [vmem:[%s742 + $0xc9] sm:$0xff]
        %v820 = vld [vmem:[%s742 + $0xd1] sm:$0xff]
        %v821 = vld [vmem:[%s742 + $0xe9] sm:$0xff]
        %v822 = vld [vmem:[%s742 + $0xf1] sm:$0xff]
        %v823 = vld [vmem:[%s742 + $0x109] sm:$0xff]
        %v824 = vld [vmem:[%s742 + $0x111] sm:$0xff]
        %v825 = vld [vmem:[%s742 + $0x129] sm:$0xff]
        %v826 = vld [vmem:[%s742 + $0x131] sm:$0xff]
        %v827 = vld [vmem:[%s742 + $0x149] sm:$0xff]
        %v828 = vld [vmem:[%s742 + $0x151] sm:$0xff]
        %v829 = vld [vmem:[%s742 + $0x169] sm:$0xff]
        %v830 = vld [vmem:[%s742 + $0x171] sm:$0xff]
        %v831 = vld [vmem:[%s742 + $0x189] sm:$0xff]
        %v832 = vld [vmem:[%s742 + $0x191] sm:$0xff]
        %v833 = vld [vmem:[%s742 + $0x1a9] sm:$0xff]
        %v834 = vld [vmem:[%s742 + $0x1b1] sm:$0xff]
        %v835 = vld [vmem:[%s742 + $0x1c9] sm:$0xff]
        %v836 = vld [vmem:[%s742 + $0x1d1] sm:$0xff]
        %v837 = vld [vmem:[%s742 + $0x1e9] sm:$0xff]
        %v838 = vld [vmem:[%s742 + $0x1f1] sm:$0xff]
        %871 = vrot.lane.b32.xlu0 %v582, 3
        %v872 = vpop.permute.xlu0 %871
        %873 = vrot.lane.b32.xlu0 %v583, 3
        %v874 = vpop.permute.xlu0 %873
        %875 = vrot.lane.b32.xlu0 %v584, 3
        %v876 = vpop.permute.xlu0 %875
        %877 = vrot.lane.b32.xlu0 %v585, 3
        %v878 = vpop.permute.xlu0 %877
        %879 = vrot.lane.b32.xlu0 %v586, 3
        %v880 = vpop.permute.xlu0 %879
        %881 = vrot.lane.b32.xlu0 %v587, 3
        %v882 = vpop.permute.xlu0 %881
        %883 = vrot.lane.b32.xlu0 %v588, 3
        %v884 = vpop.permute.xlu0 %883
        %885 = vrot.lane.b32.xlu0 %v589, 3
        %v886 = vpop.permute.xlu0 %885
        %887 = vrot.lane.b32.xlu0 %v590, 3
        %v888 = vpop.permute.xlu0 %887
        %889 = vrot.lane.b32.xlu0 %v591, 3
        %v890 = vpop.permute.xlu0 %889
        %891 = vrot.lane.b32.xlu0 %v592, 3
        %v892 = vpop.permute.xlu0 %891
        %893 = vrot.lane.b32.xlu0 %v593, 3
        %v894 = vpop.permute.xlu0 %893
        %895 = vrot.lane.b32.xlu0 %v594, 3
        %v896 = vpop.permute.xlu0 %895
        %897 = vrot.lane.b32.xlu0 %v595, 3
        %v898 = vpop.permute.xlu0 %897
        %899 = vrot.lane.b32.xlu0 %v596, 3
        %v900 = vpop.permute.xlu0 %899
        %901 = vrot.lane.b32.xlu0 %v597, 3
        %v902 = vpop.permute.xlu0 %901
        %903 = vrot.lane.b32.xlu0 %v598, 3
        %v904 = vpop.permute.xlu0 %903
        %905 = vrot.lane.b32.xlu0 %v599, 3
        %v906 = vpop.permute.xlu0 %905
        %907 = vrot.lane.b32.xlu0 %v600, 3
        %v908 = vpop.permute.xlu0 %907
        %909 = vrot.lane.b32.xlu0 %v601, 3
        %v910 = vpop.permute.xlu0 %909
        %911 = vrot.lane.b32.xlu0 %v602, 3
        %v912 = vpop.permute.xlu0 %911
        %913 = vrot.lane.b32.xlu0 %v603, 3
        %v914 = vpop.permute.xlu0 %913
        %915 = vrot.lane.b32.xlu0 %v604, 3
        %v916 = vpop.permute.xlu0 %915
        %917 = vrot.lane.b32.xlu0 %v605, 3
        %v918 = vpop.permute.xlu0 %917
        %919 = vrot.lane.b32.xlu0 %v606, 3
        %v920 = vpop.permute.xlu0 %919
        %921 = vrot.lane.b32.xlu0 %v607, 3
        %v922 = vpop.permute.xlu0 %921
        %923 = vrot.lane.b32.xlu0 %v608, 3
        %v924 = vpop.permute.xlu0 %923
        %925 = vrot.lane.b32.xlu0 %v609, 3
        %v926 = vpop.permute.xlu0 %925
        %927 = vrot.lane.b32.xlu0 %v610, 3
        %v928 = vpop.permute.xlu0 %927
        %929 = vrot.lane.b32.xlu0 %v611, 3
        %v930 = vpop.permute.xlu0 %929
        %931 = vrot.lane.b32.xlu0 %v612, 3
        %v932 = vpop.permute.xlu0 %931
        %933 = vrot.lane.b32.xlu0 %v613, 3
        %v934 = vpop.permute.xlu0 %933
        %999 = vrot.lane.b32.xlu0 %v614, 6
        %v1000 = vpop.permute.xlu0 %999
        %1001 = vrot.lane.b32.xlu0 %v615, 6
        %v1002 = vpop.permute.xlu0 %1001
        %1003 = vrot.lane.b32.xlu0 %v616, 6
        %v1004 = vpop.permute.xlu0 %1003
        %1005 = vrot.lane.b32.xlu0 %v617, 6
        %v1006 = vpop.permute.xlu0 %1005
        %1007 = vrot.lane.b32.xlu0 %v618, 6
        %v1008 = vpop.permute.xlu0 %1007
        %1009 = vrot.lane.b32.xlu0 %v619, 6
        %v1010 = vpop.permute.xlu0 %1009
        %1011 = vrot.lane.b32.xlu0 %v620, 6
        %v1012 = vpop.permute.xlu0 %1011
        %1013 = vrot.lane.b32.xlu0 %v621, 6
        %v1014 = vpop.permute.xlu0 %1013
        %1015 = vrot.lane.b32.xlu0 %v622, 6
        %v1016 = vpop.permute.xlu0 %1015
        %1017 = vrot.lane.b32.xlu0 %v623, 6
        %v1018 = vpop.permute.xlu0 %1017
        %1019 = vrot.lane.b32.xlu0 %v624, 6
        %v1020 = vpop.permute.xlu0 %1019
        %1021 = vrot.lane.b32.xlu0 %v625, 6
        %v1022 = vpop.permute.xlu0 %1021
        %1023 = vrot.lane.b32.xlu0 %v626, 6
        %v1024 = vpop.permute.xlu0 %1023
        %1025 = vrot.lane.b32.xlu0 %v627, 6
        %v1026 = vpop.permute.xlu0 %1025
        %1027 = vrot.lane.b32.xlu0 %v628, 6
        %v1028 = vpop.permute.xlu0 %1027
        %1029 = vrot.lane.b32.xlu0 %v629, 6
        %v1030 = vpop.permute.xlu0 %1029
        %1031 = vrot.lane.b32.xlu0 %v630, 6
        %v1032 = vpop.permute.xlu0 %1031
        %1033 = vrot.lane.b32.xlu0 %v631, 6
        %v1034 = vpop.permute.xlu0 %1033
        %1035 = vrot.lane.b32.xlu0 %v632, 6
        %v1036 = vpop.permute.xlu0 %1035
        %1037 = vrot.lane.b32.xlu0 %v633, 6
        %v1038 = vpop.permute.xlu0 %1037
        %1039 = vrot.lane.b32.xlu0 %v634, 6
        %v1040 = vpop.permute.xlu0 %1039
        %1041 = vrot.lane.b32.xlu0 %v635, 6
        %v1042 = vpop.permute.xlu0 %1041
        %1043 = vrot.lane.b32.xlu0 %v636, 6
        %v1044 = vpop.permute.xlu0 %1043
        %1045 = vrot.lane.b32.xlu0 %v637, 6
        %v1046 = vpop.permute.xlu0 %1045
        %1047 = vrot.lane.b32.xlu0 %v638, 6
        %v1048 = vpop.permute.xlu0 %1047
        %1049 = vrot.lane.b32.xlu0 %v639, 6
        %v1050 = vpop.permute.xlu0 %1049
        %1051 = vrot.lane.b32.xlu0 %v640, 6
        %v1052 = vpop.permute.xlu0 %1051
        %1053 = vrot.lane.b32.xlu0 %v641, 6
        %v1054 = vpop.permute.xlu0 %1053
        %1055 = vrot.lane.b32.xlu0 %v642, 6
        %v1056 = vpop.permute.xlu0 %1055
        %1057 = vrot.lane.b32.xlu0 %v643, 6
        %v1058 = vpop.permute.xlu0 %1057
        %1059 = vrot.lane.b32.xlu0 %v644, 6
        %v1060 = vpop.permute.xlu0 %1059
        %1061 = vrot.lane.b32.xlu0 %v645, 6
        %v1062 = vpop.permute.xlu0 %1061
        %1127 = vrot.lane.b32.xlu0 %v646, 9
        %v1128 = vpop.permute.xlu0 %1127
        %1129 = vrot.lane.b32.xlu0 %v647, 9
        %v1130 = vpop.permute.xlu0 %1129
        %1131 = vrot.lane.b32.xlu0 %v648, 9
        %v1132 = vpop.permute.xlu0 %1131
        %1133 = vrot.lane.b32.xlu0 %v649, 9
        %v1134 = vpop.permute.xlu0 %1133
        %1135 = vrot.lane.b32.xlu0 %v650, 9
        %v1136 = vpop.permute.xlu0 %1135
        %1137 = vrot.lane.b32.xlu0 %v651, 9
        %v1138 = vpop.permute.xlu0 %1137
        %1139 = vrot.lane.b32.xlu0 %v652, 9
        %v1140 = vpop.permute.xlu0 %1139
        %1141 = vrot.lane.b32.xlu0 %v653, 9
        %v1142 = vpop.permute.xlu0 %1141
        %1143 = vrot.lane.b32.xlu0 %v654, 9
        %v1144 = vpop.permute.xlu0 %1143
        %1145 = vrot.lane.b32.xlu0 %v655, 9
        %v1146 = vpop.permute.xlu0 %1145
        %1147 = vrot.lane.b32.xlu0 %v656, 9
        %v1148 = vpop.permute.xlu0 %1147
        %1149 = vrot.lane.b32.xlu0 %v657, 9
        %v1150 = vpop.permute.xlu0 %1149
        %1151 = vrot.lane.b32.xlu0 %v658, 9
        %v1152 = vpop.permute.xlu0 %1151
        %1153 = vrot.lane.b32.xlu0 %v659, 9
        %v1154 = vpop.permute.xlu0 %1153
        %1155 = vrot.lane.b32.xlu0 %v660, 9
        %v1156 = vpop.permute.xlu0 %1155
        %1157 = vrot.lane.b32.xlu0 %v661, 9
        %v1158 = vpop.permute.xlu0 %1157
        %1159 = vrot.lane.b32.xlu0 %v662, 9
        %v1160 = vpop.permute.xlu0 %1159
        %1161 = vrot.lane.b32.xlu0 %v663, 9
        %v1162 = vpop.permute.xlu0 %1161
        %1163 = vrot.lane.b32.xlu0 %v664, 9
        %v1164 = vpop.permute.xlu0 %1163
        %1165 = vrot.lane.b32.xlu0 %v665, 9
        %v1166 = vpop.permute.xlu0 %1165
        %1167 = vrot.lane.b32.xlu0 %v666, 9
        %v1168 = vpop.permute.xlu0 %1167
        %1169 = vrot.lane.b32.xlu0 %v667, 9
        %v1170 = vpop.permute.xlu0 %1169
        %1171 = vrot.lane.b32.xlu0 %v668, 9
        %v1172 = vpop.permute.xlu0 %1171
        %1173 = vrot.lane.b32.xlu0 %v669, 9
        %v1174 = vpop.permute.xlu0 %1173
        %1175 = vrot.lane.b32.xlu0 %v670, 9
        %v1176 = vpop.permute.xlu0 %1175
        %1177 = vrot.lane.b32.xlu0 %v671, 9
        %v1178 = vpop.permute.xlu0 %1177
        %1179 = vrot.lane.b32.xlu0 %v672, 9
        %v1180 = vpop.permute.xlu0 %1179
        %1181 = vrot.lane.b32.xlu0 %v673, 9
        %v1182 = vpop.permute.xlu0 %1181
        %1183 = vrot.lane.b32.xlu0 %v674, 9
        %v1184 = vpop.permute.xlu0 %1183
        %1185 = vrot.lane.b32.xlu0 %v675, 9
        %v1186 = vpop.permute.xlu0 %1185
        %1187 = vrot.lane.b32.xlu0 %v676, 9
        %v1188 = vpop.permute.xlu0 %1187
        %1189 = vrot.lane.b32.xlu0 %v677, 9
        %v1190 = vpop.permute.xlu0 %1189
        %1255 = vrot.lane.b32.xlu0 %v678, 12
        %v1256 = vpop.permute.xlu0 %1255
        %1257 = vrot.lane.b32.xlu0 %v679, 12
        %v1258 = vpop.permute.xlu0 %1257
        %1259 = vrot.lane.b32.xlu0 %v680, 12
        %v1260 = vpop.permute.xlu0 %1259
        %1261 = vrot.lane.b32.xlu0 %v681, 12
        %v1262 = vpop.permute.xlu0 %1261
        %1263 = vrot.lane.b32.xlu0 %v682, 12
        %v1264 = vpop.permute.xlu0 %1263
        %1265 = vrot.lane.b32.xlu0 %v683, 12
        %v1266 = vpop.permute.xlu0 %1265
        %1267 = vrot.lane.b32.xlu0 %v684, 12
        %v1268 = vpop.permute.xlu0 %1267
        %1269 = vrot.lane.b32.xlu0 %v685, 12
        %v1270 = vpop.permute.xlu0 %1269
        %1271 = vrot.lane.b32.xlu0 %v686, 12
        %v1272 = vpop.permute.xlu0 %1271
        %1273 = vrot.lane.b32.xlu0 %v687, 12
        %v1274 = vpop.permute.xlu0 %1273
        %1275 = vrot.lane.b32.xlu0 %v688, 12
        %v1276 = vpop.permute.xlu0 %1275
        %1277 = vrot.lane.b32.xlu0 %v689, 12
        %v1278 = vpop.permute.xlu0 %1277
        %1279 = vrot.lane.b32.xlu0 %v690, 12
        %v1280 = vpop.permute.xlu0 %1279
        %1281 = vrot.lane.b32.xlu0 %v691, 12
        %v1282 = vpop.permute.xlu0 %1281
        %1283 = vrot.lane.b32.xlu0 %v692, 12
        %v1284 = vpop.permute.xlu0 %1283
        %1285 = vrot.lane.b32.xlu0 %v693, 12
        %v1286 = vpop.permute.xlu0 %1285
        %1287 = vrot.lane.b32.xlu0 %v694, 12
        %v1288 = vpop.permute.xlu0 %1287
        %1289 = vrot.lane.b32.xlu0 %v695, 12
        %v1290 = vpop.permute.xlu0 %1289
        %1291 = vrot.lane.b32.xlu0 %v696, 12
        %v1292 = vpop.permute.xlu0 %1291
        %1293 = vrot.lane.b32.xlu0 %v697, 12
        %v1294 = vpop.permute.xlu0 %1293
        %1295 = vrot.lane.b32.xlu0 %v698, 12
        %v1296 = vpop.permute.xlu0 %1295
        %1297 = vrot.lane.b32.xlu0 %v699, 12
        %v1298 = vpop.permute.xlu0 %1297
        %1299 = vrot.lane.b32.xlu0 %v700, 12
        %v1300 = vpop.permute.xlu0 %1299
        %1301 = vrot.lane.b32.xlu0 %v701, 12
        %v1302 = vpop.permute.xlu0 %1301
        %1303 = vrot.lane.b32.xlu0 %v702, 12
        %v1304 = vpop.permute.xlu0 %1303
        %1305 = vrot.lane.b32.xlu0 %v703, 12
        %v1306 = vpop.permute.xlu0 %1305
        %1307 = vrot.lane.b32.xlu0 %v704, 12
        %v1308 = vpop.permute.xlu0 %1307
        %1309 = vrot.lane.b32.xlu0 %v705, 12
        %v1310 = vpop.permute.xlu0 %1309
        %1311 = vrot.lane.b32.xlu0 %v706, 12
        %v1312 = vpop.permute.xlu0 %1311
        %1313 = vrot.lane.b32.xlu0 %v707, 12
        %v1314 = vpop.permute.xlu0 %1313
        %1315 = vrot.lane.b32.xlu0 %v708, 12
        %v1316 = vpop.permute.xlu0 %1315
        %1317 = vrot.lane.b32.xlu0 %v709, 12
        %v1318 = vpop.permute.xlu0 %1317
        %1383 = vrot.lane.b32.xlu0 %v710, 15
        %v1384 = vpop.permute.xlu0 %1383
        %1385 = vrot.lane.b32.xlu0 %v711, 15
        %v1386 = vpop.permute.xlu0 %1385
        %1387 = vrot.lane.b32.xlu0 %v712, 15
        %v1388 = vpop.permute.xlu0 %1387
        %1389 = vrot.lane.b32.xlu0 %v713, 15
        %v1390 = vpop.permute.xlu0 %1389
        %1391 = vrot.lane.b32.xlu0 %v714, 15
        %v1392 = vpop.permute.xlu0 %1391
        %1393 = vrot.lane.b32.xlu0 %v715, 15
        %v1394 = vpop.permute.xlu0 %1393
        %1395 = vrot.lane.b32.xlu0 %v716, 15
        %v1396 = vpop.permute.xlu0 %1395
        %1397 = vrot.lane.b32.xlu0 %v717, 15
        %v1398 = vpop.permute.xlu0 %1397
        %1399 = vrot.lane.b32.xlu0 %v718, 15
        %v1400 = vpop.permute.xlu0 %1399
        %1401 = vrot.lane.b32.xlu0 %v719, 15
        %v1402 = vpop.permute.xlu0 %1401
        %1403 = vrot.lane.b32.xlu0 %v720, 15
        %v1404 = vpop.permute.xlu0 %1403
        %1405 = vrot.lane.b32.xlu0 %v721, 15
        %v1406 = vpop.permute.xlu0 %1405
        %1407 = vrot.lane.b32.xlu0 %v722, 15
        %v1408 = vpop.permute.xlu0 %1407
        %1409 = vrot.lane.b32.xlu0 %v723, 15
        %v1410 = vpop.permute.xlu0 %1409
        %1411 = vrot.lane.b32.xlu0 %v724, 15
        %v1412 = vpop.permute.xlu0 %1411
        %1413 = vrot.lane.b32.xlu0 %v725, 15
        %v1414 = vpop.permute.xlu0 %1413
        %1415 = vrot.lane.b32.xlu0 %v726, 15
        %v1416 = vpop.permute.xlu0 %1415
        %1417 = vrot.lane.b32.xlu0 %v727, 15
        %v1418 = vpop.permute.xlu0 %1417
        %1419 = vrot.lane.b32.xlu0 %v728, 15
        %v1420 = vpop.permute.xlu0 %1419
        %1421 = vrot.lane.b32.xlu0 %v729, 15
        %v1422 = vpop.permute.xlu0 %1421
        %1423 = vrot.lane.b32.xlu0 %v730, 15
        %v1424 = vpop.permute.xlu0 %1423
        %1425 = vrot.lane.b32.xlu0 %v731, 15
        %v1426 = vpop.permute.xlu0 %1425
        %1427 = vrot.lane.b32.xlu0 %v732, 15
        %v1428 = vpop.permute.xlu0 %1427
        %1429 = vrot.lane.b32.xlu0 %v733, 15
        %v1430 = vpop.permute.xlu0 %1429
        %1431 = vrot.lane.b32.xlu0 %v734, 15
        %v1432 = vpop.permute.xlu0 %1431
        %1433 = vrot.lane.b32.xlu0 %v735, 15
        %v1434 = vpop.permute.xlu0 %1433
        %1435 = vrot.lane.b32.xlu0 %v736, 15
        %v1436 = vpop.permute.xlu0 %1435
        %1437 = vrot.lane.b32.xlu0 %v737, 15
        %v1438 = vpop.permute.xlu0 %1437
        %1439 = vrot.lane.b32.xlu0 %v738, 15
        %v1440 = vpop.permute.xlu0 %1439
        %1441 = vrot.lane.b32.xlu0 %v739, 15
        %v1442 = vpop.permute.xlu0 %1441
        %1443 = vrot.lane.b32.xlu0 %v740, 15
        %v1444 = vpop.permute.xlu0 %1443
        %1445 = vrot.lane.b32.xlu0 %v741, 15
        %v1446 = vpop.permute.xlu0 %1445
        %1511 = vrot.lane.b32.xlu0 %v743, 18
        %v1512 = vpop.permute.xlu0 %1511
        %1513 = vrot.lane.b32.xlu0 %v744, 18
        %v1514 = vpop.permute.xlu0 %1513
        %1515 = vrot.lane.b32.xlu0 %v745, 18
        %v1516 = vpop.permute.xlu0 %1515
        %1517 = vrot.lane.b32.xlu0 %v746, 18
        %v1518 = vpop.permute.xlu0 %1517
        %1519 = vrot.lane.b32.xlu0 %v747, 18
        %v1520 = vpop.permute.xlu0 %1519
        %1521 = vrot.lane.b32.xlu0 %v748, 18
        %v1522 = vpop.permute.xlu0 %1521
        %1523 = vrot.lane.b32.xlu0 %v749, 18
        %v1524 = vpop.permute.xlu0 %1523
        %1525 = vrot.lane.b32.xlu0 %v750, 18
        %v1526 = vpop.permute.xlu0 %1525
        %1527 = vrot.lane.b32.xlu0 %v751, 18
        %v1528 = vpop.permute.xlu0 %1527
        %1529 = vrot.lane.b32.xlu0 %v752, 18
        %v1530 = vpop.permute.xlu0 %1529
        %1531 = vrot.lane.b32.xlu0 %v753, 18
        %v1532 = vpop.permute.xlu0 %1531
        %1533 = vrot.lane.b32.xlu0 %v754, 18
        %v1534 = vpop.permute.xlu0 %1533
        %1535 = vrot.lane.b32.xlu0 %v755, 18
        %v1536 = vpop.permute.xlu0 %1535
        %1537 = vrot.lane.b32.xlu0 %v756, 18
        %v1538 = vpop.permute.xlu0 %1537
        %1539 = vrot.lane.b32.xlu0 %v757, 18
        %v1540 = vpop.permute.xlu0 %1539
        %1541 = vrot.lane.b32.xlu0 %v758, 18
        %v1542 = vpop.permute.xlu0 %1541
        %1543 = vrot.lane.b32.xlu0 %v759, 18
        %v1544 = vpop.permute.xlu0 %1543
        %1545 = vrot.lane.b32.xlu0 %v760, 18
        %v1546 = vpop.permute.xlu0 %1545
        %1547 = vrot.lane.b32.xlu0 %v761, 18
        %v1548 = vpop.permute.xlu0 %1547
        %1549 = vrot.lane.b32.xlu0 %v762, 18
        %v1550 = vpop.permute.xlu0 %1549
        %1551 = vrot.lane.b32.xlu0 %v763, 18
        %v1552 = vpop.permute.xlu0 %1551
        %1553 = vrot.lane.b32.xlu0 %v764, 18
        %v1554 = vpop.permute.xlu0 %1553
        %1555 = vrot.lane.b32.xlu0 %v765, 18
        %v1556 = vpop.permute.xlu0 %1555
        %1557 = vrot.lane.b32.xlu0 %v766, 18
        %v1558 = vpop.permute.xlu0 %1557
        %1559 = vrot.lane.b32.xlu0 %v767, 18
        %v1560 = vpop.permute.xlu0 %1559
        %1561 = vrot.lane.b32.xlu0 %v768, 18
        %v1562 = vpop.permute.xlu0 %1561
        %1563 = vrot.lane.b32.xlu0 %v769, 18
        %v1564 = vpop.permute.xlu0 %1563
        %1565 = vrot.lane.b32.xlu0 %v770, 18
        %v1566 = vpop.permute.xlu0 %1565
        %1567 = vrot.lane.b32.xlu0 %v771, 18
        %v1568 = vpop.permute.xlu0 %1567
        %1569 = vrot.lane.b32.xlu0 %v772, 18
        %v1570 = vpop.permute.xlu0 %1569
        %1571 = vrot.lane.b32.xlu0 %v773, 18
        %v1572 = vpop.permute.xlu0 %1571
        %1573 = vrot.lane.b32.xlu0 %v774, 18
        %v1574 = vpop.permute.xlu0 %1573
        %1639 = vrot.lane.b32.xlu0 %v775, 21
        %v1640 = vpop.permute.xlu0 %1639
        %1641 = vrot.lane.b32.xlu0 %v776, 21
        %v1642 = vpop.permute.xlu0 %1641
        %1643 = vrot.lane.b32.xlu0 %v777, 21
        %v1644 = vpop.permute.xlu0 %1643
        %1645 = vrot.lane.b32.xlu0 %v778, 21
        %v1646 = vpop.permute.xlu0 %1645
        %1647 = vrot.lane.b32.xlu0 %v779, 21
        %v1648 = vpop.permute.xlu0 %1647
        %1649 = vrot.lane.b32.xlu0 %v780, 21
        %v1650 = vpop.permute.xlu0 %1649
        %1651 = vrot.lane.b32.xlu0 %v781, 21
        %v1652 = vpop.permute.xlu0 %1651
        %1653 = vrot.lane.b32.xlu0 %v782, 21
        %v1654 = vpop.permute.xlu0 %1653
        %1655 = vrot.lane.b32.xlu0 %v783, 21
        %v1656 = vpop.permute.xlu0 %1655
        %1657 = vrot.lane.b32.xlu0 %v784, 21
        %v1658 = vpop.permute.xlu0 %1657
        %1659 = vrot.lane.b32.xlu0 %v785, 21
        %v1660 = vpop.permute.xlu0 %1659
        %1661 = vrot.lane.b32.xlu0 %v786, 21
        %v1662 = vpop.permute.xlu0 %1661
        %1663 = vrot.lane.b32.xlu0 %v787, 21
        %v1664 = vpop.permute.xlu0 %1663
        %1665 = vrot.lane.b32.xlu0 %v788, 21
        %v1666 = vpop.permute.xlu0 %1665
        %1667 = vrot.lane.b32.xlu0 %v789, 21
        %v1668 = vpop.permute.xlu0 %1667
        %1669 = vrot.lane.b32.xlu0 %v790, 21
        %v1670 = vpop.permute.xlu0 %1669
        %1671 = vrot.lane.b32.xlu0 %v791, 21
        %v1672 = vpop.permute.xlu0 %1671
        %1673 = vrot.lane.b32.xlu0 %v792, 21
        %v1674 = vpop.permute.xlu0 %1673
        %1675 = vrot.lane.b32.xlu0 %v793, 21
        %v1676 = vpop.permute.xlu0 %1675
        %1677 = vrot.lane.b32.xlu0 %v794, 21
        %v1678 = vpop.permute.xlu0 %1677
        %1679 = vrot.lane.b32.xlu0 %v795, 21
        %v1680 = vpop.permute.xlu0 %1679
        %1681 = vrot.lane.b32.xlu0 %v796, 21
        %v1682 = vpop.permute.xlu0 %1681
        %1683 = vrot.lane.b32.xlu0 %v797, 21
        %v1684 = vpop.permute.xlu0 %1683
        %1685 = vrot.lane.b32.xlu0 %v798, 21
        %v1686 = vpop.permute.xlu0 %1685
        %1687 = vrot.lane.b32.xlu0 %v799, 21
        %v1688 = vpop.permute.xlu0 %1687
        %1689 = vrot.lane.b32.xlu0 %v800, 21
        %v1690 = vpop.permute.xlu0 %1689
        %1691 = vrot.lane.b32.xlu0 %v801, 21
        %v1692 = vpop.permute.xlu0 %1691
        %1693 = vrot.lane.b32.xlu0 %v802, 21
        %v1694 = vpop.permute.xlu0 %1693
        %1695 = vrot.lane.b32.xlu0 %v803, 21
        %v1696 = vpop.permute.xlu0 %1695
        %1697 = vrot.lane.b32.xlu0 %v804, 21
        %v1698 = vpop.permute.xlu0 %1697
        %1699 = vrot.lane.b32.xlu0 %v805, 21
        %v1700 = vpop.permute.xlu0 %1699
        %1701 = vrot.lane.b32.xlu0 %v806, 21
        %v1702 = vpop.permute.xlu0 %1701
        %1767 = vrot.lane.b32.xlu0 %v807, 24
        %v1768 = vpop.permute.xlu0 %1767
        %1769 = vrot.lane.b32.xlu0 %v808, 24
        %v1770 = vpop.permute.xlu0 %1769
        %1771 = vrot.lane.b32.xlu0 %v809, 24
        %v1772 = vpop.permute.xlu0 %1771
        %1773 = vrot.lane.b32.xlu0 %v810, 24
        %v1774 = vpop.permute.xlu0 %1773
        %1775 = vrot.lane.b32.xlu0 %v811, 24
        %v1776 = vpop.permute.xlu0 %1775
        %1777 = vrot.lane.b32.xlu0 %v812, 24
        %v1778 = vpop.permute.xlu0 %1777
        %1779 = vrot.lane.b32.xlu0 %v813, 24
        %v1780 = vpop.permute.xlu0 %1779
        %1781 = vrot.lane.b32.xlu0 %v814, 24
        %v1782 = vpop.permute.xlu0 %1781
        %1783 = vrot.lane.b32.xlu0 %v815, 24
        %v1784 = vpop.permute.xlu0 %1783
        %1785 = vrot.lane.b32.xlu0 %v816, 24
        %v1786 = vpop.permute.xlu0 %1785
        %1787 = vrot.lane.b32.xlu0 %v817, 24
        %v1788 = vpop.permute.xlu0 %1787
        %1789 = vrot.lane.b32.xlu0 %v818, 24
        %v1790 = vpop.permute.xlu0 %1789
        %1791 = vrot.lane.b32.xlu0 %v819, 24
        %v1792 = vpop.permute.xlu0 %1791
        %1793 = vrot.lane.b32.xlu0 %v820, 24
        %v1794 = vpop.permute.xlu0 %1793
        %1795 = vrot.lane.b32.xlu0 %v821, 24
        %v1796 = vpop.permute.xlu0 %1795
        %1797 = vrot.lane.b32.xlu0 %v822, 24
        %v1798 = vpop.permute.xlu0 %1797
        %1799 = vrot.lane.b32.xlu0 %v823, 24
        %v1800 = vpop.permute.xlu0 %1799
        %1801 = vrot.lane.b32.xlu0 %v824, 24
        %v1802 = vpop.permute.xlu0 %1801
        %1803 = vrot.lane.b32.xlu0 %v825, 24
        %v1804 = vpop.permute.xlu0 %1803
        %1805 = vrot.lane.b32.xlu0 %v826, 24
        %v1806 = vpop.permute.xlu0 %1805
        %1807 = vrot.lane.b32.xlu0 %v827, 24
        %v1808 = vpop.permute.xlu0 %1807
        %1809 = vrot.lane.b32.xlu0 %v828, 24
        %v1810 = vpop.permute.xlu0 %1809
        %1811 = vrot.lane.b32.xlu0 %v829, 24
        %v1812 = vpop.permute.xlu0 %1811
        %1813 = vrot.lane.b32.xlu0 %v830, 24
        %v1814 = vpop.permute.xlu0 %1813
        %1815 = vrot.lane.b32.xlu0 %v831, 24
        %v1816 = vpop.permute.xlu0 %1815
        %1817 = vrot.lane.b32.xlu0 %v832, 24
        %v1818 = vpop.permute.xlu0 %1817
        %1819 = vrot.lane.b32.xlu0 %v833, 24
        %v1820 = vpop.permute.xlu0 %1819
        %1821 = vrot.lane.b32.xlu0 %v834, 24
        %v1822 = vpop.permute.xlu0 %1821
        %1823 = vrot.lane.b32.xlu0 %v835, 24
        %v1824 = vpop.permute.xlu0 %1823
        %1825 = vrot.lane.b32.xlu0 %v836, 24
        %v1826 = vpop.permute.xlu0 %1825
        %1827 = vrot.lane.b32.xlu0 %v837, 24
        %v1828 = vpop.permute.xlu0 %1827
        %1829 = vrot.lane.b32.xlu0 %v838, 24
        %v1830 = vpop.permute.xlu0 %1829
        %v1863 = vsel %vm517, %v550, %v872
        %v1864 = vsel %vm517, %v551, %v874
        %v1865 = vsel %vm517, %v552, %v876
        %v1866 = vsel %vm517, %v553, %v878
        %v1867 = vsel %vm517, %v554, %v880
        %v1868 = vsel %vm517, %v555, %v882
        %v1869 = vsel %vm517, %v556, %v884
        %v1870 = vsel %vm517, %v557, %v886
        %v1871 = vsel %vm517, %v558, %v888
        %v1872 = vsel %vm517, %v559, %v890
        %v1873 = vsel %vm517, %v560, %v892
        %v1874 = vsel %vm517, %v561, %v894
        %v1875 = vsel %vm517, %v562, %v896
        %v1876 = vsel %vm517, %v563, %v898
        %v1877 = vsel %vm517, %v564, %v900
        %v1878 = vsel %vm517, %v565, %v902
        %v1879 = vsel %vm517, %v566, %v904
        %v1880 = vsel %vm517, %v567, %v906
        %v1881 = vsel %vm517, %v568, %v908
        %v1882 = vsel %vm517, %v569, %v910
        %v1883 = vsel %vm517, %v570, %v912
        %v1884 = vsel %vm517, %v571, %v914
        %v1885 = vsel %vm517, %v572, %v916
        %v1886 = vsel %vm517, %v573, %v918
        %v1887 = vsel %vm517, %v574, %v920
        %v1888 = vsel %vm517, %v575, %v922
        %v1889 = vsel %vm517, %v576, %v924
        %v1890 = vsel %vm517, %v577, %v926
        %v1891 = vsel %vm517, %v578, %v928
        %v1892 = vsel %vm517, %v579, %v930
        %v1893 = vsel %vm517, %v580, %v932
        %v1894 = vsel %vm517, %v581, %v934
        %vm1895 = vcmask 48128
        %v1896 = vsel %vm1895, %v1863, %v1000
        %v1897 = vsel %vm1895, %v1864, %v1002
        %v1898 = vsel %vm1895, %v1865, %v1004
        %v1899 = vsel %vm1895, %v1866, %v1006
        %v1900 = vsel %vm1895, %v1867, %v1008
        %v1901 = vsel %vm1895, %v1868, %v1010
        %v1902 = vsel %vm1895, %v1869, %v1012
        %v1903 = vsel %vm1895, %v1870, %v1014
        %v1904 = vsel %vm1895, %v1871, %v1016
        %v1905 = vsel %vm1895, %v1872, %v1018
        %v1906 = vsel %vm1895, %v1873, %v1020
        %v1907 = vsel %vm1895, %v1874, %v1022
        %v1908 = vsel %vm1895, %v1875, %v1024
        %v1909 = vsel %vm1895, %v1876, %v1026
        %v1910 = vsel %vm1895, %v1877, %v1028
        %v1911 = vsel %vm1895, %v1878, %v1030
        %v1912 = vsel %vm1895, %v1879, %v1032
        %v1913 = vsel %vm1895, %v1880, %v1034
        %v1914 = vsel %vm1895, %v1881, %v1036
        %v1915 = vsel %vm1895, %v1882, %v1038
        %v1916 = vsel %vm1895, %v1883, %v1040
        %v1917 = vsel %vm1895, %v1884, %v1042
        %v1918 = vsel %vm1895, %v1885, %v1044
        %v1919 = vsel %vm1895, %v1886, %v1046
        %v1920 = vsel %vm1895, %v1887, %v1048
        %v1921 = vsel %vm1895, %v1888, %v1050
        %v1922 = vsel %vm1895, %v1889, %v1052
        %v1923 = vsel %vm1895, %v1890, %v1054
        %v1924 = vsel %vm1895, %v1891, %v1056
        %v1925 = vsel %vm1895, %v1892, %v1058
        %v1926 = vsel %vm1895, %v1893, %v1060
        %v1927 = vsel %vm1895, %v1894, %v1062
        %vm1928 = vcmask 72704
        %v1929 = vsel %vm1928, %v1896, %v1128
        %v1930 = vsel %vm1928, %v1897, %v1130
        %v1931 = vsel %vm1928, %v1898, %v1132
        %v1932 = vsel %vm1928, %v1899, %v1134
        %v1933 = vsel %vm1928, %v1900, %v1136
        %v1934 = vsel %vm1928, %v1901, %v1138
        %v1935 = vsel %vm1928, %v1902, %v1140
        %v1936 = vsel %vm1928, %v1903, %v1142
        %v1937 = vsel %vm1928, %v1904, %v1144
        %v1938 = vsel %vm1928, %v1905, %v1146
        %v1939 = vsel %vm1928, %v1906, %v1148
        %v1940 = vsel %vm1928, %v1907, %v1150
        %v1941 = vsel %vm1928, %v1908, %v1152
        %v1942 = vsel %vm1928, %v1909, %v1154
        %v1943 = vsel %vm1928, %v1910, %v1156
        %v1944 = vsel %vm1928, %v1911, %v1158
        %v1945 = vsel %vm1928, %v1912, %v1160
        %v1946 = vsel %vm1928, %v1913, %v1162
        %v1947 = vsel %vm1928, %v1914, %v1164
        %v1948 = vsel %vm1928, %v1915, %v1166
        %v1949 = vsel %vm1928, %v1916, %v1168
        %v1950 = vsel %vm1928, %v1917, %v1170
        %v1951 = vsel %vm1928, %v1918, %v1172
        %v1952 = vsel %vm1928, %v1919, %v1174
        %v1953 = vsel %vm1928, %v1920, %v1176
        %v1954 = vsel %vm1928, %v1921, %v1178
        %v1955 = vsel %vm1928, %v1922, %v1180
        %v1956 = vsel %vm1928, %v1923, %v1182
        %v1957 = vsel %vm1928, %v1924, %v1184
        %v1958 = vsel %vm1928, %v1925, %v1186
        %v1959 = vsel %vm1928, %v1926, %v1188
        %v1960 = vsel %vm1928, %v1927, %v1190
        %vm1961 = vcmask 97280
        %v1962 = vsel %vm1961, %v1929, %v1256
        %v1963 = vsel %vm1961, %v1930, %v1258
        %v1964 = vsel %vm1961, %v1931, %v1260
        %v1965 = vsel %vm1961, %v1932, %v1262
        %v1966 = vsel %vm1961, %v1933, %v1264
        %v1967 = vsel %vm1961, %v1934, %v1266
        %v1968 = vsel %vm1961, %v1935, %v1268
        %v1969 = vsel %vm1961, %v1936, %v1270
        %v1970 = vsel %vm1961, %v1937, %v1272
        %v1971 = vsel %vm1961, %v1938, %v1274
        %v1972 = vsel %vm1961, %v1939, %v1276
        %v1973 = vsel %vm1961, %v1940, %v1278
        %v1974 = vsel %vm1961, %v1941, %v1280
        %v1975 = vsel %vm1961, %v1942, %v1282
        %v1976 = vsel %vm1961, %v1943, %v1284
        %v1977 = vsel %vm1961, %v1944, %v1286
        %v1978 = vsel %vm1961, %v1945, %v1288
        %v1979 = vsel %vm1961, %v1946, %v1290
        %v1980 = vsel %vm1961, %v1947, %v1292
        %v1981 = vsel %vm1961, %v1948, %v1294
        %v1982 = vsel %vm1961, %v1949, %v1296
        %v1983 = vsel %vm1961, %v1950, %v1298
        %v1984 = vsel %vm1961, %v1951, %v1300
        %v1985 = vsel %vm1961, %v1952, %v1302
        %v1986 = vsel %vm1961, %v1953, %v1304
        %v1987 = vsel %vm1961, %v1954, %v1306
        %v1988 = vsel %vm1961, %v1955, %v1308
        %v1989 = vsel %vm1961, %v1956, %v1310
        %v1990 = vsel %vm1961, %v1957, %v1312
        %v1991 = vsel %vm1961, %v1958, %v1314
        %v1992 = vsel %vm1961, %v1959, %v1316
        %v1993 = vsel %vm1961, %v1960, %v1318
        %vm1994 = vcmask 121856
        %v1995 = vsel %vm1994, %v1962, %v1384
        %v1996 = vsel %vm1994, %v1963, %v1386
        %v1997 = vsel %vm1994, %v1964, %v1388
        %v1998 = vsel %vm1994, %v1965, %v1390
        %v1999 = vsel %vm1994, %v1966, %v1392
        %v2000 = vsel %vm1994, %v1967, %v1394
        %v2001 = vsel %vm1994, %v1968, %v1396
        %v2002 = vsel %vm1994, %v1969, %v1398
        %v2003 = vsel %vm1994, %v1970, %v1400
        %v2004 = vsel %vm1994, %v1971, %v1402
        %v2005 = vsel %vm1994, %v1972, %v1404
        %v2006 = vsel %vm1994, %v1973, %v1406
        %v2007 = vsel %vm1994, %v1974, %v1408
        %v2008 = vsel %vm1994, %v1975, %v1410
        %v2009 = vsel %vm1994, %v1976, %v1412
        %v2010 = vsel %vm1994, %v1977, %v1414
        %v2011 = vsel %vm1994, %v1978, %v1416
        %v2012 = vsel %vm1994, %v1979, %v1418
        %v2013 = vsel %vm1994, %v1980, %v1420
        %v2014 = vsel %vm1994, %v1981, %v1422
        %v2015 = vsel %vm1994, %v1982, %v1424
        %v2016 = vsel %vm1994, %v1983, %v1426
        %v2017 = vsel %vm1994, %v1984, %v1428
        %v2018 = vsel %vm1994, %v1985, %v1430
        %v2019 = vsel %vm1994, %v1986, %v1432
        %v2020 = vsel %vm1994, %v1987, %v1434
        %v2021 = vsel %vm1994, %v1988, %v1436
        %v2022 = vsel %vm1994, %v1989, %v1438
        %v2023 = vsel %vm1994, %v1990, %v1440
        %v2024 = vsel %vm1994, %v1991, %v1442
        %v2025 = vsel %vm1994, %v1992, %v1444
        %v2026 = vsel %vm1994, %v1993, %v1446
        %vm2027 = vcmask 146432
        %v2028 = vsel %vm2027, %v1995, %v1512
        %v2029 = vsel %vm2027, %v1996, %v1514
        %v2030 = vsel %vm2027, %v1997, %v1516
        %v2031 = vsel %vm2027, %v1998, %v1518
        %v2032 = vsel %vm2027, %v1999, %v1520
        %v2033 = vsel %vm2027, %v2000, %v1522
        %v2034 = vsel %vm2027, %v2001, %v1524
        %v2035 = vsel %vm2027, %v2002, %v1526
        %v2036 = vsel %vm2027, %v2003, %v1528
        %v2037 = vsel %vm2027, %v2004, %v1530
        %v2038 = vsel %vm2027, %v2005, %v1532
        %v2039 = vsel %vm2027, %v2006, %v1534
        %v2040 = vsel %vm2027, %v2007, %v1536
        %v2041 = vsel %vm2027, %v2008, %v1538
        %v2042 = vsel %vm2027, %v2009, %v1540
        %v2043 = vsel %vm2027, %v2010, %v1542
        %v2044 = vsel %vm2027, %v2011, %v1544
        %v2045 = vsel %vm2027, %v2012, %v1546
        %v2046 = vsel %vm2027, %v2013, %v1548
        %v2047 = vsel %vm2027, %v2014, %v1550
        %v2048 = vsel %vm2027, %v2015, %v1552
        %v2049 = vsel %vm2027, %v2016, %v1554
        %v2050 = vsel %vm2027, %v2017, %v1556
        %v2051 = vsel %vm2027, %v2018, %v1558
        %v2052 = vsel %vm2027, %v2019, %v1560
        %v2053 = vsel %vm2027, %v2020, %v1562
        %v2054 = vsel %vm2027, %v2021, %v1564
        %v2055 = vsel %vm2027, %v2022, %v1566
        %v2056 = vsel %vm2027, %v2023, %v1568
        %v2057 = vsel %vm2027, %v2024, %v1570
        %v2058 = vsel %vm2027, %v2025, %v1572
        %v2059 = vsel %vm2027, %v2026, %v1574
        %vm2060 = vcmask 171008
        %v2061 = vsel %vm2060, %v2028, %v1640
        %v2062 = vsel %vm2060, %v2029, %v1642
        %v2063 = vsel %vm2060, %v2030, %v1644
        %v2064 = vsel %vm2060, %v2031, %v1646
        %v2065 = vsel %vm2060, %v2032, %v1648
        %v2066 = vsel %vm2060, %v2033, %v1650
        %v2067 = vsel %vm2060, %v2034, %v1652
        %v2068 = vsel %vm2060, %v2035, %v1654
        %v2069 = vsel %vm2060, %v2036, %v1656
        %v2070 = vsel %vm2060, %v2037, %v1658
        %v2071 = vsel %vm2060, %v2038, %v1660
        %v2072 = vsel %vm2060, %v2039, %v1662
        %v2073 = vsel %vm2060, %v2040, %v1664
        %v2074 = vsel %vm2060, %v2041, %v1666
        %v2075 = vsel %vm2060, %v2042, %v1668
        %v2076 = vsel %vm2060, %v2043, %v1670
        %v2077 = vsel %vm2060, %v2044, %v1672
        %v2078 = vsel %vm2060, %v2045, %v1674
        %v2079 = vsel %vm2060, %v2046, %v1676
        %v2080 = vsel %vm2060, %v2047, %v1678
        %v2081 = vsel %vm2060, %v2048, %v1680
        %v2082 = vsel %vm2060, %v2049, %v1682
        %v2083 = vsel %vm2060, %v2050, %v1684
        %v2084 = vsel %vm2060, %v2051, %v1686
        %v2085 = vsel %vm2060, %v2052, %v1688
        %v2086 = vsel %vm2060, %v2053, %v1690
        %v2087 = vsel %vm2060, %v2054, %v1692
        %v2088 = vsel %vm2060, %v2055, %v1694
        %v2089 = vsel %vm2060, %v2056, %v1696
        %v2090 = vsel %vm2060, %v2057, %v1698
        %v2091 = vsel %vm2060, %v2058, %v1700
        %v2092 = vsel %vm2060, %v2059, %v1702
        %vm2093 = vcmask 195584
        %v2094 = vsel %vm2093, %v2061, %v1768
        %v2095 = vsel %vm2093, %v2062, %v1770
        %v2096 = vsel %vm2093, %v2063, %v1772
        %v2097 = vsel %vm2093, %v2064, %v1774
        %v2098 = vsel %vm2093, %v2065, %v1776
        %v2099 = vsel %vm2093, %v2066, %v1778
        %v2100 = vsel %vm2093, %v2067, %v1780
        %v2101 = vsel %vm2093, %v2068, %v1782
        %v2102 = vsel %vm2093, %v2069, %v1784
        %v2103 = vsel %vm2093, %v2070, %v1786
        %v2104 = vsel %vm2093, %v2071, %v1788
        %v2105 = vsel %vm2093, %v2072, %v1790
        %v2106 = vsel %vm2093, %v2073, %v1792
        %v2107 = vsel %vm2093, %v2074, %v1794
        %v2108 = vsel %vm2093, %v2075, %v1796
        %v2109 = vsel %vm2093, %v2076, %v1798
        %v2110 = vsel %vm2093, %v2077, %v1800
        %v2111 = vsel %vm2093, %v2078, %v1802
        %v2112 = vsel %vm2093, %v2079, %v1804
        %v2113 = vsel %vm2093, %v2080, %v1806
        %v2114 = vsel %vm2093, %v2081, %v1808
        %v2115 = vsel %vm2093, %v2082, %v1810
        %v2116 = vsel %vm2093, %v2083, %v1812
        %v2117 = vsel %vm2093, %v2084, %v1814
        %v2118 = vsel %vm2093, %v2085, %v1816
        %v2119 = vsel %vm2093, %v2086, %v1818
        %v2120 = vsel %vm2093, %v2087, %v1820
        %v2121 = vsel %vm2093, %v2088, %v1822
        %v2122 = vsel %vm2093, %v2089, %v1824
        %v2123 = vsel %vm2093, %v2090, %v1826
        %v2124 = vsel %vm2093, %v2091, %v1828
        %v2125 = vsel %vm2093, %v2092, %v1830
        %v2126 = vpack.c.bf16 %v2095, %v2094
        %v2127 = vpack.c.bf16 %v2097, %v2096
        %v2128 = vpack.c.bf16 %v2099, %v2098
        %v2129 = vpack.c.bf16 %v2101, %v2100
        %v2130 = vpack.c.bf16 %v2103, %v2102
        %v2131 = vpack.c.bf16 %v2105, %v2104
        %v2132 = vpack.c.bf16 %v2107, %v2106
        %v2133 = vpack.c.bf16 %v2109, %v2108
        %v2134 = vpack.c.bf16 %v2111, %v2110
        %v2135 = vpack.c.bf16 %v2113, %v2112
        %v2136 = vpack.c.bf16 %v2115, %v2114
        %v2137 = vpack.c.bf16 %v2117, %v2116
        %v2138 = vpack.c.bf16 %v2119, %v2118
        %v2139 = vpack.c.bf16 %v2121, %v2120
        %v2140 = vpack.c.bf16 %v2123, %v2122
        %v2141 = vpack.c.bf16 %v2125, %v2124
        %v2142 = vld [vmem:[%s1] sm:$0xf]
        %v2143 = vld [vmem:[%s1 + $0x4] sm:$0xf]
        %v2144 = vld [vmem:[%s1 + $0x8] sm:$0xf]
        %v2145 = vld [vmem:[%s1 + $0xc] sm:$0x3]
        %v2146 = vld [vmem:[%s2] sm:$0x1]
        %v2148 = vlaneseq
        %v2149 = vshrl.u32 %v2148, 7
        %v2150 = vsub.s32 0, %v2149
        %v2151 = vrot.slane %v2146, %v2150
        %v2157 = vunpack.c.l.b16 %v2142
        %v2158 = vunpack.c.l.b16 %v2143
        %v2159 = vunpack.c.l.b16 %v2144
        %v2160 = vunpack.c.l.b16 %v2145
        %v2161 = vpack.c.b16 %v2158, %v2157
        %v2162 = vpack.c.b16 %v2160, %v2159
        %vm2164 = vcmask 220160
        %v2166 = vsel %vm2164, %v2126, 0
        %v2169 = vsel %vm2164, %v2127, 0
        %v2172 = vsel %vm2164, %v2128, 0
        %v2175 = vsel %vm2164, %v2129, 0
        %v2178 = vsel %vm2164, %v2130, 0
        %v2181 = vsel %vm2164, %v2131, 0
        %v2184 = vsel %vm2164, %v2132, 0
        %v2187 = vsel %vm2164, %v2133, 0
        %v2190 = vsel %vm2164, %v2134, 0
        %v2193 = vsel %vm2164, %v2135, 0
        %v2196 = vsel %vm2164, %v2136, 0
        %v2199 = vsel %vm2164, %v2137, 0
        %v2202 = vsel %vm2164, %v2138, 0
        %v2205 = vsel %vm2164, %v2139, 0
        %v2208 = vsel %vm2164, %v2140, 0
        %v2211 = vsel %vm2164, %v2141, 0
        %vm2213 = vcmask 1044480
        %vm2214 = vcmask 1045504
        %v2215 = vsel %vm2213, 4294967295, 65535
        %v2216 = vsel %vm2214, %v2215, 0
        %v2218 = vand.u32 %v2162, %v2216
        %2220 = vmatprep.subr.bf16.mxu0 0
        %2221 = vmatpush1.bf16.msra.mxu0 %v2161
        %2222 = vmatprep.subr.bf16.mxu0 0
        %2223 = vmatpush1.bf16.msra.mxu0 %v2218
        %2224 = vmatprep.subr.bf16.mxu0 0
        %2225 = vmatpush1.bf16.msra.mxu0 0
        %2226 = vmatprep.subr.bf16.mxu0 0
        %2227 = vmatpush1.bf16.msra.mxu0 0
        %2228 = vmatprep.subr.bf16.mxu0 0
        %2229 = vmatpush1.bf16.msra.mxu0 0
        %2230 = vmatprep.subr.bf16.mxu0 0
        %2231 = vmatpush1.bf16.msra.mxu0 0
        %2232 = vmatprep.subr.bf16.mxu0 0
        %2233 = vmatpush1.bf16.msra.mxu0 0
        %2234 = vmatprep.subr.bf16.mxu0 0
        %2235 = vmatpush1.bf16.msra.mxu0 0
        %2236 = vmatprep.subr.bf16.mxu0 0
        %2237 = vmatpush1.bf16.msra.mxu0 0
        %2238 = vmatprep.subr.bf16.mxu0 0
        %2239 = vmatpush1.bf16.msra.mxu0 0
        %2240 = vmatprep.subr.bf16.mxu0 0
        %2241 = vmatpush1.bf16.msra.mxu0 0
        %2242 = vmatprep.subr.bf16.mxu0 0
        %2243 = vmatpush1.bf16.msra.mxu0 0
        %2244 = vmatprep.subr.bf16.mxu0 0
        %2245 = vmatpush1.bf16.msra.mxu0 0
        %2246 = vmatprep.subr.bf16.mxu0 0
        %2247 = vmatpush1.bf16.msra.mxu0 0
        %2248 = vmatprep.subr.bf16.mxu0 0
        %2249 = vmatpush1.bf16.msra.mxu0 0
        %2250 = vmatprep.subr.bf16.mxu0 0
        %2251 = vmatpush1.bf16.msra.mxu0 0
        %2252 = vmatprep.mubr.bf16.mxu0 0
        %2253 = vmatmul.mubr.bf16.gmra.mrb[0].mxu0 %v2166
        %v2254 = vpop.f32.mrb[0].mxu0
        %v2255 = vadd.f32 %v2151, %v2254
        %v2256 = vpop.f32.mrb[0].mxu0
        %v2257 = vpop.f32.mrb[0].mxu0
        %v2258 = vadd.f32 %v2151, %v2257
        %v2259 = vpop.f32.mrb[0].mxu0
        %2260 = vmatprep.mubr.bf16.mxu0 0
        %2261 = vmatmul.mubr.bf16.gmra.mrb[0].mxu0 %v2169
        %v2262 = vpop.f32.mrb[0].mxu0
        %v2263 = vadd.f32 %v2151, %v2262
        %v2264 = vpop.f32.mrb[0].mxu0
        %v2265 = vpop.f32.mrb[0].mxu0
        %v2266 = vadd.f32 %v2151, %v2265
        %v2267 = vpop.f32.mrb[0].mxu0
        %2268 = vmatprep.mubr.bf16.mxu0 0
        %2269 = vmatmul.mubr.bf16.gmra.mrb[0].mxu0 %v2172
        %v2270 = vpop.f32.mrb[0].mxu0
        %v2271 = vadd.f32 %v2151, %v2270
        %v2272 = vpop.f32.mrb[0].mxu0
        %v2273 = vpop.f32.mrb[0].mxu0
        %v2274 = vadd.f32 %v2151, %v2273
        %v2275 = vpop.f32.mrb[0].mxu0
        %2276 = vmatprep.mubr.bf16.mxu0 0
        %2277 = vmatmul.mubr.bf16.gmra.mrb[0].mxu0 %v2175
        %v2278 = vpop.f32.mrb[0].mxu0
        %v2279 = vadd.f32 %v2151, %v2278
        %v2280 = vpop.f32.mrb[0].mxu0
        %v2281 = vpop.f32.mrb[0].mxu0
        %v2282 = vadd.f32 %v2151, %v2281
        %v2283 = vpop.f32.mrb[0].mxu0
        %2284 = vmatprep.mubr.bf16.mxu0 0
        %2285 = vmatmul.mubr.bf16.gmra.mrb[0].mxu0 %v2178
        %v2286 = vpop.f32.mrb[0].mxu0
        %v2287 = vadd.f32 %v2151, %v2286
        %v2288 = vpop.f32.mrb[0].mxu0
        %v2289 = vpop.f32.mrb[0].mxu0
        %v2290 = vadd.f32 %v2151, %v2289
        %v2291 = vpop.f32.mrb[0].mxu0
        %2292 = vmatprep.mubr.bf16.mxu0 0
        %2293 = vmatmul.mubr.bf16.gmra.mrb[0].mxu0 %v2181
        %v2294 = vpop.f32.mrb[0].mxu0
        %v2295 = vadd.f32 %v2151, %v2294
        %v2296 = vpop.f32.mrb[0].mxu0
        %v2297 = vpop.f32.mrb[0].mxu0
        %v2298 = vadd.f32 %v2151, %v2297
        %v2299 = vpop.f32.mrb[0].mxu0
        %2300 = vmatprep.mubr.bf16.mxu0 0
        %2301 = vmatmul.mubr.bf16.gmra.mrb[0].mxu0 %v2184
        %v2302 = vpop.f32.mrb[0].mxu0
        %v2303 = vadd.f32 %v2151, %v2302
        %v2304 = vpop.f32.mrb[0].mxu0
        %v2305 = vpop.f32.mrb[0].mxu0
        %v2306 = vadd.f32 %v2151, %v2305
        %v2307 = vpop.f32.mrb[0].mxu0
        %2308 = vmatprep.mubr.bf16.mxu0 0
        %2309 = vmatmul.mubr.bf16.gmra.mrb[0].mxu0 %v2187
        %v2310 = vpop.f32.mrb[0].mxu0
        %v2311 = vadd.f32 %v2151, %v2310
        %v2312 = vpop.f32.mrb[0].mxu0
        %v2313 = vpop.f32.mrb[0].mxu0
        %v2314 = vadd.f32 %v2151, %v2313
        %v2315 = vpop.f32.mrb[0].mxu0
        %2316 = vmatprep.mubr.bf16.mxu0 0
        %2317 = vmatmul.mubr.bf16.gmra.mrb[0].mxu0 %v2190
        %v2318 = vpop.f32.mrb[0].mxu0
        %v2319 = vadd.f32 %v2151, %v2318
        %v2320 = vpop.f32.mrb[0].mxu0
        %v2321 = vpop.f32.mrb[0].mxu0
        %v2322 = vadd.f32 %v2151, %v2321
        %v2323 = vpop.f32.mrb[0].mxu0
        %2324 = vmatprep.mubr.bf16.mxu0 0
        %2325 = vmatmul.mubr.bf16.gmra.mrb[0].mxu0 %v2193
        %v2326 = vpop.f32.mrb[0].mxu0
        %v2327 = vadd.f32 %v2151, %v2326
        %v2328 = vpop.f32.mrb[0].mxu0
        %v2329 = vpop.f32.mrb[0].mxu0
        %v2330 = vadd.f32 %v2151, %v2329
        %v2331 = vpop.f32.mrb[0].mxu0
        %2332 = vmatprep.mubr.bf16.mxu0 0
        %2333 = vmatmul.mubr.bf16.gmra.mrb[0].mxu0 %v2196
        %v2334 = vpop.f32.mrb[0].mxu0
        %v2335 = vadd.f32 %v2151, %v2334
        %v2336 = vpop.f32.mrb[0].mxu0
        %v2337 = vpop.f32.mrb[0].mxu0
        %v2338 = vadd.f32 %v2151, %v2337
        %v2339 = vpop.f32.mrb[0].mxu0
        %2340 = vmatprep.mubr.bf16.mxu0 0
        %2341 = vmatmul.mubr.bf16.gmra.mrb[0].mxu0 %v2199
        %v2342 = vpop.f32.mrb[0].mxu0
        %v2343 = vadd.f32 %v2151, %v2342
        %v2344 = vpop.f32.mrb[0].mxu0
        %v2345 = vpop.f32.mrb[0].mxu0
        %v2346 = vadd.f32 %v2151, %v2345
        %v2347 = vpop.f32.mrb[0].mxu0
        %2348 = vmatprep.mubr.bf16.mxu0 0
        %2349 = vmatmul.mubr.bf16.gmra.mrb[0].mxu0 %v2202
        %v2350 = vpop.f32.mrb[0].mxu0
        %v2351 = vadd.f32 %v2151, %v2350
        %v2352 = vpop.f32.mrb[0].mxu0
        %v2353 = vpop.f32.mrb[0].mxu0
        %v2354 = vadd.f32 %v2151, %v2353
        %v2355 = vpop.f32.mrb[0].mxu0
        %2356 = vmatprep.mubr.bf16.mxu0 0
        %2357 = vmatmul.mubr.bf16.gmra.mrb[0].mxu0 %v2205
        %v2358 = vpop.f32.mrb[0].mxu0
        %v2359 = vadd.f32 %v2151, %v2358
        %v2360 = vpop.f32.mrb[0].mxu0
        %v2361 = vpop.f32.mrb[0].mxu0
        %v2362 = vadd.f32 %v2151, %v2361
        %v2363 = vpop.f32.mrb[0].mxu0
        %2364 = vmatprep.mubr.bf16.mxu0 0
        %2365 = vmatmul.mubr.bf16.gmra.mrb[0].mxu0 %v2208
        %v2366 = vpop.f32.mrb[0].mxu0
        %v2367 = vadd.f32 %v2151, %v2366
        %v2368 = vpop.f32.mrb[0].mxu0
        %v2369 = vpop.f32.mrb[0].mxu0
        %v2370 = vadd.f32 %v2151, %v2369
        %v2371 = vpop.f32.mrb[0].mxu0
        %2372 = vmatprep.mubr.bf16.mxu0 0
        %2373 = vmatmul.mubr.bf16.gmra.mrb[0].mxu0 %v2211
        %v2374 = vpop.f32.mrb[0].mxu0
        %v2375 = vadd.f32 %v2151, %v2374
        %v2376 = vpop.f32.mrb[0].mxu0
        %v2377 = vpop.f32.mrb[0].mxu0
        %v2378 = vadd.f32 %v2151, %v2377
        %v2379 = vpop.f32.mrb[0].mxu0
        %2380 = vdwg.mxu0
        %v2381 = vmax.f32 %v2255, 0.0
        %v2382 = vmax.f32 %v2258, 0.0
        %v2383 = vmax.f32 %v2263, 0.0
        %v2384 = vmax.f32 %v2266, 0.0
        %v2385 = vmax.f32 %v2271, 0.0
        %v2386 = vmax.f32 %v2274, 0.0
        %v2387 = vmax.f32 %v2279, 0.0
        %v2388 = vmax.f32 %v2282, 0.0
        %v2389 = vmax.f32 %v2287, 0.0
        %v2390 = vmax.f32 %v2290, 0.0
        %v2391 = vmax.f32 %v2295, 0.0
        %v2392 = vmax.f32 %v2298, 0.0
        %v2393 = vmax.f32 %v2303, 0.0
        %v2394 = vmax.f32 %v2306, 0.0
        %v2395 = vmax.f32 %v2311, 0.0
        %v2396 = vmax.f32 %v2314, 0.0
        %v2397 = vmax.f32 %v2319, 0.0
        %v2398 = vmax.f32 %v2322, 0.0
        %v2399 = vmax.f32 %v2327, 0.0
        %v2400 = vmax.f32 %v2330, 0.0
        %v2401 = vmax.f32 %v2335, 0.0
        %v2402 = vmax.f32 %v2338, 0.0
        %v2403 = vmax.f32 %v2343, 0.0
        %v2404 = vmax.f32 %v2346, 0.0
        %v2405 = vmax.f32 %v2351, 0.0
        %v2406 = vmax.f32 %v2354, 0.0
        %v2407 = vmax.f32 %v2359, 0.0
        %v2408 = vmax.f32 %v2362, 0.0
        %v2409 = vmax.f32 %v2367, 0.0
        %v2410 = vmax.f32 %v2370, 0.0
        %v2411 = vmax.f32 %v2375, 0.0
        %v2412 = vmax.f32 %v2378, 0.0
        %v2445 = vcombine.high %v2381, %v2381
        %v2447 = vunpack.c.l.s4 1983009808
        %v2448 = vunpack.c.0.s8 %v2447
        %v2449 = vlaneseq
        %v2450 = vshrl.u32 %v2449, 7
        %v2451 = vsub.s32 %v2448, %v2450
        %v2452 = vrot.slane %v2381, %v2451
        %v2454 = vunpack.c.l.s4 1983009808
        %v2455 = vunpack.c.0.s8 %v2454
        %v2456 = vlaneseq
        %v2457 = vshrl.u32 %v2456, 7
        %v2458 = vsub.s32 %v2455, %v2457
        %v2459 = vrot.slane %v2445, %v2458
        %v2460 = vcombine.high %v2452, %v2452
        %v2461 = vcombine.high %v2459, %v2459
        %v2462 = vcombine.high %v2382, %v2382
        %v2464 = vunpack.c.l.s4 1983009808
        %v2465 = vunpack.c.0.s8 %v2464
        %v2466 = vlaneseq
        %v2467 = vshrl.u32 %v2466, 7
        %v2468 = vsub.s32 %v2465, %v2467
        %v2469 = vrot.slane %v2382, %v2468
        %v2471 = vunpack.c.l.s4 1983009808
        %v2472 = vunpack.c.0.s8 %v2471
        %v2473 = vlaneseq
        %v2474 = vshrl.u32 %v2473, 7
        %v2475 = vsub.s32 %v2472, %v2474
        %v2476 = vrot.slane %v2462, %v2475
        %v2477 = vcombine.high %v2469, %v2469
        %v2478 = vcombine.high %v2476, %v2476
        %v2479 = vcombine.high %v2383, %v2383
        %v2481 = vunpack.c.l.s4 1983009808
        %v2482 = vunpack.c.0.s8 %v2481
        %v2483 = vlaneseq
        %v2484 = vshrl.u32 %v2483, 7
        %v2485 = vsub.s32 %v2482, %v2484
        %v2486 = vrot.slane %v2383, %v2485
        %v2488 = vunpack.c.l.s4 1983009808
        %v2489 = vunpack.c.0.s8 %v2488
        %v2490 = vlaneseq
        %v2491 = vshrl.u32 %v2490, 7
        %v2492 = vsub.s32 %v2489, %v2491
        %v2493 = vrot.slane %v2479, %v2492
        %v2494 = vcombine.high %v2486, %v2486
        %v2495 = vcombine.high %v2493, %v2493
        %v2496 = vcombine.high %v2384, %v2384
        %v2498 = vunpack.c.l.s4 1983009808
        %v2499 = vunpack.c.0.s8 %v2498
        %v2500 = vlaneseq
        %v2501 = vshrl.u32 %v2500, 7
        %v2502 = vsub.s32 %v2499, %v2501
        %v2503 = vrot.slane %v2384, %v2502
        %v2505 = vunpack.c.l.s4 1983009808
        %v2506 = vunpack.c.0.s8 %v2505
        %v2507 = vlaneseq
        %v2508 = vshrl.u32 %v2507, 7
        %v2509 = vsub.s32 %v2506, %v2508
        %v2510 = vrot.slane %v2496, %v2509
        %v2511 = vcombine.high %v2503, %v2503
        %v2512 = vcombine.high %v2510, %v2510
        %v2513 = vcombine.high %v2385, %v2385
        %v2515 = vunpack.c.l.s4 1983009808
        %v2516 = vunpack.c.0.s8 %v2515
        %v2517 = vlaneseq
        %v2518 = vshrl.u32 %v2517, 7
        %v2519 = vsub.s32 %v2516, %v2518
        %v2520 = vrot.slane %v2385, %v2519
        %v2522 = vunpack.c.l.s4 1983009808
        %v2523 = vunpack.c.0.s8 %v2522
        %v2524 = vlaneseq
        %v2525 = vshrl.u32 %v2524, 7
        %v2526 = vsub.s32 %v2523, %v2525
        %v2527 = vrot.slane %v2513, %v2526
        %v2528 = vcombine.high %v2520, %v2520
        %v2529 = vcombine.high %v2527, %v2527
        %v2530 = vcombine.high %v2386, %v2386
        %v2532 = vunpack.c.l.s4 1983009808
        %v2533 = vunpack.c.0.s8 %v2532
        %v2534 = vlaneseq
        %v2535 = vshrl.u32 %v2534, 7
        %v2536 = vsub.s32 %v2533, %v2535
        %v2537 = vrot.slane %v2386, %v2536
        %v2539 = vunpack.c.l.s4 1983009808
        %v2540 = vunpack.c.0.s8 %v2539
        %v2541 = vlaneseq
        %v2542 = vshrl.u32 %v2541, 7
        %v2543 = vsub.s32 %v2540, %v2542
        %v2544 = vrot.slane %v2530, %v2543
        %v2545 = vcombine.high %v2537, %v2537
        %v2546 = vcombine.high %v2544, %v2544
        %v2547 = vcombine.high %v2387, %v2387
        %v2549 = vunpack.c.l.s4 1983009808
        %v2550 = vunpack.c.0.s8 %v2549
        %v2551 = vlaneseq
        %v2552 = vshrl.u32 %v2551, 7
        %v2553 = vsub.s32 %v2550, %v2552
        %v2554 = vrot.slane %v2387, %v2553
        %v2556 = vunpack.c.l.s4 1983009808
        %v2557 = vunpack.c.0.s8 %v2556
        %v2558 = vlaneseq
        %v2559 = vshrl.u32 %v2558, 7
        %v2560 = vsub.s32 %v2557, %v2559
        %v2561 = vrot.slane %v2547, %v2560
        %v2562 = vcombine.high %v2554, %v2554
        %v2563 = vcombine.high %v2561, %v2561
        %v2564 = vcombine.high %v2388, %v2388
        %v2566 = vunpack.c.l.s4 1983009808
        %v2567 = vunpack.c.0.s8 %v2566
        %v2568 = vlaneseq
        %v2569 = vshrl.u32 %v2568, 7
        %v2570 = vsub.s32 %v2567, %v2569
        %v2571 = vrot.slane %v2388, %v2570
        %v2573 = vunpack.c.l.s4 1983009808
        %v2574 = vunpack.c.0.s8 %v2573
        %v2575 = vlaneseq
        %v2576 = vshrl.u32 %v2575, 7
        %v2577 = vsub.s32 %v2574, %v2576
        %v2578 = vrot.slane %v2564, %v2577
        %v2579 = vcombine.high %v2571, %v2571
        %v2580 = vcombine.high %v2578, %v2578
        %v2581 = vcombine.high %v2389, %v2389
        %v2583 = vunpack.c.l.s4 1983009808
        %v2584 = vunpack.c.0.s8 %v2583
        %v2585 = vlaneseq
        %v2586 = vshrl.u32 %v2585, 7
        %v2587 = vsub.s32 %v2584, %v2586
        %v2588 = vrot.slane %v2389, %v2587
        %v2590 = vunpack.c.l.s4 1983009808
        %v2591 = vunpack.c.0.s8 %v2590
        %v2592 = vlaneseq
        %v2593 = vshrl.u32 %v2592, 7
        %v2594 = vsub.s32 %v2591, %v2593
        %v2595 = vrot.slane %v2581, %v2594
        %v2596 = vcombine.high %v2588, %v2588
        %v2597 = vcombine.high %v2595, %v2595
        %v2598 = vcombine.high %v2390, %v2390
        %v2600 = vunpack.c.l.s4 1983009808
        %v2601 = vunpack.c.0.s8 %v2600
        %v2602 = vlaneseq
        %v2603 = vshrl.u32 %v2602, 7
        %v2604 = vsub.s32 %v2601, %v2603
        %v2605 = vrot.slane %v2390, %v2604
        %v2607 = vunpack.c.l.s4 1983009808
        %v2608 = vunpack.c.0.s8 %v2607
        %v2609 = vlaneseq
        %v2610 = vshrl.u32 %v2609, 7
        %v2611 = vsub.s32 %v2608, %v2610
        %v2612 = vrot.slane %v2598, %v2611
        %v2613 = vcombine.high %v2605, %v2605
        %v2614 = vcombine.high %v2612, %v2612
        %v2615 = vcombine.high %v2391, %v2391
        %v2617 = vunpack.c.l.s4 1983009808
        %v2618 = vunpack.c.0.s8 %v2617
        %v2619 = vlaneseq
        %v2620 = vshrl.u32 %v2619, 7
        %v2621 = vsub.s32 %v2618, %v2620
        %v2622 = vrot.slane %v2391, %v2621
        %v2624 = vunpack.c.l.s4 1983009808
        %v2625 = vunpack.c.0.s8 %v2624
        %v2626 = vlaneseq
        %v2627 = vshrl.u32 %v2626, 7
        %v2628 = vsub.s32 %v2625, %v2627
        %v2629 = vrot.slane %v2615, %v2628
        %v2630 = vcombine.high %v2622, %v2622
        %v2631 = vcombine.high %v2629, %v2629
        %v2632 = vcombine.high %v2392, %v2392
        %v2634 = vunpack.c.l.s4 1983009808
        %v2635 = vunpack.c.0.s8 %v2634
        %v2636 = vlaneseq
        %v2637 = vshrl.u32 %v2636, 7
        %v2638 = vsub.s32 %v2635, %v2637
        %v2639 = vrot.slane %v2392, %v2638
        %v2641 = vunpack.c.l.s4 1983009808
        %v2642 = vunpack.c.0.s8 %v2641
        %v2643 = vlaneseq
        %v2644 = vshrl.u32 %v2643, 7
        %v2645 = vsub.s32 %v2642, %v2644
        %v2646 = vrot.slane %v2632, %v2645
        %v2647 = vcombine.high %v2639, %v2639
        %v2648 = vcombine.high %v2646, %v2646
        %v2649 = vcombine.high %v2393, %v2393
        %v2651 = vunpack.c.l.s4 1983009808
        %v2652 = vunpack.c.0.s8 %v2651
        %v2653 = vlaneseq
        %v2654 = vshrl.u32 %v2653, 7
        %v2655 = vsub.s32 %v2652, %v2654
        %v2656 = vrot.slane %v2393, %v2655
        %v2658 = vunpack.c.l.s4 1983009808
        %v2659 = vunpack.c.0.s8 %v2658
        %v2660 = vlaneseq
        %v2661 = vshrl.u32 %v2660, 7
        %v2662 = vsub.s32 %v2659, %v2661
        %v2663 = vrot.slane %v2649, %v2662
        %v2664 = vcombine.high %v2656, %v2656
        %v2665 = vcombine.high %v2663, %v2663
        %v2666 = vcombine.high %v2394, %v2394
        %v2668 = vunpack.c.l.s4 1983009808
        %v2669 = vunpack.c.0.s8 %v2668
        %v2670 = vlaneseq
        %v2671 = vshrl.u32 %v2670, 7
        %v2672 = vsub.s32 %v2669, %v2671
        %v2673 = vrot.slane %v2394, %v2672
        %v2675 = vunpack.c.l.s4 1983009808
        %v2676 = vunpack.c.0.s8 %v2675
        %v2677 = vlaneseq
        %v2678 = vshrl.u32 %v2677, 7
        %v2679 = vsub.s32 %v2676, %v2678
        %v2680 = vrot.slane %v2666, %v2679
        %v2681 = vcombine.high %v2673, %v2673
        %v2682 = vcombine.high %v2680, %v2680
        %v2683 = vcombine.high %v2395, %v2395
        %v2685 = vunpack.c.l.s4 1983009808
        %v2686 = vunpack.c.0.s8 %v2685
        %v2687 = vlaneseq
        %v2688 = vshrl.u32 %v2687, 7
        %v2689 = vsub.s32 %v2686, %v2688
        %v2690 = vrot.slane %v2395, %v2689
        %v2692 = vunpack.c.l.s4 1983009808
        %v2693 = vunpack.c.0.s8 %v2692
        %v2694 = vlaneseq
        %v2695 = vshrl.u32 %v2694, 7
        %v2696 = vsub.s32 %v2693, %v2695
        %v2697 = vrot.slane %v2683, %v2696
        %v2698 = vcombine.high %v2690, %v2690
        %v2699 = vcombine.high %v2697, %v2697
        %v2700 = vcombine.high %v2396, %v2396
        %v2702 = vunpack.c.l.s4 1983009808
        %v2703 = vunpack.c.0.s8 %v2702
        %v2704 = vlaneseq
        %v2705 = vshrl.u32 %v2704, 7
        %v2706 = vsub.s32 %v2703, %v2705
        %v2707 = vrot.slane %v2396, %v2706
        %v2709 = vunpack.c.l.s4 1983009808
        %v2710 = vunpack.c.0.s8 %v2709
        %v2711 = vlaneseq
        %v2712 = vshrl.u32 %v2711, 7
        %v2713 = vsub.s32 %v2710, %v2712
        %v2714 = vrot.slane %v2700, %v2713
        %v2715 = vcombine.high %v2707, %v2707
        %v2716 = vcombine.high %v2714, %v2714
        %v2717 = vcombine.high %v2397, %v2397
        %v2719 = vunpack.c.l.s4 1983009808
        %v2720 = vunpack.c.0.s8 %v2719
        %v2721 = vlaneseq
        %v2722 = vshrl.u32 %v2721, 7
        %v2723 = vsub.s32 %v2720, %v2722
        %v2724 = vrot.slane %v2397, %v2723
        %v2726 = vunpack.c.l.s4 1983009808
        %v2727 = vunpack.c.0.s8 %v2726
        %v2728 = vlaneseq
        %v2729 = vshrl.u32 %v2728, 7
        %v2730 = vsub.s32 %v2727, %v2729
        %v2731 = vrot.slane %v2717, %v2730
        %v2732 = vcombine.high %v2724, %v2724
        %v2733 = vcombine.high %v2731, %v2731
        %v2734 = vcombine.high %v2398, %v2398
        %v2736 = vunpack.c.l.s4 1983009808
        %v2737 = vunpack.c.0.s8 %v2736
        %v2738 = vlaneseq
        %v2739 = vshrl.u32 %v2738, 7
        %v2740 = vsub.s32 %v2737, %v2739
        %v2741 = vrot.slane %v2398, %v2740
        %v2743 = vunpack.c.l.s4 1983009808
        %v2744 = vunpack.c.0.s8 %v2743
        %v2745 = vlaneseq
        %v2746 = vshrl.u32 %v2745, 7
        %v2747 = vsub.s32 %v2744, %v2746
        %v2748 = vrot.slane %v2734, %v2747
        %v2749 = vcombine.high %v2741, %v2741
        %v2750 = vcombine.high %v2748, %v2748
        %v2751 = vcombine.high %v2399, %v2399
        %v2753 = vunpack.c.l.s4 1983009808
        %v2754 = vunpack.c.0.s8 %v2753
        %v2755 = vlaneseq
        %v2756 = vshrl.u32 %v2755, 7
        %v2757 = vsub.s32 %v2754, %v2756
        %v2758 = vrot.slane %v2399, %v2757
        %v2760 = vunpack.c.l.s4 1983009808
        %v2761 = vunpack.c.0.s8 %v2760
        %v2762 = vlaneseq
        %v2763 = vshrl.u32 %v2762, 7
        %v2764 = vsub.s32 %v2761, %v2763
        %v2765 = vrot.slane %v2751, %v2764
        %v2766 = vcombine.high %v2758, %v2758
        %v2767 = vcombine.high %v2765, %v2765
        %v2768 = vcombine.high %v2400, %v2400
        %v2770 = vunpack.c.l.s4 1983009808
        %v2771 = vunpack.c.0.s8 %v2770
        %v2772 = vlaneseq
        %v2773 = vshrl.u32 %v2772, 7
        %v2774 = vsub.s32 %v2771, %v2773
        %v2775 = vrot.slane %v2400, %v2774
        %v2777 = vunpack.c.l.s4 1983009808
        %v2778 = vunpack.c.0.s8 %v2777
        %v2779 = vlaneseq
        %v2780 = vshrl.u32 %v2779, 7
        %v2781 = vsub.s32 %v2778, %v2780
        %v2782 = vrot.slane %v2768, %v2781
        %v2783 = vcombine.high %v2775, %v2775
        %v2784 = vcombine.high %v2782, %v2782
        %v2785 = vcombine.high %v2401, %v2401
        %v2787 = vunpack.c.l.s4 1983009808
        %v2788 = vunpack.c.0.s8 %v2787
        %v2789 = vlaneseq
        %v2790 = vshrl.u32 %v2789, 7
        %v2791 = vsub.s32 %v2788, %v2790
        %v2792 = vrot.slane %v2401, %v2791
        %v2794 = vunpack.c.l.s4 1983009808
        %v2795 = vunpack.c.0.s8 %v2794
        %v2796 = vlaneseq
        %v2797 = vshrl.u32 %v2796, 7
        %v2798 = vsub.s32 %v2795, %v2797
        %v2799 = vrot.slane %v2785, %v2798
        %v2800 = vcombine.high %v2792, %v2792
        %v2801 = vcombine.high %v2799, %v2799
        %v2802 = vcombine.high %v2402, %v2402
        %v2804 = vunpack.c.l.s4 1983009808
        %v2805 = vunpack.c.0.s8 %v2804
        %v2806 = vlaneseq
        %v2807 = vshrl.u32 %v2806, 7
        %v2808 = vsub.s32 %v2805, %v2807
        %v2809 = vrot.slane %v2402, %v2808
        %v2811 = vunpack.c.l.s4 1983009808
        %v2812 = vunpack.c.0.s8 %v2811
        %v2813 = vlaneseq
        %v2814 = vshrl.u32 %v2813, 7
        %v2815 = vsub.s32 %v2812, %v2814
        %v2816 = vrot.slane %v2802, %v2815
        %v2817 = vcombine.high %v2809, %v2809
        %v2818 = vcombine.high %v2816, %v2816
        %v2819 = vcombine.high %v2403, %v2403
        %v2821 = vunpack.c.l.s4 1983009808
        %v2822 = vunpack.c.0.s8 %v2821
        %v2823 = vlaneseq
        %v2824 = vshrl.u32 %v2823, 7
        %v2825 = vsub.s32 %v2822, %v2824
        %v2826 = vrot.slane %v2403, %v2825
        %v2828 = vunpack.c.l.s4 1983009808
        %v2829 = vunpack.c.0.s8 %v2828
        %v2830 = vlaneseq
        %v2831 = vshrl.u32 %v2830, 7
        %v2832 = vsub.s32 %v2829, %v2831
        %v2833 = vrot.slane %v2819, %v2832
        %v2834 = vcombine.high %v2826, %v2826
        %v2835 = vcombine.high %v2833, %v2833
        %v2836 = vcombine.high %v2404, %v2404
        %v2838 = vunpack.c.l.s4 1983009808
        %v2839 = vunpack.c.0.s8 %v2838
        %v2840 = vlaneseq
        %v2841 = vshrl.u32 %v2840, 7
        %v2842 = vsub.s32 %v2839, %v2841
        %v2843 = vrot.slane %v2404, %v2842
        %v2845 = vunpack.c.l.s4 1983009808
        %v2846 = vunpack.c.0.s8 %v2845
        %v2847 = vlaneseq
        %v2848 = vshrl.u32 %v2847, 7
        %v2849 = vsub.s32 %v2846, %v2848
        %v2850 = vrot.slane %v2836, %v2849
        %v2851 = vcombine.high %v2843, %v2843
        %v2852 = vcombine.high %v2850, %v2850
        %v2853 = vcombine.high %v2405, %v2405
        %v2855 = vunpack.c.l.s4 1983009808
        %v2856 = vunpack.c.0.s8 %v2855
        %v2857 = vlaneseq
        %v2858 = vshrl.u32 %v2857, 7
        %v2859 = vsub.s32 %v2856, %v2858
        %v2860 = vrot.slane %v2405, %v2859
        %v2862 = vunpack.c.l.s4 1983009808
        %v2863 = vunpack.c.0.s8 %v2862
        %v2864 = vlaneseq
        %v2865 = vshrl.u32 %v2864, 7
        %v2866 = vsub.s32 %v2863, %v2865
        %v2867 = vrot.slane %v2853, %v2866
        %v2868 = vcombine.high %v2860, %v2860
        %v2869 = vcombine.high %v2867, %v2867
        %v2870 = vcombine.high %v2406, %v2406
        %v2872 = vunpack.c.l.s4 1983009808
        %v2873 = vunpack.c.0.s8 %v2872
        %v2874 = vlaneseq
        %v2875 = vshrl.u32 %v2874, 7
        %v2876 = vsub.s32 %v2873, %v2875
        %v2877 = vrot.slane %v2406, %v2876
        %v2879 = vunpack.c.l.s4 1983009808
        %v2880 = vunpack.c.0.s8 %v2879
        %v2881 = vlaneseq
        %v2882 = vshrl.u32 %v2881, 7
        %v2883 = vsub.s32 %v2880, %v2882
        %v2884 = vrot.slane %v2870, %v2883
        %v2885 = vcombine.high %v2877, %v2877
        %v2886 = vcombine.high %v2884, %v2884
        %v2887 = vcombine.high %v2407, %v2407
        %v2889 = vunpack.c.l.s4 1983009808
        %v2890 = vunpack.c.0.s8 %v2889
        %v2891 = vlaneseq
        %v2892 = vshrl.u32 %v2891, 7
        %v2893 = vsub.s32 %v2890, %v2892
        %v2894 = vrot.slane %v2407, %v2893
        %v2896 = vunpack.c.l.s4 1983009808
        %v2897 = vunpack.c.0.s8 %v2896
        %v2898 = vlaneseq
        %v2899 = vshrl.u32 %v2898, 7
        %v2900 = vsub.s32 %v2897, %v2899
        %v2901 = vrot.slane %v2887, %v2900
        %v2902 = vcombine.high %v2894, %v2894
        %v2903 = vcombine.high %v2901, %v2901
        %v2904 = vcombine.high %v2408, %v2408
        %v2906 = vunpack.c.l.s4 1983009808
        %v2907 = vunpack.c.0.s8 %v2906
        %v2908 = vlaneseq
        %v2909 = vshrl.u32 %v2908, 7
        %v2910 = vsub.s32 %v2907, %v2909
        %v2911 = vrot.slane %v2408, %v2910
        %v2913 = vunpack.c.l.s4 1983009808
        %v2914 = vunpack.c.0.s8 %v2913
        %v2915 = vlaneseq
        %v2916 = vshrl.u32 %v2915, 7
        %v2917 = vsub.s32 %v2914, %v2916
        %v2918 = vrot.slane %v2904, %v2917
        %v2919 = vcombine.high %v2911, %v2911
        %v2920 = vcombine.high %v2918, %v2918
        %v2921 = vcombine.high %v2409, %v2409
        %v2923 = vunpack.c.l.s4 1983009808
        %v2924 = vunpack.c.0.s8 %v2923
        %v2925 = vlaneseq
        %v2926 = vshrl.u32 %v2925, 7
        %v2927 = vsub.s32 %v2924, %v2926
        %v2928 = vrot.slane %v2409, %v2927
        %v2930 = vunpack.c.l.s4 1983009808
        %v2931 = vunpack.c.0.s8 %v2930
        %v2932 = vlaneseq
        %v2933 = vshrl.u32 %v2932, 7
        %v2934 = vsub.s32 %v2931, %v2933
        %v2935 = vrot.slane %v2921, %v2934
        %v2936 = vcombine.high %v2928, %v2928
        %v2937 = vcombine.high %v2935, %v2935
        %v2938 = vcombine.high %v2410, %v2410
        %v2940 = vunpack.c.l.s4 1983009808
        %v2941 = vunpack.c.0.s8 %v2940
        %v2942 = vlaneseq
        %v2943 = vshrl.u32 %v2942, 7
        %v2944 = vsub.s32 %v2941, %v2943
        %v2945 = vrot.slane %v2410, %v2944
        %v2947 = vunpack.c.l.s4 1983009808
        %v2948 = vunpack.c.0.s8 %v2947
        %v2949 = vlaneseq
        %v2950 = vshrl.u32 %v2949, 7
        %v2951 = vsub.s32 %v2948, %v2950
        %v2952 = vrot.slane %v2938, %v2951
        %v2953 = vcombine.high %v2945, %v2945
        %v2954 = vcombine.high %v2952, %v2952
        %v2955 = vcombine.high %v2411, %v2411
        %v2957 = vunpack.c.l.s4 1983009808
        %v2958 = vunpack.c.0.s8 %v2957
        %v2959 = vlaneseq
        %v2960 = vshrl.u32 %v2959, 7
        %v2961 = vsub.s32 %v2958, %v2960
        %v2962 = vrot.slane %v2411, %v2961
        %v2964 = vunpack.c.l.s4 1983009808
        %v2965 = vunpack.c.0.s8 %v2964
        %v2966 = vlaneseq
        %v2967 = vshrl.u32 %v2966, 7
        %v2968 = vsub.s32 %v2965, %v2967
        %v2969 = vrot.slane %v2955, %v2968
        %v2970 = vcombine.high %v2962, %v2962
        %v2971 = vcombine.high %v2969, %v2969
        %v2972 = vcombine.high %v2412, %v2412
        %v2974 = vunpack.c.l.s4 1983009808
        %v2975 = vunpack.c.0.s8 %v2974
        %v2976 = vlaneseq
        %v2977 = vshrl.u32 %v2976, 7
        %v2978 = vsub.s32 %v2975, %v2977
        %v2979 = vrot.slane %v2412, %v2978
        %v2981 = vunpack.c.l.s4 1983009808
        %v2982 = vunpack.c.0.s8 %v2981
        %v2983 = vlaneseq
        %v2984 = vshrl.u32 %v2983, 7
        %v2985 = vsub.s32 %v2982, %v2984
        %v2986 = vrot.slane %v2972, %v2985
        %v2987 = vcombine.high %v2979, %v2979
        %v2988 = vcombine.high %v2986, %v2986
        %vm3117 = vcmask 254976
        %v3118 = vsel %vm3117, %v2452, -inf
        %v3119 = vsel %vm3117, %v2486, -inf
        %v3120 = vmax.f32 %v3118, %v3119
        %v3121 = vrot.slane %v3120, 4
        %v3122 = vmax.f32 %v3120, %v3121
        %v3123 = vrot.slane %v3122, 2
        %v3124 = vmax.f32 %v3122, %v3123
        %v3125 = vrot.slane %v3124, 1
        %v3126 = vmax.f32 %v3124, %v3125
        %v3127 = vsel %vm3117, %v2460, -inf
        %v3128 = vsel %vm3117, %v2494, -inf
        %v3129 = vmax.f32 %v3127, %v3128
        %v3130 = vrot.slane %v3129, 4
        %v3131 = vmax.f32 %v3129, %v3130
        %v3132 = vrot.slane %v3131, 2
        %v3133 = vmax.f32 %v3131, %v3132
        %v3134 = vrot.slane %v3133, 1
        %v3135 = vmax.f32 %v3133, %v3134
        %v3136 = vsel %vm3117, %v2459, -inf
        %v3137 = vsel %vm3117, %v2493, -inf
        %v3138 = vmax.f32 %v3136, %v3137
        %v3139 = vrot.slane %v3138, 4
        %v3140 = vmax.f32 %v3138, %v3139
        %v3141 = vrot.slane %v3140, 2
        %v3142 = vmax.f32 %v3140, %v3141
        %v3143 = vrot.slane %v3142, 1
        %v3144 = vmax.f32 %v3142, %v3143
        %v3145 = vsel %vm3117, %v2461, -inf
        %v3146 = vsel %vm3117, %v2495, -inf
        %v3147 = vmax.f32 %v3145, %v3146
        %v3148 = vrot.slane %v3147, 4
        %v3149 = vmax.f32 %v3147, %v3148
        %v3150 = vrot.slane %v3149, 2
        %v3151 = vmax.f32 %v3149, %v3150
        %v3152 = vrot.slane %v3151, 1
        %v3153 = vmax.f32 %v3151, %v3152
        %v3154 = vsel %vm3117, %v2469, -inf
        %v3155 = vsel %vm3117, %v2503, -inf
        %v3156 = vmax.f32 %v3154, %v3155
        %v3157 = vrot.slane %v3156, 4
        %v3158 = vmax.f32 %v3156, %v3157
        %v3159 = vrot.slane %v3158, 2
        %v3160 = vmax.f32 %v3158, %v3159
        %v3161 = vrot.slane %v3160, 1
        %v3162 = vmax.f32 %v3160, %v3161
        %v3163 = vsel %vm3117, %v2477, -inf
        %v3164 = vsel %vm3117, %v2511, -inf
        %v3165 = vmax.f32 %v3163, %v3164
        %v3166 = vrot.slane %v3165, 4
        %v3167 = vmax.f32 %v3165, %v3166
        %v3168 = vrot.slane %v3167, 2
        %v3169 = vmax.f32 %v3167, %v3168
        %v3170 = vrot.slane %v3169, 1
        %v3171 = vmax.f32 %v3169, %v3170
        %v3172 = vsel %vm3117, %v2476, -inf
        %v3173 = vsel %vm3117, %v2510, -inf
        %v3174 = vmax.f32 %v3172, %v3173
        %v3175 = vrot.slane %v3174, 4
        %v3176 = vmax.f32 %v3174, %v3175
        %v3177 = vrot.slane %v3176, 2
        %v3178 = vmax.f32 %v3176, %v3177
        %v3179 = vrot.slane %v3178, 1
        %v3180 = vmax.f32 %v3178, %v3179
        %v3181 = vsel %vm3117, %v2478, -inf
        %v3182 = vsel %vm3117, %v2512, -inf
        %v3183 = vmax.f32 %v3181, %v3182
        %v3184 = vrot.slane %v3183, 4
        %v3185 = vmax.f32 %v3183, %v3184
        %v3186 = vrot.slane %v3185, 2
        %v3187 = vmax.f32 %v3185, %v3186
        %v3188 = vrot.slane %v3187, 1
        %v3189 = vmax.f32 %v3187, %v3188
        %v3190 = vsel %vm3117, %v2520, -inf
        %v3191 = vsel %vm3117, %v2554, -inf
        %v3192 = vmax.f32 %v3190, %v3191
        %v3193 = vrot.slane %v3192, 4
        %v3194 = vmax.f32 %v3192, %v3193
        %v3195 = vrot.slane %v3194, 2
        %v3196 = vmax.f32 %v3194, %v3195
        %v3197 = vrot.slane %v3196, 1
        %v3198 = vmax.f32 %v3196, %v3197
        %v3199 = vsel %vm3117, %v2528, -inf
        %v3200 = vsel %vm3117, %v2562, -inf
        %v3201 = vmax.f32 %v3199, %v3200
        %v3202 = vrot.slane %v3201, 4
        %v3203 = vmax.f32 %v3201, %v3202
        %v3204 = vrot.slane %v3203, 2
        %v3205 = vmax.f32 %v3203, %v3204
        %v3206 = vrot.slane %v3205, 1
        %v3207 = vmax.f32 %v3205, %v3206
        %v3208 = vsel %vm3117, %v2527, -inf
        %v3209 = vsel %vm3117, %v2561, -inf
        %v3210 = vmax.f32 %v3208, %v3209
        %v3211 = vrot.slane %v3210, 4
        %v3212 = vmax.f32 %v3210, %v3211
        %v3213 = vrot.slane %v3212, 2
        %v3214 = vmax.f32 %v3212, %v3213
        %v3215 = vrot.slane %v3214, 1
        %v3216 = vmax.f32 %v3214, %v3215
        %v3217 = vsel %vm3117, %v2529, -inf
        %v3218 = vsel %vm3117, %v2563, -inf
        %v3219 = vmax.f32 %v3217, %v3218
        %v3220 = vrot.slane %v3219, 4
        %v3221 = vmax.f32 %v3219, %v3220
        %v3222 = vrot.slane %v3221, 2
        %v3223 = vmax.f32 %v3221, %v3222
        %v3224 = vrot.slane %v3223, 1
        %v3225 = vmax.f32 %v3223, %v3224
        %v3226 = vsel %vm3117, %v2537, -inf
        %v3227 = vsel %vm3117, %v2571, -inf
        %v3228 = vmax.f32 %v3226, %v3227
        %v3229 = vrot.slane %v3228, 4
        %v3230 = vmax.f32 %v3228, %v3229
        %v3231 = vrot.slane %v3230, 2
        %v3232 = vmax.f32 %v3230, %v3231
        %v3233 = vrot.slane %v3232, 1
        %v3234 = vmax.f32 %v3232, %v3233
        %v3235 = vsel %vm3117, %v2545, -inf
        %v3236 = vsel %vm3117, %v2579, -inf
        %v3237 = vmax.f32 %v3235, %v3236
        %v3238 = vrot.slane %v3237, 4
        %v3239 = vmax.f32 %v3237, %v3238
        %v3240 = vrot.slane %v3239, 2
        %v3241 = vmax.f32 %v3239, %v3240
        %v3242 = vrot.slane %v3241, 1
        %v3243 = vmax.f32 %v3241, %v3242
        %v3244 = vsel %vm3117, %v2544, -inf
        %v3245 = vsel %vm3117, %v2578, -inf
        %v3246 = vmax.f32 %v3244, %v3245
        %v3247 = vrot.slane %v3246, 4
        %v3248 = vmax.f32 %v3246, %v3247
        %v3249 = vrot.slane %v3248, 2
        %v3250 = vmax.f32 %v3248, %v3249
        %v3251 = vrot.slane %v3250, 1
        %v3252 = vmax.f32 %v3250, %v3251
        %v3253 = vsel %vm3117, %v2546, -inf
        %v3254 = vsel %vm3117, %v2580, -inf
        %v3255 = vmax.f32 %v3253, %v3254
        %v3256 = vrot.slane %v3255, 4
        %v3257 = vmax.f32 %v3255, %v3256
        %v3258 = vrot.slane %v3257, 2
        %v3259 = vmax.f32 %v3257, %v3258
        %v3260 = vrot.slane %v3259, 1
        %v3261 = vmax.f32 %v3259, %v3260
        %v3262 = vsel %vm3117, %v2588, -inf
        %v3263 = vsel %vm3117, %v2622, -inf
        %v3264 = vmax.f32 %v3262, %v3263
        %v3265 = vrot.slane %v3264, 4
        %v3266 = vmax.f32 %v3264, %v3265
        %v3267 = vrot.slane %v3266, 2
        %v3268 = vmax.f32 %v3266, %v3267
        %v3269 = vrot.slane %v3268, 1
        %v3270 = vmax.f32 %v3268, %v3269
        %v3271 = vsel %vm3117, %v2596, -inf
        %v3272 = vsel %vm3117, %v2630, -inf
        %v3273 = vmax.f32 %v3271, %v3272
        %v3274 = vrot.slane %v3273, 4
        %v3275 = vmax.f32 %v3273, %v3274
        %v3276 = vrot.slane %v3275, 2
        %v3277 = vmax.f32 %v3275, %v3276
        %v3278 = vrot.slane %v3277, 1
        %v3279 = vmax.f32 %v3277, %v3278
        %v3280 = vsel %vm3117, %v2595, -inf
        %v3281 = vsel %vm3117, %v2629, -inf
        %v3282 = vmax.f32 %v3280, %v3281
        %v3283 = vrot.slane %v3282, 4
        %v3284 = vmax.f32 %v3282, %v3283
        %v3285 = vrot.slane %v3284, 2
        %v3286 = vmax.f32 %v3284, %v3285
        %v3287 = vrot.slane %v3286, 1
        %v3288 = vmax.f32 %v3286, %v3287
        %v3289 = vsel %vm3117, %v2597, -inf
        %v3290 = vsel %vm3117, %v2631, -inf
        %v3291 = vmax.f32 %v3289, %v3290
        %v3292 = vrot.slane %v3291, 4
        %v3293 = vmax.f32 %v3291, %v3292
        %v3294 = vrot.slane %v3293, 2
        %v3295 = vmax.f32 %v3293, %v3294
        %v3296 = vrot.slane %v3295, 1
        %v3297 = vmax.f32 %v3295, %v3296
        %v3298 = vsel %vm3117, %v2605, -inf
        %v3299 = vsel %vm3117, %v2639, -inf
        %v3300 = vmax.f32 %v3298, %v3299
        %v3301 = vrot.slane %v3300, 4
        %v3302 = vmax.f32 %v3300, %v3301
        %v3303 = vrot.slane %v3302, 2
        %v3304 = vmax.f32 %v3302, %v3303
        %v3305 = vrot.slane %v3304, 1
        %v3306 = vmax.f32 %v3304, %v3305
        %v3307 = vsel %vm3117, %v2613, -inf
        %v3308 = vsel %vm3117, %v2647, -inf
        %v3309 = vmax.f32 %v3307, %v3308
        %v3310 = vrot.slane %v3309, 4
        %v3311 = vmax.f32 %v3309, %v3310
        %v3312 = vrot.slane %v3311, 2
        %v3313 = vmax.f32 %v3311, %v3312
        %v3314 = vrot.slane %v3313, 1
        %v3315 = vmax.f32 %v3313, %v3314
        %v3316 = vsel %vm3117, %v2612, -inf
        %v3317 = vsel %vm3117, %v2646, -inf
        %v3318 = vmax.f32 %v3316, %v3317
        %v3319 = vrot.slane %v3318, 4
        %v3320 = vmax.f32 %v3318, %v3319
        %v3321 = vrot.slane %v3320, 2
        %v3322 = vmax.f32 %v3320, %v3321
        %v3323 = vrot.slane %v3322, 1
        %v3324 = vmax.f32 %v3322, %v3323
        %v3325 = vsel %vm3117, %v2614, -inf
        %v3326 = vsel %vm3117, %v2648, -inf
        %v3327 = vmax.f32 %v3325, %v3326
        %v3328 = vrot.slane %v3327, 4
        %v3329 = vmax.f32 %v3327, %v3328
        %v3330 = vrot.slane %v3329, 2
        %v3331 = vmax.f32 %v3329, %v3330
        %v3332 = vrot.slane %v3331, 1
        %v3333 = vmax.f32 %v3331, %v3332
        %v3334 = vsel %vm3117, %v2656, -inf
        %v3335 = vsel %vm3117, %v2690, -inf
        %v3336 = vmax.f32 %v3334, %v3335
        %v3337 = vrot.slane %v3336, 4
        %v3338 = vmax.f32 %v3336, %v3337
        %v3339 = vrot.slane %v3338, 2
        %v3340 = vmax.f32 %v3338, %v3339
        %v3341 = vrot.slane %v3340, 1
        %v3342 = vmax.f32 %v3340, %v3341
        %v3343 = vsel %vm3117, %v2664, -inf
        %v3344 = vsel %vm3117, %v2698, -inf
        %v3345 = vmax.f32 %v3343, %v3344
        %v3346 = vrot.slane %v3345, 4
        %v3347 = vmax.f32 %v3345, %v3346
        %v3348 = vrot.slane %v3347, 2
        %v3349 = vmax.f32 %v3347, %v3348
        %v3350 = vrot.slane %v3349, 1
        %v3351 = vmax.f32 %v3349, %v3350
        %v3352 = vsel %vm3117, %v2663, -inf
        %v3353 = vsel %vm3117, %v2697, -inf
        %v3354 = vmax.f32 %v3352, %v3353
        %v3355 = vrot.slane %v3354, 4
        %v3356 = vmax.f32 %v3354, %v3355
        %v3357 = vrot.slane %v3356, 2
        %v3358 = vmax.f32 %v3356, %v3357
        %v3359 = vrot.slane %v3358, 1
        %v3360 = vmax.f32 %v3358, %v3359
        %v3361 = vsel %vm3117, %v2665, -inf
        %v3362 = vsel %vm3117, %v2699, -inf
        %v3363 = vmax.f32 %v3361, %v3362
        %v3364 = vrot.slane %v3363, 4
        %v3365 = vmax.f32 %v3363, %v3364
        %v3366 = vrot.slane %v3365, 2
        %v3367 = vmax.f32 %v3365, %v3366
        %v3368 = vrot.slane %v3367, 1
        %v3369 = vmax.f32 %v3367, %v3368
        %v3370 = vsel %vm3117, %v2673, -inf
        %v3371 = vsel %vm3117, %v2707, -inf
        %v3372 = vmax.f32 %v3370, %v3371
        %v3373 = vrot.slane %v3372, 4
        %v3374 = vmax.f32 %v3372, %v3373
        %v3375 = vrot.slane %v3374, 2
        %v3376 = vmax.f32 %v3374, %v3375
        %v3377 = vrot.slane %v3376, 1
        %v3378 = vmax.f32 %v3376, %v3377
        %v3379 = vsel %vm3117, %v2681, -inf
        %v3380 = vsel %vm3117, %v2715, -inf
        %v3381 = vmax.f32 %v3379, %v3380
        %v3382 = vrot.slane %v3381, 4
        %v3383 = vmax.f32 %v3381, %v3382
        %v3384 = vrot.slane %v3383, 2
        %v3385 = vmax.f32 %v3383, %v3384
        %v3386 = vrot.slane %v3385, 1
        %v3387 = vmax.f32 %v3385, %v3386
        %v3388 = vsel %vm3117, %v2680, -inf
        %v3389 = vsel %vm3117, %v2714, -inf
        %v3390 = vmax.f32 %v3388, %v3389
        %v3391 = vrot.slane %v3390, 4
        %v3392 = vmax.f32 %v3390, %v3391
        %v3393 = vrot.slane %v3392, 2
        %v3394 = vmax.f32 %v3392, %v3393
        %v3395 = vrot.slane %v3394, 1
        %v3396 = vmax.f32 %v3394, %v3395
        %v3397 = vsel %vm3117, %v2682, -inf
        %v3398 = vsel %vm3117, %v2716, -inf
        %v3399 = vmax.f32 %v3397, %v3398
        %v3400 = vrot.slane %v3399, 4
        %v3401 = vmax.f32 %v3399, %v3400
        %v3402 = vrot.slane %v3401, 2
        %v3403 = vmax.f32 %v3401, %v3402
        %v3404 = vrot.slane %v3403, 1
        %v3405 = vmax.f32 %v3403, %v3404
        %v3406 = vsel %vm3117, %v2724, -inf
        %v3407 = vsel %vm3117, %v2758, -inf
        %v3408 = vmax.f32 %v3406, %v3407
        %v3409 = vrot.slane %v3408, 4
        %v3410 = vmax.f32 %v3408, %v3409
        %v3411 = vrot.slane %v3410, 2
        %v3412 = vmax.f32 %v3410, %v3411
        %v3413 = vrot.slane %v3412, 1
        %v3414 = vmax.f32 %v3412, %v3413
        %v3415 = vsel %vm3117, %v2732, -inf
        %v3416 = vsel %vm3117, %v2766, -inf
        %v3417 = vmax.f32 %v3415, %v3416
        %v3418 = vrot.slane %v3417, 4
        %v3419 = vmax.f32 %v3417, %v3418
        %v3420 = vrot.slane %v3419, 2
        %v3421 = vmax.f32 %v3419, %v3420
        %v3422 = vrot.slane %v3421, 1
        %v3423 = vmax.f32 %v3421, %v3422
        %v3424 = vsel %vm3117, %v2731, -inf
        %v3425 = vsel %vm3117, %v2765, -inf
        %v3426 = vmax.f32 %v3424, %v3425
        %v3427 = vrot.slane %v3426, 4
        %v3428 = vmax.f32 %v3426, %v3427
        %v3429 = vrot.slane %v3428, 2
        %v3430 = vmax.f32 %v3428, %v3429
        %v3431 = vrot.slane %v3430, 1
        %v3432 = vmax.f32 %v3430, %v3431
        %v3433 = vsel %vm3117, %v2733, -inf
        %v3434 = vsel %vm3117, %v2767, -inf
        %v3435 = vmax.f32 %v3433, %v3434
        %v3436 = vrot.slane %v3435, 4
        %v3437 = vmax.f32 %v3435, %v3436
        %v3438 = vrot.slane %v3437, 2
        %v3439 = vmax.f32 %v3437, %v3438
        %v3440 = vrot.slane %v3439, 1
        %v3441 = vmax.f32 %v3439, %v3440
        %v3442 = vsel %vm3117, %v2741, -inf
        %v3443 = vsel %vm3117, %v2775, -inf
        %v3444 = vmax.f32 %v3442, %v3443
        %v3445 = vrot.slane %v3444, 4
        %v3446 = vmax.f32 %v3444, %v3445
        %v3447 = vrot.slane %v3446, 2
        %v3448 = vmax.f32 %v3446, %v3447
        %v3449 = vrot.slane %v3448, 1
        %v3450 = vmax.f32 %v3448, %v3449
        %v3451 = vsel %vm3117, %v2749, -inf
        %v3452 = vsel %vm3117, %v2783, -inf
        %v3453 = vmax.f32 %v3451, %v3452
        %v3454 = vrot.slane %v3453, 4
        %v3455 = vmax.f32 %v3453, %v3454
        %v3456 = vrot.slane %v3455, 2
        %v3457 = vmax.f32 %v3455, %v3456
        %v3458 = vrot.slane %v3457, 1
        %v3459 = vmax.f32 %v3457, %v3458
        %v3460 = vsel %vm3117, %v2748, -inf
        %v3461 = vsel %vm3117, %v2782, -inf
        %v3462 = vmax.f32 %v3460, %v3461
        %v3463 = vrot.slane %v3462, 4
        %v3464 = vmax.f32 %v3462, %v3463
        %v3465 = vrot.slane %v3464, 2
        %v3466 = vmax.f32 %v3464, %v3465
        %v3467 = vrot.slane %v3466, 1
        %v3468 = vmax.f32 %v3466, %v3467
        %v3469 = vsel %vm3117, %v2750, -inf
        %v3470 = vsel %vm3117, %v2784, -inf
        %v3471 = vmax.f32 %v3469, %v3470
        %v3472 = vrot.slane %v3471, 4
        %v3473 = vmax.f32 %v3471, %v3472
        %v3474 = vrot.slane %v3473, 2
        %v3475 = vmax.f32 %v3473, %v3474
        %v3476 = vrot.slane %v3475, 1
        %v3477 = vmax.f32 %v3475, %v3476
        %v3478 = vsel %vm3117, %v2792, -inf
        %v3479 = vsel %vm3117, %v2826, -inf
        %v3480 = vmax.f32 %v3478, %v3479
        %v3481 = vrot.slane %v3480, 4
        %v3482 = vmax.f32 %v3480, %v3481
        %v3483 = vrot.slane %v3482, 2
        %v3484 = vmax.f32 %v3482, %v3483
        %v3485 = vrot.slane %v3484, 1
        %v3486 = vmax.f32 %v3484, %v3485
        %v3487 = vsel %vm3117, %v2800, -inf
        %v3488 = vsel %vm3117, %v2834, -inf
        %v3489 = vmax.f32 %v3487, %v3488
        %v3490 = vrot.slane %v3489, 4
        %v3491 = vmax.f32 %v3489, %v3490
        %v3492 = vrot.slane %v3491, 2
        %v3493 = vmax.f32 %v3491, %v3492
        %v3494 = vrot.slane %v3493, 1
        %v3495 = vmax.f32 %v3493, %v3494
        %v3496 = vsel %vm3117, %v2799, -inf
        %v3497 = vsel %vm3117, %v2833, -inf
        %v3498 = vmax.f32 %v3496, %v3497
        %v3499 = vrot.slane %v3498, 4
        %v3500 = vmax.f32 %v3498, %v3499
        %v3501 = vrot.slane %v3500, 2
        %v3502 = vmax.f32 %v3500, %v3501
        %v3503 = vrot.slane %v3502, 1
        %v3504 = vmax.f32 %v3502, %v3503
        %v3505 = vsel %vm3117, %v2801, -inf
        %v3506 = vsel %vm3117, %v2835, -inf
        %v3507 = vmax.f32 %v3505, %v3506
        %v3508 = vrot.slane %v3507, 4
        %v3509 = vmax.f32 %v3507, %v3508
        %v3510 = vrot.slane %v3509, 2
        %v3511 = vmax.f32 %v3509, %v3510
        %v3512 = vrot.slane %v3511, 1
        %v3513 = vmax.f32 %v3511, %v3512
        %v3514 = vsel %vm3117, %v2809, -inf
        %v3515 = vsel %vm3117, %v2843, -inf
        %v3516 = vmax.f32 %v3514, %v3515
        %v3517 = vrot.slane %v3516, 4
        %v3518 = vmax.f32 %v3516, %v3517
        %v3519 = vrot.slane %v3518, 2
        %v3520 = vmax.f32 %v3518, %v3519
        %v3521 = vrot.slane %v3520, 1
        %v3522 = vmax.f32 %v3520, %v3521
        %v3523 = vsel %vm3117, %v2817, -inf
        %v3524 = vsel %vm3117, %v2851, -inf
        %v3525 = vmax.f32 %v3523, %v3524
        %v3526 = vrot.slane %v3525, 4
        %v3527 = vmax.f32 %v3525, %v3526
        %v3528 = vrot.slane %v3527, 2
        %v3529 = vmax.f32 %v3527, %v3528
        %v3530 = vrot.slane %v3529, 1
        %v3531 = vmax.f32 %v3529, %v3530
        %v3532 = vsel %vm3117, %v2816, -inf
        %v3533 = vsel %vm3117, %v2850, -inf
        %v3534 = vmax.f32 %v3532, %v3533
        %v3535 = vrot.slane %v3534, 4
        %v3536 = vmax.f32 %v3534, %v3535
        %v3537 = vrot.slane %v3536, 2
        %v3538 = vmax.f32 %v3536, %v3537
        %v3539 = vrot.slane %v3538, 1
        %v3540 = vmax.f32 %v3538, %v3539
        %v3541 = vsel %vm3117, %v2818, -inf
        %v3542 = vsel %vm3117, %v2852, -inf
        %v3543 = vmax.f32 %v3541, %v3542
        %v3544 = vrot.slane %v3543, 4
        %v3545 = vmax.f32 %v3543, %v3544
        %v3546 = vrot.slane %v3545, 2
        %v3547 = vmax.f32 %v3545, %v3546
        %v3548 = vrot.slane %v3547, 1
        %v3549 = vmax.f32 %v3547, %v3548
        %v3550 = vsel %vm3117, %v2860, -inf
        %v3551 = vsel %vm3117, %v2894, -inf
        %v3552 = vmax.f32 %v3550, %v3551
        %v3553 = vrot.slane %v3552, 4
        %v3554 = vmax.f32 %v3552, %v3553
        %v3555 = vrot.slane %v3554, 2
        %v3556 = vmax.f32 %v3554, %v3555
        %v3557 = vrot.slane %v3556, 1
        %v3558 = vmax.f32 %v3556, %v3557
        %v3559 = vsel %vm3117, %v2868, -inf
        %v3560 = vsel %vm3117, %v2902, -inf
        %v3561 = vmax.f32 %v3559, %v3560
        %v3562 = vrot.slane %v3561, 4
        %v3563 = vmax.f32 %v3561, %v3562
        %v3564 = vrot.slane %v3563, 2
        %v3565 = vmax.f32 %v3563, %v3564
        %v3566 = vrot.slane %v3565, 1
        %v3567 = vmax.f32 %v3565, %v3566
        %v3568 = vsel %vm3117, %v2867, -inf
        %v3569 = vsel %vm3117, %v2901, -inf
        %v3570 = vmax.f32 %v3568, %v3569
        %v3571 = vrot.slane %v3570, 4
        %v3572 = vmax.f32 %v3570, %v3571
        %v3573 = vrot.slane %v3572, 2
        %v3574 = vmax.f32 %v3572, %v3573
        %v3575 = vrot.slane %v3574, 1
        %v3576 = vmax.f32 %v3574, %v3575
        %v3577 = vsel %vm3117, %v2869, -inf
        %v3578 = vsel %vm3117, %v2903, -inf
        %v3579 = vmax.f32 %v3577, %v3578
        %v3580 = vrot.slane %v3579, 4
        %v3581 = vmax.f32 %v3579, %v3580
        %v3582 = vrot.slane %v3581, 2
        %v3583 = vmax.f32 %v3581, %v3582
        %v3584 = vrot.slane %v3583, 1
        %v3585 = vmax.f32 %v3583, %v3584
        %v3586 = vsel %vm3117, %v2877, -inf
        %v3587 = vsel %vm3117, %v2911, -inf
        %v3588 = vmax.f32 %v3586, %v3587
        %v3589 = vrot.slane %v3588, 4
        %v3590 = vmax.f32 %v3588, %v3589
        %v3591 = vrot.slane %v3590, 2
        %v3592 = vmax.f32 %v3590, %v3591
        %v3593 = vrot.slane %v3592, 1
        %v3594 = vmax.f32 %v3592, %v3593
        %v3595 = vsel %vm3117, %v2885, -inf
        %v3596 = vsel %vm3117, %v2919, -inf
        %v3597 = vmax.f32 %v3595, %v3596
        %v3598 = vrot.slane %v3597, 4
        %v3599 = vmax.f32 %v3597, %v3598
        %v3600 = vrot.slane %v3599, 2
        %v3601 = vmax.f32 %v3599, %v3600
        %v3602 = vrot.slane %v3601, 1
        %v3603 = vmax.f32 %v3601, %v3602
        %v3604 = vsel %vm3117, %v2884, -inf
        %v3605 = vsel %vm3117, %v2918, -inf
        %v3606 = vmax.f32 %v3604, %v3605
        %v3607 = vrot.slane %v3606, 4
        %v3608 = vmax.f32 %v3606, %v3607
        %v3609 = vrot.slane %v3608, 2
        %v3610 = vmax.f32 %v3608, %v3609
        %v3611 = vrot.slane %v3610, 1
        %v3612 = vmax.f32 %v3610, %v3611
        %v3613 = vsel %vm3117, %v2886, -inf
        %v3614 = vsel %vm3117, %v2920, -inf
        %v3615 = vmax.f32 %v3613, %v3614
        %v3616 = vrot.slane %v3615, 4
        %v3617 = vmax.f32 %v3615, %v3616
        %v3618 = vrot.slane %v3617, 2
        %v3619 = vmax.f32 %v3617, %v3618
        %v3620 = vrot.slane %v3619, 1
        %v3621 = vmax.f32 %v3619, %v3620
        %v3622 = vsel %vm3117, %v2928, -inf
        %v3623 = vsel %vm3117, %v2962, -inf
        %v3624 = vmax.f32 %v3622, %v3623
        %v3625 = vrot.slane %v3624, 4
        %v3626 = vmax.f32 %v3624, %v3625
        %v3627 = vrot.slane %v3626, 2
        %v3628 = vmax.f32 %v3626, %v3627
        %v3629 = vrot.slane %v3628, 1
        %v3630 = vmax.f32 %v3628, %v3629
        %v3631 = vsel %vm3117, %v2936, -inf
        %v3632 = vsel %vm3117, %v2970, -inf
        %v3633 = vmax.f32 %v3631, %v3632
        %v3634 = vrot.slane %v3633, 4
        %v3635 = vmax.f32 %v3633, %v3634
        %v3636 = vrot.slane %v3635, 2
        %v3637 = vmax.f32 %v3635, %v3636
        %v3638 = vrot.slane %v3637, 1
        %v3639 = vmax.f32 %v3637, %v3638
        %v3640 = vsel %vm3117, %v2935, -inf
        %v3641 = vsel %vm3117, %v2969, -inf
        %v3642 = vmax.f32 %v3640, %v3641
        %v3643 = vrot.slane %v3642, 4
        %v3644 = vmax.f32 %v3642, %v3643
        %v3645 = vrot.slane %v3644, 2
        %v3646 = vmax.f32 %v3644, %v3645
        %v3647 = vrot.slane %v3646, 1
        %v3648 = vmax.f32 %v3646, %v3647
        %v3649 = vsel %vm3117, %v2937, -inf
        %v3650 = vsel %vm3117, %v2971, -inf
        %v3651 = vmax.f32 %v3649, %v3650
        %v3652 = vrot.slane %v3651, 4
        %v3653 = vmax.f32 %v3651, %v3652
        %v3654 = vrot.slane %v3653, 2
        %v3655 = vmax.f32 %v3653, %v3654
        %v3656 = vrot.slane %v3655, 1
        %v3657 = vmax.f32 %v3655, %v3656
        %v3658 = vsel %vm3117, %v2945, -inf
        %v3659 = vsel %vm3117, %v2979, -inf
        %v3660 = vmax.f32 %v3658, %v3659
        %v3661 = vrot.slane %v3660, 4
        %v3662 = vmax.f32 %v3660, %v3661
        %v3663 = vrot.slane %v3662, 2
        %v3664 = vmax.f32 %v3662, %v3663
        %v3665 = vrot.slane %v3664, 1
        %v3666 = vmax.f32 %v3664, %v3665
        %v3667 = vsel %vm3117, %v2953, -inf
        %v3668 = vsel %vm3117, %v2987, -inf
        %v3669 = vmax.f32 %v3667, %v3668
        %v3670 = vrot.slane %v3669, 4
        %v3671 = vmax.f32 %v3669, %v3670
        %v3672 = vrot.slane %v3671, 2
        %v3673 = vmax.f32 %v3671, %v3672
        %v3674 = vrot.slane %v3673, 1
        %v3675 = vmax.f32 %v3673, %v3674
        %v3676 = vsel %vm3117, %v2952, -inf
        %v3677 = vsel %vm3117, %v2986, -inf
        %v3678 = vmax.f32 %v3676, %v3677
        %v3679 = vrot.slane %v3678, 4
        %v3680 = vmax.f32 %v3678, %v3679
        %v3681 = vrot.slane %v3680, 2
        %v3682 = vmax.f32 %v3680, %v3681
        %v3683 = vrot.slane %v3682, 1
        %v3684 = vmax.f32 %v3682, %v3683
        %v3685 = vsel %vm3117, %v2954, -inf
        %v3686 = vsel %vm3117, %v2988, -inf
        %v3687 = vmax.f32 %v3685, %v3686
        %v3688 = vrot.slane %v3687, 4
        %v3689 = vmax.f32 %v3687, %v3688
        %v3690 = vrot.slane %v3689, 2
        %v3691 = vmax.f32 %v3689, %v3690
        %v3692 = vrot.slane %v3691, 1
        %v3693 = vmax.f32 %v3691, %v3692
        // Predicated region
        $region69: #{simple_cnn_forward.1} parent=63 // pred_check
          %p3694 = pneg %p407
        $region70: #{simple_cnn_forward.1} parent=63 // pred_check_branch
          %3696 = sbr.rel (%p3694) target = $region72
        $region71: #{simple_cnn_forward.1} parent=63 // pred_region
          %vm3697 = vcmask 261120
          %3698 = vst.msk [vmem:[#allocation3] sm:$0xff] %vm3697, 0.0
          %3699 = vst.msk [vmem:[#allocation3 + $0x8] sm:$0xff] %vm3697, 0.0
          %3700 = vst.msk [vmem:[#allocation3 + $0x10] sm:$0xff] %vm3697, 0.0
          %3701 = vst.msk [vmem:[#allocation3 + $0x18] sm:$0xff] %vm3697, 0.0
          %3702 = vst.msk [vmem:[#allocation3 + $0x20] sm:$0xff] %vm3697, 0.0
          %3703 = vst.msk [vmem:[#allocation3 + $0x28] sm:$0xff] %vm3697, 0.0
          %3704 = vst.msk [vmem:[#allocation3 + $0x30] sm:$0xff] %vm3697, 0.0
          %3705 = vst.msk [vmem:[#allocation3 + $0x38] sm:$0xff] %vm3697, 0.0
          %3706 = vst.msk [vmem:[#allocation3 + $0x40] sm:$0xff] %vm3697, 0.0
          %3707 = vst.msk [vmem:[#allocation3 + $0x48] sm:$0xff] %vm3697, 0.0
          %3708 = vst.msk [vmem:[#allocation3 + $0x50] sm:$0xff] %vm3697, 0.0
          %3709 = vst.msk [vmem:[#allocation3 + $0x58] sm:$0xff] %vm3697, 0.0
          %3710 = vst.msk [vmem:[#allocation3 + $0x60] sm:$0xff] %vm3697, 0.0
          %3711 = vst.msk [vmem:[#allocation3 + $0x68] sm:$0xff] %vm3697, 0.0
          %3712 = vst.msk [vmem:[#allocation3 + $0x70] sm:$0xff] %vm3697, 0.0
          %3713 = vst.msk [vmem:[#allocation3 + $0x78] sm:$0xff] %vm3697, 0.0
          %3714 = vst.msk [vmem:[#allocation3 + $0x80] sm:$0xff] %vm3697, 0.0
          %3715 = vst.msk [vmem:[#allocation3 + $0x88] sm:$0xff] %vm3697, 0.0
          %3716 = vst.msk [vmem:[#allocation3 + $0x90] sm:$0xff] %vm3697, 0.0
          %3717 = vst.msk [vmem:[#allocation3 + $0x98] sm:$0xff] %vm3697, 0.0
          %3718 = vst.msk [vmem:[#allocation3 + $0xa0] sm:$0xff] %vm3697, 0.0
          %3719 = vst.msk [vmem:[#allocation3 + $0xa8] sm:$0xff] %vm3697, 0.0
          %3720 = vst.msk [vmem:[#allocation3 + $0xb0] sm:$0xff] %vm3697, 0.0
          %3721 = vst.msk [vmem:[#allocation3 + $0xb8] sm:$0xff] %vm3697, 0.0
          %3722 = vst.msk [vmem:[#allocation3 + $0xc0] sm:$0xff] %vm3697, 0.0
          %3723 = vst.msk [vmem:[#allocation3 + $0xc8] sm:$0xff] %vm3697, 0.0
          %3724 = vst.msk [vmem:[#allocation3 + $0xd0] sm:$0xff] %vm3697, 0.0
          %3725 = vst.msk [vmem:[#allocation3 + $0xd8] sm:$0xff] %vm3697, 0.0
          %3726 = vst.msk [vmem:[#allocation3 + $0xe0] sm:$0xff] %vm3697, 0.0
          %3727 = vst.msk [vmem:[#allocation3 + $0xe8] sm:$0xff] %vm3697, 0.0
        $region72: #{simple_cnn_forward.1} parent=63 // pred_fallthru
          _
        %vm3792 = vcmask 1041409
        %v3793 = vsel %vm3792, %v3135, %v3126
        %vm3794 = vcmask 1042434
        %v3795 = vsel %vm3794, %v3144, %v3793
        %vm3796 = vcmask 1043459
        %v3797 = vsel %vm3796, %v3153, %v3795
        %vm3798 = vcmask 1044484
        %v3799 = vsel %vm3798, %v3162, %v3797
        %vm3800 = vcmask 1045509
        %v3801 = vsel %vm3800, %v3171, %v3799
        %vm3802 = vcmask 1046534
        %v3803 = vsel %vm3802, %v3180, %v3801
        %vm3804 = vcmask 1047559
        %v3805 = vsel %vm3804, %v3189, %v3803
        %v3806 = vsel %vm3792, %v3207, %v3198
        %v3807 = vsel %vm3794, %v3216, %v3806
        %v3808 = vsel %vm3796, %v3225, %v3807
        %v3809 = vsel %vm3798, %v3234, %v3808
        %v3810 = vsel %vm3800, %v3243, %v3809
        %v3811 = vsel %vm3802, %v3252, %v3810
        %v3812 = vsel %vm3804, %v3261, %v3811
        %v3813 = vsel %vm3792, %v3279, %v3270
        %v3814 = vsel %vm3794, %v3288, %v3813
        %v3815 = vsel %vm3796, %v3297, %v3814
        %v3816 = vsel %vm3798, %v3306, %v3815
        %v3817 = vsel %vm3800, %v3315, %v3816
        %v3818 = vsel %vm3802, %v3324, %v3817
        %v3819 = vsel %vm3804, %v3333, %v3818
        %v3820 = vsel %vm3792, %v3351, %v3342
        %v3821 = vsel %vm3794, %v3360, %v3820
        %v3822 = vsel %vm3796, %v3369, %v3821
        %v3823 = vsel %vm3798, %v3378, %v3822
        %v3824 = vsel %vm3800, %v3387, %v3823
        %v3825 = vsel %vm3802, %v3396, %v3824
        %v3826 = vsel %vm3804, %v3405, %v3825
        %v3827 = vsel %vm3792, %v3423, %v3414
        %v3828 = vsel %vm3794, %v3432, %v3827
        %v3829 = vsel %vm3796, %v3441, %v3828
        %v3830 = vsel %vm3798, %v3450, %v3829
        %v3831 = vsel %vm3800, %v3459, %v3830
        %v3832 = vsel %vm3802, %v3468, %v3831
        %v3833 = vsel %vm3804, %v3477, %v3832
        %v3834 = vsel %vm3792, %v3495, %v3486
        %v3835 = vsel %vm3794, %v3504, %v3834
        %v3836 = vsel %vm3796, %v3513, %v3835
        %v3837 = vsel %vm3798, %v3522, %v3836
        %v3838 = vsel %vm3800, %v3531, %v3837
        %v3839 = vsel %vm3802, %v3540, %v3838
        %v3840 = vsel %vm3804, %v3549, %v3839
        %v3841 = vsel %vm3792, %v3567, %v3558
        %v3842 = vsel %vm3794, %v3576, %v3841
        %v3843 = vsel %vm3796, %v3585, %v3842
        %v3844 = vsel %vm3798, %v3594, %v3843
        %v3845 = vsel %vm3800, %v3603, %v3844
        %v3846 = vsel %vm3802, %v3612, %v3845
        %v3847 = vsel %vm3804, %v3621, %v3846
        %v3848 = vsel %vm3792, %v3639, %v3630
        %v3849 = vsel %vm3794, %v3648, %v3848
        %v3850 = vsel %vm3796, %v3657, %v3849
        %v3851 = vsel %vm3798, %v3666, %v3850
        %v3852 = vsel %vm3800, %v3675, %v3851
        %v3853 = vsel %vm3802, %v3684, %v3852
        %v3854 = vsel %vm3804, %v3693, %v3853
        %s3863 = scalar_lea.vmem [#allocation3], 24
        %vm3864 = vcmask 261120
        %3865 = vst.msk [vmem:[%s3863 + $0x8] sm:$0xff] %vm3864, %v3805
        %3866 = vst.msk [vmem:[%s3863 + $0x20] sm:$0xff] %vm3864, %v3812
        %3867 = vst.msk [vmem:[%s3863 + $0x38] sm:$0xff] %vm3864, %v3819
        %3868 = vst.msk [vmem:[%s3863 + $0x50] sm:$0xff] %vm3864, %v3826
        %3869 = vst.msk [vmem:[%s3863 + $0x68] sm:$0xff] %vm3864, %v3833
        %3870 = vst.msk [vmem:[%s3863 + $0x80] sm:$0xff] %vm3864, %v3840
        %3871 = vst.msk [vmem:[%s3863 + $0x98] sm:$0xff] %vm3864, %v3847
        %3872 = vst.msk [vmem:[%s3863 + $0xb0] sm:$0xff] %vm3864, %v3854
        %v3873 = vld [vmem:[#allocation3 + $0x7] sm:$0xff]
        %v3874 = vld [vmem:[#allocation3 + $0x1f] sm:$0xff]
        %v3875 = vld [vmem:[#allocation3 + $0x37] sm:$0xff]
        %v3876 = vld [vmem:[#allocation3 + $0x4f] sm:$0xff]
        %v3877 = vld [vmem:[#allocation3 + $0x67] sm:$0xff]
        %v3878 = vld [vmem:[#allocation3 + $0x7f] sm:$0xff]
        %v3879 = vld [vmem:[#allocation3 + $0x97] sm:$0xff]
        %v3880 = vld [vmem:[#allocation3 + $0xaf] sm:$0xff]
        %v3881 = vld [vmem:[#allocation3 + $0x8] sm:$0xff]
        %v3882 = vld [vmem:[#allocation3 + $0x20] sm:$0xff]
        %v3883 = vld [vmem:[#allocation3 + $0x38] sm:$0xff]
        %v3884 = vld [vmem:[#allocation3 + $0x50] sm:$0xff]
        %v3885 = vld [vmem:[#allocation3 + $0x68] sm:$0xff]
        %v3886 = vld [vmem:[#allocation3 + $0x80] sm:$0xff]
        %v3887 = vld [vmem:[#allocation3 + $0x98] sm:$0xff]
        %v3888 = vld [vmem:[#allocation3 + $0xb0] sm:$0xff]
        %v3889 = vld [vmem:[#allocation3 + $0x9] sm:$0xff]
        %v3890 = vld [vmem:[#allocation3 + $0x21] sm:$0xff]
        %v3891 = vld [vmem:[#allocation3 + $0x39] sm:$0xff]
        %v3892 = vld [vmem:[#allocation3 + $0x51] sm:$0xff]
        %v3893 = vld [vmem:[#allocation3 + $0x69] sm:$0xff]
        %v3894 = vld [vmem:[#allocation3 + $0x81] sm:$0xff]
        %v3895 = vld [vmem:[#allocation3 + $0x99] sm:$0xff]
        %v3896 = vld [vmem:[#allocation3 + $0xb1] sm:$0xff]
        %v3897 = vld [vmem:[%s3863 + $0x7] sm:$0xff]
        %v3898 = vld [vmem:[%s3863 + $0x1f] sm:$0xff]
        %v3899 = vld [vmem:[%s3863 + $0x37] sm:$0xff]
        %v3900 = vld [vmem:[%s3863 + $0x4f] sm:$0xff]
        %v3901 = vld [vmem:[%s3863 + $0x67] sm:$0xff]
        %v3902 = vld [vmem:[%s3863 + $0x7f] sm:$0xff]
        %v3903 = vld [vmem:[%s3863 + $0x97] sm:$0xff]
        %v3904 = vld [vmem:[%s3863 + $0xaf] sm:$0xff]
        %v3905 = vld [vmem:[%s3863 + $0x8] sm:$0xff]
        %v3906 = vld [vmem:[%s3863 + $0x20] sm:$0xff]
        %v3907 = vld [vmem:[%s3863 + $0x38] sm:$0xff]
        %v3908 = vld [vmem:[%s3863 + $0x50] sm:$0xff]
        %v3909 = vld [vmem:[%s3863 + $0x68] sm:$0xff]
        %v3910 = vld [vmem:[%s3863 + $0x80] sm:$0xff]
        %v3911 = vld [vmem:[%s3863 + $0x98] sm:$0xff]
        %v3912 = vld [vmem:[%s3863 + $0xb0] sm:$0xff]
        %v3913 = vld [vmem:[%s3863 + $0x9] sm:$0xff]
        %v3914 = vld [vmem:[%s3863 + $0x21] sm:$0xff]
        %v3915 = vld [vmem:[%s3863 + $0x39] sm:$0xff]
        %v3916 = vld [vmem:[%s3863 + $0x51] sm:$0xff]
        %v3917 = vld [vmem:[%s3863 + $0x69] sm:$0xff]
        %v3918 = vld [vmem:[%s3863 + $0x81] sm:$0xff]
        %v3919 = vld [vmem:[%s3863 + $0x99] sm:$0xff]
        %v3920 = vld [vmem:[%s3863 + $0xb1] sm:$0xff]
        %s3921 = scalar_lea.vmem [#allocation3], 48
        %v3922 = vld [vmem:[%s3921 + $0x7] sm:$0xff]
        %v3923 = vld [vmem:[%s3921 + $0x1f] sm:$0xff]
        %v3924 = vld [vmem:[%s3921 + $0x37] sm:$0xff]
        %v3925 = vld [vmem:[%s3921 + $0x4f] sm:$0xff]
        %v3926 = vld [vmem:[%s3921 + $0x67] sm:$0xff]
        %v3927 = vld [vmem:[%s3921 + $0x7f] sm:$0xff]
        %v3928 = vld [vmem:[%s3921 + $0x97] sm:$0xff]
        %v3929 = vld [vmem:[%s3921 + $0xaf] sm:$0xff]
        %v3930 = vld [vmem:[%s3921 + $0x8] sm:$0xff]
        %v3931 = vld [vmem:[%s3921 + $0x20] sm:$0xff]
        %v3932 = vld [vmem:[%s3921 + $0x38] sm:$0xff]
        %v3933 = vld [vmem:[%s3921 + $0x50] sm:$0xff]
        %v3934 = vld [vmem:[%s3921 + $0x68] sm:$0xff]
        %v3935 = vld [vmem:[%s3921 + $0x80] sm:$0xff]
        %v3936 = vld [vmem:[%s3921 + $0x98] sm:$0xff]
        %v3937 = vld [vmem:[%s3921 + $0xb0] sm:$0xff]
        %v3938 = vld [vmem:[%s3921 + $0x9] sm:$0xff]
        %v3939 = vld [vmem:[%s3921 + $0x21] sm:$0xff]
        %v3940 = vld [vmem:[%s3921 + $0x39] sm:$0xff]
        %v3941 = vld [vmem:[%s3921 + $0x51] sm:$0xff]
        %v3942 = vld [vmem:[%s3921 + $0x69] sm:$0xff]
        %v3943 = vld [vmem:[%s3921 + $0x81] sm:$0xff]
        %v3944 = vld [vmem:[%s3921 + $0x99] sm:$0xff]
        %v3945 = vld [vmem:[%s3921 + $0xb1] sm:$0xff]
        %3954 = vrot.lane.b32.xlu0 %v3881, 32
        %v3955 = vpop.permute.xlu0 %3954
        %3956 = vrot.lane.b32.xlu0 %v3882, 32
        %v3957 = vpop.permute.xlu0 %3956
        %3958 = vrot.lane.b32.xlu0 %v3883, 32
        %v3959 = vpop.permute.xlu0 %3958
        %3960 = vrot.lane.b32.xlu0 %v3884, 32
        %v3961 = vpop.permute.xlu0 %3960
        %3962 = vrot.lane.b32.xlu0 %v3885, 32
        %v3963 = vpop.permute.xlu0 %3962
        %3964 = vrot.lane.b32.xlu0 %v3886, 32
        %v3965 = vpop.permute.xlu0 %3964
        %3966 = vrot.lane.b32.xlu0 %v3887, 32
        %v3967 = vpop.permute.xlu0 %3966
        %3968 = vrot.lane.b32.xlu0 %v3888, 32
        %v3969 = vpop.permute.xlu0 %3968
        %3986 = vrot.lane.b32.xlu0 %v3889, 64
        %v3987 = vpop.permute.xlu0 %3986
        %3988 = vrot.lane.b32.xlu0 %v3890, 64
        %v3989 = vpop.permute.xlu0 %3988
        %3990 = vrot.lane.b32.xlu0 %v3891, 64
        %v3991 = vpop.permute.xlu0 %3990
        %3992 = vrot.lane.b32.xlu0 %v3892, 64
        %v3993 = vpop.permute.xlu0 %3992
        %3994 = vrot.lane.b32.xlu0 %v3893, 64
        %v3995 = vpop.permute.xlu0 %3994
        %3996 = vrot.lane.b32.xlu0 %v3894, 64
        %v3997 = vpop.permute.xlu0 %3996
        %3998 = vrot.lane.b32.xlu0 %v3895, 64
        %v3999 = vpop.permute.xlu0 %3998
        %4000 = vrot.lane.b32.xlu0 %v3896, 64
        %v4001 = vpop.permute.xlu0 %4000
        %4018 = vrot.lane.b32.xlu0 %v3897, 96
        %v4019 = vpop.permute.xlu0 %4018
        %4020 = vrot.lane.b32.xlu0 %v3898, 96
        %v4021 = vpop.permute.xlu0 %4020
        %4022 = vrot.lane.b32.xlu0 %v3899, 96
        %v4023 = vpop.permute.xlu0 %4022
        %4024 = vrot.lane.b32.xlu0 %v3900, 96
        %v4025 = vpop.permute.xlu0 %4024
        %4026 = vrot.lane.b32.xlu0 %v3901, 96
        %v4027 = vpop.permute.xlu0 %4026
        %4028 = vrot.lane.b32.xlu0 %v3902, 96
        %v4029 = vpop.permute.xlu0 %4028
        %4030 = vrot.lane.b32.xlu0 %v3903, 96
        %v4031 = vpop.permute.xlu0 %4030
        %4032 = vrot.lane.b32.xlu0 %v3904, 96
        %v4033 = vpop.permute.xlu0 %4032
        %4050 = vrot.lane.b32.xlu0 %v3913, 32
        %v4051 = vpop.permute.xlu0 %4050
        %4052 = vrot.lane.b32.xlu0 %v3914, 32
        %v4053 = vpop.permute.xlu0 %4052
        %4054 = vrot.lane.b32.xlu0 %v3915, 32
        %v4055 = vpop.permute.xlu0 %4054
        %4056 = vrot.lane.b32.xlu0 %v3916, 32
        %v4057 = vpop.permute.xlu0 %4056
        %4058 = vrot.lane.b32.xlu0 %v3917, 32
        %v4059 = vpop.permute.xlu0 %4058
        %4060 = vrot.lane.b32.xlu0 %v3918, 32
        %v4061 = vpop.permute.xlu0 %4060
        %4062 = vrot.lane.b32.xlu0 %v3919, 32
        %v4063 = vpop.permute.xlu0 %4062
        %4064 = vrot.lane.b32.xlu0 %v3920, 32
        %v4065 = vpop.permute.xlu0 %4064
        %4082 = vrot.lane.b32.xlu0 %v3922, 64
        %v4083 = vpop.permute.xlu0 %4082
        %4084 = vrot.lane.b32.xlu0 %v3923, 64
        %v4085 = vpop.permute.xlu0 %4084
        %4086 = vrot.lane.b32.xlu0 %v3924, 64
        %v4087 = vpop.permute.xlu0 %4086
        %4088 = vrot.lane.b32.xlu0 %v3925, 64
        %v4089 = vpop.permute.xlu0 %4088
        %4090 = vrot.lane.b32.xlu0 %v3926, 64
        %v4091 = vpop.permute.xlu0 %4090
        %4092 = vrot.lane.b32.xlu0 %v3927, 64
        %v4093 = vpop.permute.xlu0 %4092
        %4094 = vrot.lane.b32.xlu0 %v3928, 64
        %v4095 = vpop.permute.xlu0 %4094
        %4096 = vrot.lane.b32.xlu0 %v3929, 64
        %v4097 = vpop.permute.xlu0 %4096
        %4114 = vrot.lane.b32.xlu0 %v3930, 96
        %v4115 = vpop.permute.xlu0 %4114
        %4116 = vrot.lane.b32.xlu0 %v3931, 96
        %v4117 = vpop.permute.xlu0 %4116
        %4118 = vrot.lane.b32.xlu0 %v3932, 96
        %v4119 = vpop.permute.xlu0 %4118
        %4120 = vrot.lane.b32.xlu0 %v3933, 96
        %v4121 = vpop.permute.xlu0 %4120
        %4122 = vrot.lane.b32.xlu0 %v3934, 96
        %v4123 = vpop.permute.xlu0 %4122
        %4124 = vrot.lane.b32.xlu0 %v3935, 96
        %v4125 = vpop.permute.xlu0 %4124
        %4126 = vrot.lane.b32.xlu0 %v3936, 96
        %v4127 = vpop.permute.xlu0 %4126
        %4128 = vrot.lane.b32.xlu0 %v3937, 96
        %v4129 = vpop.permute.xlu0 %4128
        %v4138 = vsel %vm3864, %v3873, %v3955
        %v4139 = vsel %vm3864, %v3874, %v3957
        %v4140 = vsel %vm3864, %v3875, %v3959
        %v4141 = vsel %vm3864, %v3876, %v3961
        %v4142 = vsel %vm3864, %v3877, %v3963
        %v4143 = vsel %vm3864, %v3878, %v3965
        %v4144 = vsel %vm3864, %v3879, %v3967
        %v4145 = vsel %vm3864, %v3880, %v3969
        %vm4146 = vcmask 523264
        %v4147 = vsel %vm4146, %v4138, %v3987
        %v4148 = vsel %vm4146, %v4139, %v3989
        %v4149 = vsel %vm4146, %v4140, %v3991
        %v4150 = vsel %vm4146, %v4141, %v3993
        %v4151 = vsel %vm4146, %v4142, %v3995
        %v4152 = vsel %vm4146, %v4143, %v3997
        %v4153 = vsel %vm4146, %v4144, %v3999
        %v4154 = vsel %vm4146, %v4145, %v4001
        %vm4155 = vcmask 785408
        %v4156 = vsel %vm4155, %v4147, %v4019
        %v4157 = vsel %vm4155, %v4148, %v4021
        %v4158 = vsel %vm4155, %v4149, %v4023
        %v4159 = vsel %vm4155, %v4150, %v4025
        %v4160 = vsel %vm4155, %v4151, %v4027
        %v4161 = vsel %vm4155, %v4152, %v4029
        %v4162 = vsel %vm4155, %v4153, %v4031
        %v4163 = vsel %vm4155, %v4154, %v4033
        %v4164 = vsel %vm3864, %v3905, %v4051
        %v4165 = vsel %vm3864, %v3906, %v4053
        %v4166 = vsel %vm3864, %v3907, %v4055
        %v4167 = vsel %vm3864, %v3908, %v4057
        %v4168 = vsel %vm3864, %v3909, %v4059
        %v4169 = vsel %vm3864, %v3910, %v4061
        %v4170 = vsel %vm3864, %v3911, %v4063
        %v4171 = vsel %vm3864, %v3912, %v4065
        %v4172 = vsel %vm4146, %v4164, %v4083
        %v4173 = vsel %vm4146, %v4165, %v4085
        %v4174 = vsel %vm4146, %v4166, %v4087
        %v4175 = vsel %vm4146, %v4167, %v4089
        %v4176 = vsel %vm4146, %v4168, %v4091
        %v4177 = vsel %vm4146, %v4169, %v4093
        %v4178 = vsel %vm4146, %v4170, %v4095
        %v4179 = vsel %vm4146, %v4171, %v4097
        %v4180 = vsel %vm4155, %v4172, %v4115
        %v4181 = vsel %vm4155, %v4173, %v4117
        %v4182 = vsel %vm4155, %v4174, %v4119
        %v4183 = vsel %vm4155, %v4175, %v4121
        %v4184 = vsel %vm4155, %v4176, %v4123
        %v4185 = vsel %vm4155, %v4177, %v4125
        %v4186 = vsel %vm4155, %v4178, %v4127
        %v4187 = vsel %vm4155, %v4179, %v4129
        %v4188 = vpack.c.bf16 %v4157, %v4156
        %v4189 = vpack.c.bf16 %v4181, %v4180
        %v4190 = vpack.c.bf16 %v3939, %v3938
        %v4191 = vpack.c.bf16 %v4159, %v4158
        %v4192 = vpack.c.bf16 %v4183, %v4182
        %v4193 = vpack.c.bf16 %v3941, %v3940
        %v4194 = vpack.c.bf16 %v4161, %v4160
        %v4195 = vpack.c.bf16 %v4185, %v4184
        %v4196 = vpack.c.bf16 %v3943, %v3942
        %v4197 = vpack.c.bf16 %v4163, %v4162
        %v4198 = vpack.c.bf16 %v4187, %v4186
        %v4199 = vpack.c.bf16 %v3945, %v3944
        %v4200 = vld [vmem:[%s3] sm:$0xf]
        %v4201 = vld [vmem:[%s3 + $0x4] sm:$0xf]
        %v4202 = vld [vmem:[%s3 + $0x8] sm:$0xf]
        %v4203 = vld [vmem:[%s3 + $0xc] sm:$0xf]
        %v4204 = vld [vmem:[%s3 + $0x10] sm:$0xf]
        %v4205 = vld [vmem:[%s3 + $0x14] sm:$0xf]
        %v4206 = vld [vmem:[%s3 + $0x18] sm:$0xf]
        %v4207 = vld [vmem:[%s3 + $0x1c] sm:$0xf]
        %v4208 = vld [vmem:[%s3 + $0x20] sm:$0xf]
        %v4209 = vld [vmem:[%s3 + $0x24] sm:$0xf]
        %v4210 = vld [vmem:[%s3 + $0x28] sm:$0xf]
        %v4211 = vld [vmem:[%s3 + $0x2c] sm:$0xf]
        %v4212 = vld [vmem:[%s3 + $0x30] sm:$0xf]
        %v4213 = vld [vmem:[%s3 + $0x34] sm:$0xf]
        %v4214 = vld [vmem:[%s3 + $0x38] sm:$0xf]
        %v4215 = vld [vmem:[%s3 + $0x3c] sm:$0xf]
        %v4216 = vld [vmem:[%s3 + $0x40] sm:$0xf]
        %v4217 = vld [vmem:[%s3 + $0x44] sm:$0xf]
        %v4218 = vld [vmem:[%s3 + $0x48] sm:$0xf]
        %v4219 = vld [vmem:[%s3 + $0x4c] sm:$0xf]
        %v4220 = vld [vmem:[%s3 + $0x50] sm:$0xf]
        %v4221 = vld [vmem:[%s3 + $0x54] sm:$0xf]
        %v4222 = vld [vmem:[%s3 + $0x58] sm:$0xf]
        %v4223 = vld [vmem:[%s3 + $0x5c] sm:$0xf]
        %v4224 = vld [vmem:[%s3 + $0x60] sm:$0xf]
        %v4225 = vld [vmem:[%s3 + $0x64] sm:$0xf]
        %v4226 = vld [vmem:[%s3 + $0x68] sm:$0xf]
        %v4227 = vld [vmem:[%s3 + $0x6c] sm:$0xf]
        %v4228 = vld [vmem:[%s3 + $0x70] sm:$0xf]
        %v4229 = vld [vmem:[%s3 + $0x74] sm:$0xf]
        %v4230 = vld [vmem:[%s3 + $0x78] sm:$0xf]
        %v4231 = vld [vmem:[%s3 + $0x7c] sm:$0xf]
        %v4232 = vld [vmem:[%s3 + $0x80] sm:$0xf]
        %v4233 = vld [vmem:[%s3 + $0x84] sm:$0xf]
        %v4234 = vld [vmem:[%s3 + $0x88] sm:$0xf]
        %v4235 = vld [vmem:[%s3 + $0x8c] sm:$0xf]
        %v4236 = vld [vmem:[%s4] sm:$0x1]
        %v4238 = vlaneseq
        %v4239 = vshrl.u32 %v4238, 7
        %v4240 = vsub.s32 0, %v4239
        %v4241 = vrot.slane %v4236, %v4240
        %v4279 = vunpack.c.l.b16 %v4200
        %v4280 = vunpack.c.l.b16 %v4201
        %v4281 = vunpack.c.l.b16 %v4202
        %v4282 = vunpack.c.l.b16 %v4203
        %v4283 = vunpack.c.l.b16 %v4204
        %v4284 = vunpack.c.l.b16 %v4205
        %v4285 = vunpack.c.l.b16 %v4206
        %v4286 = vunpack.c.l.b16 %v4207
        %v4287 = vunpack.c.l.b16 %v4208
        %v4288 = vunpack.c.l.b16 %v4209
        %v4289 = vunpack.c.l.b16 %v4210
        %v4290 = vunpack.c.l.b16 %v4211
        %v4291 = vunpack.c.l.b16 %v4212
        %v4292 = vunpack.c.l.b16 %v4213
        %v4293 = vunpack.c.l.b16 %v4214
        %v4294 = vunpack.c.l.b16 %v4215
        %v4295 = vunpack.c.l.b16 %v4216
        %v4296 = vunpack.c.l.b16 %v4217
        %v4297 = vunpack.c.l.b16 %v4218
        %v4298 = vunpack.c.l.b16 %v4219
        %v4299 = vunpack.c.l.b16 %v4220
        %v4300 = vunpack.c.l.b16 %v4221
        %v4301 = vunpack.c.l.b16 %v4222
        %v4302 = vunpack.c.l.b16 %v4223
        %v4303 = vunpack.c.l.b16 %v4224
        %v4304 = vunpack.c.l.b16 %v4225
        %v4305 = vunpack.c.l.b16 %v4226
        %v4306 = vunpack.c.l.b16 %v4227
        %v4307 = vunpack.c.l.b16 %v4228
        %v4308 = vunpack.c.l.b16 %v4229
        %v4309 = vunpack.c.l.b16 %v4230
        %v4310 = vunpack.c.l.b16 %v4231
        %v4311 = vunpack.c.l.b16 %v4232
        %v4312 = vunpack.c.l.b16 %v4233
        %v4313 = vunpack.c.l.b16 %v4234
        %v4314 = vunpack.c.l.b16 %v4235
        %v4315 = vpack.c.b16 %v4280, %v4279
        %v4316 = vpack.c.b16 %v4282, %v4281
        %v4317 = vpack.c.b16 %v4284, %v4283
        %v4318 = vpack.c.b16 %v4286, %v4285
        %v4319 = vpack.c.b16 %v4288, %v4287
        %v4320 = vpack.c.b16 %v4290, %v4289
        %v4321 = vpack.c.b16 %v4292, %v4291
        %v4322 = vpack.c.b16 %v4294, %v4293
        %v4323 = vpack.c.b16 %v4296, %v4295
        %v4324 = vpack.c.b16 %v4298, %v4297
        %v4325 = vpack.c.b16 %v4300, %v4299
        %v4326 = vpack.c.b16 %v4302, %v4301
        %v4327 = vpack.c.b16 %v4304, %v4303
        %v4328 = vpack.c.b16 %v4306, %v4305
        %v4329 = vpack.c.b16 %v4308, %v4307
        %v4330 = vpack.c.b16 %v4310, %v4309
        %v4331 = vpack.c.b16 %v4312, %v4311
        %v4332 = vpack.c.b16 %v4314, %v4313
        %v4352 = vsel %vm3864, %v4190, 0
        %v4355 = vsel %vm3864, %v4193, 0
        %v4358 = vsel %vm3864, %v4196, 0
        %v4361 = vsel %vm3864, %v4199, 0
        %4363 = vmatprep.subr.bf16.mxu0 0
        %4364 = vmatpush1.bf16.msra.mxu0 %v4315
        %4365 = vmatprep.subr.bf16.mxu0 0
        %4366 = vmatpush1.bf16.msra.mxu0 %v4316
        %4367 = vmatprep.subr.bf16.mxu0 0
        %4368 = vmatpush1.bf16.msra.mxu0 %v4317
        %4369 = vmatprep.subr.bf16.mxu0 0
        %4370 = vmatpush1.bf16.msra.mxu0 %v4318
        %4371 = vmatprep.subr.bf16.mxu0 0
        %4372 = vmatpush1.bf16.msra.mxu0 %v4319
        %4373 = vmatprep.subr.bf16.mxu0 0
        %4374 = vmatpush1.bf16.msra.mxu0 %v4320
        %4375 = vmatprep.subr.bf16.mxu0 0
        %4376 = vmatpush1.bf16.msra.mxu0 %v4321
        %4377 = vmatprep.subr.bf16.mxu0 0
        %4378 = vmatpush1.bf16.msra.mxu0 %v4322
        %4379 = vmatprep.subr.bf16.mxu0 0
        %4380 = vmatpush1.bf16.msra.mxu0 %v4323
        %4381 = vmatprep.subr.bf16.mxu0 0
        %4382 = vmatpush1.bf16.msra.mxu0 %v4324
        %4383 = vmatprep.subr.bf16.mxu0 0
        %4384 = vmatpush1.bf16.msra.mxu0 %v4325
        %4385 = vmatprep.subr.bf16.mxu0 0
        %4386 = vmatpush1.bf16.msra.mxu0 %v4326
        %4387 = vmatprep.subr.bf16.mxu0 0
        %4388 = vmatpush1.bf16.msra.mxu0 %v4327
        %4389 = vmatprep.subr.bf16.mxu0 0
        %4390 = vmatpush1.bf16.msra.mxu0 %v4328
        %4391 = vmatprep.subr.bf16.mxu0 0
        %4392 = vmatpush1.bf16.msra.mxu0 %v4329
        %4393 = vmatprep.subr.bf16.mxu0 0
        %4394 = vmatpush1.bf16.msra.mxu0 %v4330
        %4395 = vmatprep.mubr.bf16.mxu0 %v4189
        %4396 = vmatmul.mubr.bf16.gmra.mrb[0].mxu0 %v4188
        %v4397 = vpop.f32.mrb[0].mxu0
        %v4398 = vadd.f32 %v4241, %v4397
        %v4399 = vpop.f32.mrb[0].mxu0
        %v4400 = vpop.f32.mrb[0].mxu0
        %v4401 = vadd.f32 %v4241, %v4400
        %v4402 = vpop.f32.mrb[0].mxu0
        %4403 = vmatprep.mubr.bf16.mxu0 %v4192
        %4404 = vmatmul.mubr.bf16.gmra.mrb[0].mxu0 %v4191
        %v4405 = vpop.f32.mrb[0].mxu0
        %v4406 = vadd.f32 %v4241, %v4405
        %v4407 = vpop.f32.mrb[0].mxu0
        %v4408 = vpop.f32.mrb[0].mxu0
        %v4409 = vadd.f32 %v4241, %v4408
        %v4410 = vpop.f32.mrb[0].mxu0
        %4411 = vmatprep.mubr.bf16.mxu0 %v4195
        %4412 = vmatmul.mubr.bf16.gmra.mrb[0].mxu0 %v4194
        %v4413 = vpop.f32.mrb[0].mxu0
        %v4414 = vadd.f32 %v4241, %v4413
        %v4415 = vpop.f32.mrb[0].mxu0
        %v4416 = vpop.f32.mrb[0].mxu0
        %v4417 = vadd.f32 %v4241, %v4416
        %v4418 = vpop.f32.mrb[0].mxu0
        %4419 = vmatprep.mubr.bf16.mxu0 %v4198
        %4420 = vmatmul.mubr.bf16.gmra.mrb[0].mxu0 %v4197
        %v4421 = vpop.f32.mrb[0].mxu0
        %v4422 = vadd.f32 %v4241, %v4421
        %v4423 = vpop.f32.mrb[0].mxu0
        %v4424 = vpop.f32.mrb[0].mxu0
        %v4425 = vadd.f32 %v4241, %v4424
        %v4426 = vpop.f32.mrb[0].mxu0
        %4427 = vdwg.mxu0
        %4428 = vmatprep.subr.bf16.mxu0 0
        %4429 = vmatpush1.bf16.msra.mxu0 %v4331
        %4430 = vmatprep.subr.bf16.mxu0 0
        %4431 = vmatpush1.bf16.msra.mxu0 %v4332
        %4432 = vmatprep.subr.bf16.mxu0 0
        %4433 = vmatpush1.bf16.msra.mxu0 0
        %4434 = vmatprep.subr.bf16.mxu0 0
        %4435 = vmatpush1.bf16.msra.mxu0 0
        %4436 = vmatprep.subr.bf16.mxu0 0
        %4437 = vmatpush1.bf16.msra.mxu0 0
        %4438 = vmatprep.subr.bf16.mxu0 0
        %4439 = vmatpush1.bf16.msra.mxu0 0
        %4440 = vmatprep.subr.bf16.mxu0 0
        %4441 = vmatpush1.bf16.msra.mxu0 0
        %4442 = vmatprep.subr.bf16.mxu0 0
        %4443 = vmatpush1.bf16.msra.mxu0 0
        %4444 = vmatprep.subr.bf16.mxu0 0
        %4445 = vmatpush1.bf16.msra.mxu0 0
        %4446 = vmatprep.subr.bf16.mxu0 0
        %4447 = vmatpush1.bf16.msra.mxu0 0
        %4448 = vmatprep.subr.bf16.mxu0 0
        %4449 = vmatpush1.bf16.msra.mxu0 0
        %4450 = vmatprep.subr.bf16.mxu0 0
        %4451 = vmatpush1.bf16.msra.mxu0 0
        %4452 = vmatprep.subr.bf16.mxu0 0
        %4453 = vmatpush1.bf16.msra.mxu0 0
        %4454 = vmatprep.subr.bf16.mxu0 0
        %4455 = vmatpush1.bf16.msra.mxu0 0
        %4456 = vmatprep.subr.bf16.mxu0 0
        %4457 = vmatpush1.bf16.msra.mxu0 0
        %4458 = vmatprep.subr.bf16.mxu0 0
        %4459 = vmatpush1.bf16.msra.mxu0 0
        %4460 = vmatprep.mubr.bf16.mxu0 0
        %4461 = vmatmul.mubr.bf16.gmra.mrb[0].mxu0 %v4352
        %v4462 = vpop.f32.mrb[0].mxu0
        %v4463 = vadd.f32 %v4398, %v4462
        %v4464 = vpop.f32.mrb[0].mxu0
        %v4465 = vpop.f32.mrb[0].mxu0
        %v4466 = vadd.f32 %v4401, %v4465
        %v4467 = vpop.f32.mrb[0].mxu0
        %4468 = vmatprep.mubr.bf16.mxu0 0
        %4469 = vmatmul.mubr.bf16.gmra.mrb[0].mxu0 %v4355
        %v4470 = vpop.f32.mrb[0].mxu0
        %v4471 = vadd.f32 %v4406, %v4470
        %v4472 = vpop.f32.mrb[0].mxu0
        %v4473 = vpop.f32.mrb[0].mxu0
        %v4474 = vadd.f32 %v4409, %v4473
        %v4475 = vpop.f32.mrb[0].mxu0
        %4476 = vmatprep.mubr.bf16.mxu0 0
        %4477 = vmatmul.mubr.bf16.gmra.mrb[0].mxu0 %v4358
        %v4478 = vpop.f32.mrb[0].mxu0
        %v4479 = vadd.f32 %v4414, %v4478
        %v4480 = vpop.f32.mrb[0].mxu0
        %v4481 = vpop.f32.mrb[0].mxu0
        %v4482 = vadd.f32 %v4417, %v4481
        %v4483 = vpop.f32.mrb[0].mxu0
        %4484 = vmatprep.mubr.bf16.mxu0 0
        %4485 = vmatmul.mubr.bf16.gmra.mrb[0].mxu0 %v4361
        %v4486 = vpop.f32.mrb[0].mxu0
        %v4487 = vadd.f32 %v4422, %v4486
        %v4488 = vpop.f32.mrb[0].mxu0
        %v4489 = vpop.f32.mrb[0].mxu0
        %v4490 = vadd.f32 %v4425, %v4489
        %v4491 = vpop.f32.mrb[0].mxu0
        %4492 = vdwg.mxu0
        %v4493 = vmax.f32 %v4463, 0.0
        %v4494 = vmax.f32 %v4466, 0.0
        %v4495 = vmax.f32 %v4471, 0.0
        %v4496 = vmax.f32 %v4474, 0.0
        %v4497 = vmax.f32 %v4479, 0.0
        %v4498 = vmax.f32 %v4482, 0.0
        %v4499 = vmax.f32 %v4487, 0.0
        %v4500 = vmax.f32 %v4490, 0.0
        %v4509 = vcombine.high %v4493, %v4493
        %v4511 = vunpack.c.l.s4 1983009808
        %v4512 = vunpack.c.0.s8 %v4511
        %v4513 = vlaneseq
        %v4514 = vshrl.u32 %v4513, 7
        %v4515 = vsub.s32 %v4512, %v4514
        %v4516 = vrot.slane %v4493, %v4515
        %v4518 = vunpack.c.l.s4 1983009808
        %v4519 = vunpack.c.0.s8 %v4518
        %v4520 = vlaneseq
        %v4521 = vshrl.u32 %v4520, 7
        %v4522 = vsub.s32 %v4519, %v4521
        %v4523 = vrot.slane %v4509, %v4522
        %v4524 = vcombine.high %v4516, %v4516
        %v4525 = vcombine.high %v4523, %v4523
        %v4526 = vcombine.high %v4494, %v4494
        %v4528 = vunpack.c.l.s4 1983009808
        %v4529 = vunpack.c.0.s8 %v4528
        %v4530 = vlaneseq
        %v4531 = vshrl.u32 %v4530, 7
        %v4532 = vsub.s32 %v4529, %v4531
        %v4533 = vrot.slane %v4494, %v4532
        %v4535 = vunpack.c.l.s4 1983009808
        %v4536 = vunpack.c.0.s8 %v4535
        %v4537 = vlaneseq
        %v4538 = vshrl.u32 %v4537, 7
        %v4539 = vsub.s32 %v4536, %v4538
        %v4540 = vrot.slane %v4526, %v4539
        %v4541 = vcombine.high %v4533, %v4533
        %v4542 = vcombine.high %v4540, %v4540
        %v4543 = vcombine.high %v4495, %v4495
        %v4545 = vunpack.c.l.s4 1983009808
        %v4546 = vunpack.c.0.s8 %v4545
        %v4547 = vlaneseq
        %v4548 = vshrl.u32 %v4547, 7
        %v4549 = vsub.s32 %v4546, %v4548
        %v4550 = vrot.slane %v4495, %v4549
        %v4552 = vunpack.c.l.s4 1983009808
        %v4553 = vunpack.c.0.s8 %v4552
        %v4554 = vlaneseq
        %v4555 = vshrl.u32 %v4554, 7
        %v4556 = vsub.s32 %v4553, %v4555
        %v4557 = vrot.slane %v4543, %v4556
        %v4558 = vcombine.high %v4550, %v4550
        %v4559 = vcombine.high %v4557, %v4557
        %v4560 = vcombine.high %v4496, %v4496
        %v4562 = vunpack.c.l.s4 1983009808
        %v4563 = vunpack.c.0.s8 %v4562
        %v4564 = vlaneseq
        %v4565 = vshrl.u32 %v4564, 7
        %v4566 = vsub.s32 %v4563, %v4565
        %v4567 = vrot.slane %v4496, %v4566
        %v4569 = vunpack.c.l.s4 1983009808
        %v4570 = vunpack.c.0.s8 %v4569
        %v4571 = vlaneseq
        %v4572 = vshrl.u32 %v4571, 7
        %v4573 = vsub.s32 %v4570, %v4572
        %v4574 = vrot.slane %v4560, %v4573
        %v4575 = vcombine.high %v4567, %v4567
        %v4576 = vcombine.high %v4574, %v4574
        %v4577 = vcombine.high %v4497, %v4497
        %v4579 = vunpack.c.l.s4 1983009808
        %v4580 = vunpack.c.0.s8 %v4579
        %v4581 = vlaneseq
        %v4582 = vshrl.u32 %v4581, 7
        %v4583 = vsub.s32 %v4580, %v4582
        %v4584 = vrot.slane %v4497, %v4583
        %v4586 = vunpack.c.l.s4 1983009808
        %v4587 = vunpack.c.0.s8 %v4586
        %v4588 = vlaneseq
        %v4589 = vshrl.u32 %v4588, 7
        %v4590 = vsub.s32 %v4587, %v4589
        %v4591 = vrot.slane %v4577, %v4590
        %v4592 = vcombine.high %v4584, %v4584
        %v4593 = vcombine.high %v4591, %v4591
        %v4594 = vcombine.high %v4498, %v4498
        %v4596 = vunpack.c.l.s4 1983009808
        %v4597 = vunpack.c.0.s8 %v4596
        %v4598 = vlaneseq
        %v4599 = vshrl.u32 %v4598, 7
        %v4600 = vsub.s32 %v4597, %v4599
        %v4601 = vrot.slane %v4498, %v4600
        %v4603 = vunpack.c.l.s4 1983009808
        %v4604 = vunpack.c.0.s8 %v4603
        %v4605 = vlaneseq
        %v4606 = vshrl.u32 %v4605, 7
        %v4607 = vsub.s32 %v4604, %v4606
        %v4608 = vrot.slane %v4594, %v4607
        %v4609 = vcombine.high %v4601, %v4601
        %v4610 = vcombine.high %v4608, %v4608
        %v4611 = vcombine.high %v4499, %v4499
        %v4613 = vunpack.c.l.s4 1983009808
        %v4614 = vunpack.c.0.s8 %v4613
        %v4615 = vlaneseq
        %v4616 = vshrl.u32 %v4615, 7
        %v4617 = vsub.s32 %v4614, %v4616
        %v4618 = vrot.slane %v4499, %v4617
        %v4620 = vunpack.c.l.s4 1983009808
        %v4621 = vunpack.c.0.s8 %v4620
        %v4622 = vlaneseq
        %v4623 = vshrl.u32 %v4622, 7
        %v4624 = vsub.s32 %v4621, %v4623
        %v4625 = vrot.slane %v4611, %v4624
        %v4626 = vcombine.high %v4618, %v4618
        %v4627 = vcombine.high %v4625, %v4625
        %v4628 = vcombine.high %v4500, %v4500
        %v4630 = vunpack.c.l.s4 1983009808
        %v4631 = vunpack.c.0.s8 %v4630
        %v4632 = vlaneseq
        %v4633 = vshrl.u32 %v4632, 7
        %v4634 = vsub.s32 %v4631, %v4633
        %v4635 = vrot.slane %v4500, %v4634
        %v4637 = vunpack.c.l.s4 1983009808
        %v4638 = vunpack.c.0.s8 %v4637
        %v4639 = vlaneseq
        %v4640 = vshrl.u32 %v4639, 7
        %v4641 = vsub.s32 %v4638, %v4640
        %v4642 = vrot.slane %v4628, %v4641
        %v4643 = vcombine.high %v4635, %v4635
        %v4644 = vcombine.high %v4642, %v4642
        %vm4677 = vcmask 517120
        %v4678 = vsel %vm4677, %v4516, -inf
        %v4679 = vsel %vm4677, %v4533, -inf
        %v4680 = vmax.f32 %v4678, %v4679
        %v4681 = vrot.slane %v4680, 4
        %v4682 = vmax.f32 %v4680, %v4681
        %v4683 = vrot.slane %v4682, 2
        %v4684 = vmax.f32 %v4682, %v4683
        %v4685 = vrot.slane %v4684, 1
        %v4686 = vmax.f32 %v4684, %v4685
        %v4687 = vsel %vm4677, %v4524, -inf
        %v4688 = vsel %vm4677, %v4541, -inf
        %v4689 = vmax.f32 %v4687, %v4688
        %v4690 = vrot.slane %v4689, 4
        %v4691 = vmax.f32 %v4689, %v4690
        %v4692 = vrot.slane %v4691, 2
        %v4693 = vmax.f32 %v4691, %v4692
        %v4694 = vrot.slane %v4693, 1
        %v4695 = vmax.f32 %v4693, %v4694
        %v4696 = vsel %vm4677, %v4523, -inf
        %v4697 = vsel %vm4677, %v4540, -inf
        %v4698 = vmax.f32 %v4696, %v4697
        %v4699 = vrot.slane %v4698, 4
        %v4700 = vmax.f32 %v4698, %v4699
        %v4701 = vrot.slane %v4700, 2
        %v4702 = vmax.f32 %v4700, %v4701
        %v4703 = vrot.slane %v4702, 1
        %v4704 = vmax.f32 %v4702, %v4703
        %v4705 = vsel %vm4677, %v4525, -inf
        %v4706 = vsel %vm4677, %v4542, -inf
        %v4707 = vmax.f32 %v4705, %v4706
        %v4708 = vrot.slane %v4707, 4
        %v4709 = vmax.f32 %v4707, %v4708
        %v4710 = vrot.slane %v4709, 2
        %v4711 = vmax.f32 %v4709, %v4710
        %v4712 = vrot.slane %v4711, 1
        %v4713 = vmax.f32 %v4711, %v4712
        %v4714 = vsel %vm4677, %v4550, -inf
        %v4715 = vsel %vm4677, %v4567, -inf
        %v4716 = vmax.f32 %v4714, %v4715
        %v4717 = vrot.slane %v4716, 4
        %v4718 = vmax.f32 %v4716, %v4717
        %v4719 = vrot.slane %v4718, 2
        %v4720 = vmax.f32 %v4718, %v4719
        %v4721 = vrot.slane %v4720, 1
        %v4722 = vmax.f32 %v4720, %v4721
        %v4723 = vsel %vm4677, %v4558, -inf
        %v4724 = vsel %vm4677, %v4575, -inf
        %v4725 = vmax.f32 %v4723, %v4724
        %v4726 = vrot.slane %v4725, 4
        %v4727 = vmax.f32 %v4725, %v4726
        %v4728 = vrot.slane %v4727, 2
        %v4729 = vmax.f32 %v4727, %v4728
        %v4730 = vrot.slane %v4729, 1
        %v4731 = vmax.f32 %v4729, %v4730
        %v4732 = vsel %vm4677, %v4557, -inf
        %v4733 = vsel %vm4677, %v4574, -inf
        %v4734 = vmax.f32 %v4732, %v4733
        %v4735 = vrot.slane %v4734, 4
        %v4736 = vmax.f32 %v4734, %v4735
        %v4737 = vrot.slane %v4736, 2
        %v4738 = vmax.f32 %v4736, %v4737
        %v4739 = vrot.slane %v4738, 1
        %v4740 = vmax.f32 %v4738, %v4739
        %v4741 = vsel %vm4677, %v4559, -inf
        %v4742 = vsel %vm4677, %v4576, -inf
        %v4743 = vmax.f32 %v4741, %v4742
        %v4744 = vrot.slane %v4743, 4
        %v4745 = vmax.f32 %v4743, %v4744
        %v4746 = vrot.slane %v4745, 2
        %v4747 = vmax.f32 %v4745, %v4746
        %v4748 = vrot.slane %v4747, 1
        %v4749 = vmax.f32 %v4747, %v4748
        %v4750 = vsel %vm4677, %v4584, -inf
        %v4751 = vsel %vm4677, %v4601, -inf
        %v4752 = vmax.f32 %v4750, %v4751
        %v4753 = vrot.slane %v4752, 4
        %v4754 = vmax.f32 %v4752, %v4753
        %v4755 = vrot.slane %v4754, 2
        %v4756 = vmax.f32 %v4754, %v4755
        %v4757 = vrot.slane %v4756, 1
        %v4758 = vmax.f32 %v4756, %v4757
        %v4759 = vsel %vm4677, %v4592, -inf
        %v4760 = vsel %vm4677, %v4609, -inf
        %v4761 = vmax.f32 %v4759, %v4760
        %v4762 = vrot.slane %v4761, 4
        %v4763 = vmax.f32 %v4761, %v4762
        %v4764 = vrot.slane %v4763, 2
        %v4765 = vmax.f32 %v4763, %v4764
        %v4766 = vrot.slane %v4765, 1
        %v4767 = vmax.f32 %v4765, %v4766
        %v4768 = vsel %vm4677, %v4591, -inf
        %v4769 = vsel %vm4677, %v4608, -inf
        %v4770 = vmax.f32 %v4768, %v4769
        %v4771 = vrot.slane %v4770, 4
        %v4772 = vmax.f32 %v4770, %v4771
        %v4773 = vrot.slane %v4772, 2
        %v4774 = vmax.f32 %v4772, %v4773
        %v4775 = vrot.slane %v4774, 1
        %v4776 = vmax.f32 %v4774, %v4775
        %v4777 = vsel %vm4677, %v4593, -inf
        %v4778 = vsel %vm4677, %v4610, -inf
        %v4779 = vmax.f32 %v4777, %v4778
        %v4780 = vrot.slane %v4779, 4
        %v4781 = vmax.f32 %v4779, %v4780
        %v4782 = vrot.slane %v4781, 2
        %v4783 = vmax.f32 %v4781, %v4782
        %v4784 = vrot.slane %v4783, 1
        %v4785 = vmax.f32 %v4783, %v4784
        %v4786 = vsel %vm4677, %v4618, -inf
        %v4787 = vsel %vm4677, %v4635, -inf
        %v4788 = vmax.f32 %v4786, %v4787
        %v4789 = vrot.slane %v4788, 4
        %v4790 = vmax.f32 %v4788, %v4789
        %v4791 = vrot.slane %v4790, 2
        %v4792 = vmax.f32 %v4790, %v4791
        %v4793 = vrot.slane %v4792, 1
        %v4794 = vmax.f32 %v4792, %v4793
        %v4795 = vsel %vm4677, %v4626, -inf
        %v4796 = vsel %vm4677, %v4643, -inf
        %v4797 = vmax.f32 %v4795, %v4796
        %v4798 = vrot.slane %v4797, 4
        %v4799 = vmax.f32 %v4797, %v4798
        %v4800 = vrot.slane %v4799, 2
        %v4801 = vmax.f32 %v4799, %v4800
        %v4802 = vrot.slane %v4801, 1
        %v4803 = vmax.f32 %v4801, %v4802
        %v4804 = vsel %vm4677, %v4625, -inf
        %v4805 = vsel %vm4677, %v4642, -inf
        %v4806 = vmax.f32 %v4804, %v4805
        %v4807 = vrot.slane %v4806, 4
        %v4808 = vmax.f32 %v4806, %v4807
        %v4809 = vrot.slane %v4808, 2
        %v4810 = vmax.f32 %v4808, %v4809
        %v4811 = vrot.slane %v4810, 1
        %v4812 = vmax.f32 %v4810, %v4811
        %v4813 = vsel %vm4677, %v4627, -inf
        %v4814 = vsel %vm4677, %v4644, -inf
        %v4815 = vmax.f32 %v4813, %v4814
        %v4816 = vrot.slane %v4815, 4
        %v4817 = vmax.f32 %v4815, %v4816
        %v4818 = vrot.slane %v4817, 2
        %v4819 = vmax.f32 %v4817, %v4818
        %v4820 = vrot.slane %v4819, 1
        %v4821 = vmax.f32 %v4819, %v4820
        // Predicated region
        $region73: #{simple_cnn_forward.1} parent=63 // pred_check
          %p4822 = pneg %p407
        $region74: #{simple_cnn_forward.1} parent=63 // pred_check_branch
          %4824 = sbr.rel (%p4822) target = $region76
        $region75: #{simple_cnn_forward.1} parent=63 // pred_region
          %4825 = vst.msk [vmem:[#allocation4] sm:$0xff] %vm4146, 0.0
          %4826 = vst.msk [vmem:[#allocation4 + $0x8] sm:$0xff] %vm4146, 0.0
          %vm4827 = vcmask 519168
          %4828 = vst.msk [vmem:[#allocation4 + $0x10] sm:$0xf] %vm4827, 0.0
          %4829 = vst.msk [vmem:[#allocation4 + $0x18] sm:$0xff] %vm4146, 0.0
          %4830 = vst.msk [vmem:[#allocation4 + $0x20] sm:$0xff] %vm4146, 0.0
          %4831 = vst.msk [vmem:[#allocation4 + $0x28] sm:$0xf] %vm4827, 0.0
          %4832 = vst.msk [vmem:[#allocation4 + $0x30] sm:$0xff] %vm4146, 0.0
          %4833 = vst.msk [vmem:[#allocation4 + $0x38] sm:$0xff] %vm4146, 0.0
          %4834 = vst.msk [vmem:[#allocation4 + $0x40] sm:$0xf] %vm4827, 0.0
          %4835 = vst.msk [vmem:[#allocation4 + $0x48] sm:$0xff] %vm4146, 0.0
          %4836 = vst.msk [vmem:[#allocation4 + $0x50] sm:$0xff] %vm4146, 0.0
          %4837 = vst.msk [vmem:[#allocation4 + $0x58] sm:$0xf] %vm4827, 0.0
          %4838 = vst.msk [vmem:[#allocation4 + $0x60] sm:$0xff] %vm4146, 0.0
          %4839 = vst.msk [vmem:[#allocation4 + $0x68] sm:$0xff] %vm4146, 0.0
          %4840 = vst.msk [vmem:[#allocation4 + $0x70] sm:$0xf] %vm4827, 0.0
          %4841 = vst.msk [vmem:[#allocation4 + $0x78] sm:$0xff] %vm4146, 0.0
          %4842 = vst.msk [vmem:[#allocation4 + $0x80] sm:$0xff] %vm4146, 0.0
          %4843 = vst.msk [vmem:[#allocation4 + $0x88] sm:$0xf] %vm4827, 0.0
        $region76: #{simple_cnn_forward.1} parent=63 // pred_fallthru
          _
        %v4860 = vsel %vm3792, %v4695, %v4686
        %v4861 = vsel %vm3794, %v4704, %v4860
        %v4862 = vsel %vm3796, %v4713, %v4861
        %v4863 = vsel %vm3792, %v4731, %v4722
        %v4864 = vsel %vm3794, %v4740, %v4863
        %v4865 = vsel %vm3796, %v4749, %v4864
        %v4866 = vsel %vm3792, %v4767, %v4758
        %v4867 = vsel %vm3794, %v4776, %v4866
        %v4868 = vsel %vm3796, %v4785, %v4867
        %v4869 = vsel %vm3792, %v4803, %v4794
        %v4870 = vsel %vm3794, %v4812, %v4869
        %v4871 = vsel %vm3796, %v4821, %v4870
        %s4876 = scalar_lea.vmem [#allocation4], 24
        %vm4877 = vcmask 519168
        %4878 = vst.msk [vmem:[%s4876 + $0x8] sm:$0xf] %vm4877, %v4862
        %4879 = vst.msk [vmem:[%s4876 + $0x20] sm:$0xf] %vm4877, %v4865
        %4880 = vst.msk [vmem:[%s4876 + $0x38] sm:$0xf] %vm4877, %v4868
        %4881 = vst.msk [vmem:[%s4876 + $0x50] sm:$0xf] %vm4877, %v4871
        %v4882 = vld [vmem:[#allocation4 + $0x7] sm:$0xf]
        %v4883 = vld [vmem:[#allocation4 + $0x1f] sm:$0xf]
        %v4884 = vld [vmem:[#allocation4 + $0x37] sm:$0xf]
        %v4885 = vld [vmem:[#allocation4 + $0x4f] sm:$0xf]
        %v4886 = vld [vmem:[#allocation4 + $0x8] sm:$0xf]
        %v4887 = vld [vmem:[#allocation4 + $0x20] sm:$0xf]
        %v4888 = vld [vmem:[#allocation4 + $0x38] sm:$0xf]
        %v4889 = vld [vmem:[#allocation4 + $0x50] sm:$0xf]
        %v4890 = vld [vmem:[#allocation4 + $0x9] sm:$0xf]
        %v4891 = vld [vmem:[#allocation4 + $0x21] sm:$0xf]
        %v4892 = vld [vmem:[#allocation4 + $0x39] sm:$0xf]
        %v4893 = vld [vmem:[#allocation4 + $0x51] sm:$0xf]
        %v4894 = vld [vmem:[%s4876 + $0x7] sm:$0xf]
        %v4895 = vld [vmem:[%s4876 + $0x1f] sm:$0xf]
        %v4896 = vld [vmem:[%s4876 + $0x37] sm:$0xf]
        %v4897 = vld [vmem:[%s4876 + $0x4f] sm:$0xf]
        %v4898 = vld [vmem:[%s4876 + $0x8] sm:$0xf]
        %v4899 = vld [vmem:[%s4876 + $0x20] sm:$0xf]
        %v4900 = vld [vmem:[%s4876 + $0x38] sm:$0xf]
        %v4901 = vld [vmem:[%s4876 + $0x50] sm:$0xf]
        %v4902 = vld [vmem:[%s4876 + $0x9] sm:$0xf]
        %v4903 = vld [vmem:[%s4876 + $0x21] sm:$0xf]
        %v4904 = vld [vmem:[%s4876 + $0x39] sm:$0xf]
        %v4905 = vld [vmem:[%s4876 + $0x51] sm:$0xf]
        %s4906 = scalar_lea.vmem [#allocation4], 48
        %v4907 = vld [vmem:[%s4906 + $0x7] sm:$0xf]
        %v4908 = vld [vmem:[%s4906 + $0x1f] sm:$0xf]
        %v4909 = vld [vmem:[%s4906 + $0x37] sm:$0xf]
        %v4910 = vld [vmem:[%s4906 + $0x4f] sm:$0xf]
        %v4911 = vld [vmem:[%s4906 + $0x8] sm:$0xf]
        %v4912 = vld [vmem:[%s4906 + $0x20] sm:$0xf]
        %v4913 = vld [vmem:[%s4906 + $0x38] sm:$0xf]
        %v4914 = vld [vmem:[%s4906 + $0x50] sm:$0xf]
        %v4915 = vld [vmem:[%s4906 + $0x9] sm:$0xf]
        %v4916 = vld [vmem:[%s4906 + $0x21] sm:$0xf]
        %v4917 = vld [vmem:[%s4906 + $0x39] sm:$0xf]
        %v4918 = vld [vmem:[%s4906 + $0x51] sm:$0xf]
        %4923 = vrot.lane.b32.xlu0 %v4886, 64
        %v4924 = vpop.permute.xlu0 %4923
        %4925 = vrot.lane.b32.xlu0 %v4887, 64
        %v4926 = vpop.permute.xlu0 %4925
        %4927 = vrot.lane.b32.xlu0 %v4888, 64
        %v4928 = vpop.permute.xlu0 %4927
        %4929 = vrot.lane.b32.xlu0 %v4889, 64
        %v4930 = vpop.permute.xlu0 %4929
        %4939 = vrot.lane.b32.xlu0 %v4894, 64
        %v4940 = vpop.permute.xlu0 %4939
        %4941 = vrot.lane.b32.xlu0 %v4895, 64
        %v4942 = vpop.permute.xlu0 %4941
        %4943 = vrot.lane.b32.xlu0 %v4896, 64
        %v4944 = vpop.permute.xlu0 %4943
        %4945 = vrot.lane.b32.xlu0 %v4897, 64
        %v4946 = vpop.permute.xlu0 %4945
        %4955 = vrot.lane.b32.xlu0 %v4902, 64
        %v4956 = vpop.permute.xlu0 %4955
        %4957 = vrot.lane.b32.xlu0 %v4903, 64
        %v4958 = vpop.permute.xlu0 %4957
        %4959 = vrot.lane.b32.xlu0 %v4904, 64
        %v4960 = vpop.permute.xlu0 %4959
        %4961 = vrot.lane.b32.xlu0 %v4905, 64
        %v4962 = vpop.permute.xlu0 %4961
        %4971 = vrot.lane.b32.xlu0 %v4911, 64
        %v4972 = vpop.permute.xlu0 %4971
        %4973 = vrot.lane.b32.xlu0 %v4912, 64
        %v4974 = vpop.permute.xlu0 %4973
        %4975 = vrot.lane.b32.xlu0 %v4913, 64
        %v4976 = vpop.permute.xlu0 %4975
        %4977 = vrot.lane.b32.xlu0 %v4914, 64
        %v4978 = vpop.permute.xlu0 %4977
        %v4983 = vsel %vm4146, %v4882, %v4924
        %v4984 = vsel %vm4146, %v4883, %v4926
        %v4985 = vsel %vm4146, %v4884, %v4928
        %v4986 = vsel %vm4146, %v4885, %v4930
        %v4987 = vsel %vm4146, %v4890, %v4940
        %v4988 = vsel %vm4146, %v4891, %v4942
        %v4989 = vsel %vm4146, %v4892, %v4944
        %v4990 = vsel %vm4146, %v4893, %v4946
        %v4991 = vsel %vm4146, %v4898, %v4956
        %v4992 = vsel %vm4146, %v4899, %v4958
        %v4993 = vsel %vm4146, %v4900, %v4960
        %v4994 = vsel %vm4146, %v4901, %v4962
        %v4995 = vsel %vm4146, %v4907, %v4972
        %v4996 = vsel %vm4146, %v4908, %v4974
        %v4997 = vsel %vm4146, %v4909, %v4976
        %v4998 = vsel %vm4146, %v4910, %v4978
        %v5019 = vcombine.low %v4983, %v4987
        %v5020 = vcombine.low %v4991, %v4995
        %v5021 = vcombine.low %v4984, %v4988
        %v5022 = vcombine.low %v4992, %v4996
        %v5023 = vcombine.low %v4985, %v4989
        %v5024 = vcombine.low %v4993, %v4997
        %v5025 = vcombine.low %v4986, %v4990
        %v5026 = vcombine.low %v4994, %v4998
        %v5027 = vcombine.low %v5019, %v5021
        %v5028 = vcombine.high %v5019, %v5021
        %v5029 = vcombine.low %v5020, %v5022
        %v5030 = vcombine.high %v5020, %v5022
        %v5031 = vcombine.low %v4915, %v4916
        %v5032 = vcombine.low %v5023, %v5025
        %v5033 = vcombine.high %v5023, %v5025
        %v5034 = vcombine.low %v5024, %v5026
        %v5035 = vcombine.high %v5024, %v5026
        %v5036 = vcombine.low %v4917, %v4918
        %v5047 = vpack.c.bf16 %v5032, %v5027
        %v5048 = vpack.c.bf16 %v5033, %v5028
        %v5049 = vpack.c.bf16 %v5034, %v5029
        %v5050 = vpack.c.bf16 %v5035, %v5030
        %v5051 = vpack.c.bf16 %v5036, %v5031
        %v5052 = vld [vmem:[%s5] sm:$0xf]
        %v5053 = vld [vmem:[%s5 + $0x4] sm:$0xf]
        %v5054 = vld [vmem:[%s5 + $0x8] sm:$0xf]
        %v5055 = vld [vmem:[%s5 + $0xc] sm:$0xf]
        %v5056 = vld [vmem:[%s5 + $0x10] sm:$0xf]
        %v5057 = vld [vmem:[%s5 + $0x14] sm:$0xf]
        %v5058 = vld [vmem:[%s5 + $0x18] sm:$0xf]
        %v5059 = vld [vmem:[%s5 + $0x1c] sm:$0xf]
        %v5060 = vld [vmem:[%s5 + $0x20] sm:$0xf]
        %v5061 = vld [vmem:[%s5 + $0x24] sm:$0xf]
        %v5062 = vld [vmem:[%s5 + $0x28] sm:$0xf]
        %v5063 = vld [vmem:[%s5 + $0x2c] sm:$0xf]
        %v5064 = vld [vmem:[%s5 + $0x30] sm:$0xf]
        %v5065 = vld [vmem:[%s5 + $0x34] sm:$0xf]
        %v5066 = vld [vmem:[%s5 + $0x38] sm:$0xf]
        %v5067 = vld [vmem:[%s5 + $0x3c] sm:$0xf]
        %v5068 = vld [vmem:[%s5 + $0x40] sm:$0xf]
        %v5069 = vld [vmem:[%s5 + $0x44] sm:$0xf]
        %v5070 = vld [vmem:[%s5 + $0x48] sm:$0xf]
        %v5071 = vld [vmem:[%s5 + $0x4c] sm:$0xf]
        %v5072 = vld [vmem:[%s5 + $0x50] sm:$0xf]
        %v5073 = vld [vmem:[%s5 + $0x54] sm:$0xf]
        %v5074 = vld [vmem:[%s5 + $0x58] sm:$0xf]
        %v5075 = vld [vmem:[%s5 + $0x5c] sm:$0xf]
        %v5076 = vld [vmem:[%s5 + $0x60] sm:$0xf]
        %v5077 = vld [vmem:[%s5 + $0x64] sm:$0xf]
        %v5078 = vld [vmem:[%s5 + $0x68] sm:$0xf]
        %v5079 = vld [vmem:[%s5 + $0x6c] sm:$0xf]
        %v5080 = vld [vmem:[%s5 + $0x70] sm:$0xf]
        %v5081 = vld [vmem:[%s5 + $0x74] sm:$0xf]
        %v5082 = vld [vmem:[%s5 + $0x78] sm:$0xf]
        %v5083 = vld [vmem:[%s5 + $0x7c] sm:$0xf]
        %v5084 = vld [vmem:[%s5 + $0x80] sm:$0xf]
        %v5085 = vld [vmem:[%s5 + $0x84] sm:$0xf]
        %v5086 = vld [vmem:[%s5 + $0x88] sm:$0xf]
        %v5087 = vld [vmem:[%s5 + $0x8c] sm:$0xf]
        %v5088 = vld [vmem:[%s5 + $0x90] sm:$0xf]
        %v5089 = vld [vmem:[%s5 + $0x94] sm:$0xf]
        %v5090 = vld [vmem:[%s5 + $0x98] sm:$0xf]
        %v5091 = vld [vmem:[%s5 + $0x9c] sm:$0xf]
        %v5092 = vld [vmem:[%s5 + $0xa0] sm:$0xf]
        %v5093 = vld [vmem:[%s5 + $0xa4] sm:$0xf]
        %v5094 = vld [vmem:[%s5 + $0xa8] sm:$0xf]
        %v5095 = vld [vmem:[%s5 + $0xac] sm:$0xf]
        %v5096 = vld [vmem:[%s5 + $0xb0] sm:$0xf]
        %v5097 = vld [vmem:[%s5 + $0xb4] sm:$0xf]
        %v5098 = vld [vmem:[%s5 + $0xb8] sm:$0xf]
        %v5099 = vld [vmem:[%s5 + $0xbc] sm:$0xf]
        %v5100 = vld [vmem:[%s5 + $0xc0] sm:$0xf]
        %v5101 = vld [vmem:[%s5 + $0xc4] sm:$0xf]
        %v5102 = vld [vmem:[%s5 + $0xc8] sm:$0xf]
        %v5103 = vld [vmem:[%s5 + $0xcc] sm:$0xf]
        %v5104 = vld [vmem:[%s5 + $0xd0] sm:$0xf]
        %v5105 = vld [vmem:[%s5 + $0xd4] sm:$0xf]
        %v5106 = vld [vmem:[%s5 + $0xd8] sm:$0xf]
        %v5107 = vld [vmem:[%s5 + $0xdc] sm:$0xf]
        %v5108 = vld [vmem:[%s5 + $0xe0] sm:$0xf]
        %v5109 = vld [vmem:[%s5 + $0xe4] sm:$0xf]
        %v5110 = vld [vmem:[%s5 + $0xe8] sm:$0xf]
        %v5111 = vld [vmem:[%s5 + $0xec] sm:$0xf]
        %v5112 = vld [vmem:[%s5 + $0xf0] sm:$0xf]
        %v5113 = vld [vmem:[%s5 + $0xf4] sm:$0xf]
        %v5114 = vld [vmem:[%s5 + $0xf8] sm:$0xf]
        %v5115 = vld [vmem:[%s5 + $0xfc] sm:$0xf]
        %v5116 = vld [vmem:[%s5 + $0x100] sm:$0xf]
        %v5117 = vld [vmem:[%s5 + $0x104] sm:$0xf]
        %v5118 = vld [vmem:[%s5 + $0x108] sm:$0xf]
        %v5119 = vld [vmem:[%s5 + $0x10c] sm:$0xf]
        %v5120 = vld [vmem:[%s5 + $0x110] sm:$0xf]
        %v5121 = vld [vmem:[%s5 + $0x114] sm:$0xf]
        %v5122 = vld [vmem:[%s5 + $0x118] sm:$0xf]
        %v5123 = vld [vmem:[%s5 + $0x11c] sm:$0xf]
        %v5124 = vld [vmem:[%s6] sm:$0x1]
        %v5126 = vlaneseq
        %v5127 = vshrl.u32 %v5126, 7
        %v5128 = vsub.s32 0, %v5127
        %v5129 = vrot.slane %v5124, %v5128
        %v5203 = vunpack.c.l.b16 %v5052
        %v5204 = vunpack.c.l.b16 %v5053
        %v5205 = vunpack.c.l.b16 %v5054
        %v5206 = vunpack.c.l.b16 %v5055
        %v5207 = vunpack.c.l.b16 %v5056
        %v5208 = vunpack.c.l.b16 %v5057
        %v5209 = vunpack.c.l.b16 %v5058
        %v5210 = vunpack.c.l.b16 %v5059
        %v5211 = vunpack.c.l.b16 %v5060
        %v5212 = vunpack.c.l.b16 %v5061
        %v5213 = vunpack.c.l.b16 %v5062
        %v5214 = vunpack.c.l.b16 %v5063
        %v5215 = vunpack.c.l.b16 %v5064
        %v5216 = vunpack.c.l.b16 %v5065
        %v5217 = vunpack.c.l.b16 %v5066
        %v5218 = vunpack.c.l.b16 %v5067
        %v5219 = vunpack.c.l.b16 %v5068
        %v5220 = vunpack.c.l.b16 %v5069
        %v5221 = vunpack.c.l.b16 %v5070
        %v5222 = vunpack.c.l.b16 %v5071
        %v5223 = vunpack.c.l.b16 %v5072
        %v5224 = vunpack.c.l.b16 %v5073
        %v5225 = vunpack.c.l.b16 %v5074
        %v5226 = vunpack.c.l.b16 %v5075
        %v5227 = vunpack.c.l.b16 %v5076
        %v5228 = vunpack.c.l.b16 %v5077
        %v5229 = vunpack.c.l.b16 %v5078
        %v5230 = vunpack.c.l.b16 %v5079
        %v5231 = vunpack.c.l.b16 %v5080
        %v5232 = vunpack.c.l.b16 %v5081
        %v5233 = vunpack.c.l.b16 %v5082
        %v5234 = vunpack.c.l.b16 %v5083
        %v5235 = vunpack.c.l.b16 %v5084
        %v5236 = vunpack.c.l.b16 %v5085
        %v5237 = vunpack.c.l.b16 %v5086
        %v5238 = vunpack.c.l.b16 %v5087
        %v5239 = vunpack.c.l.b16 %v5088
        %v5240 = vunpack.c.l.b16 %v5089
        %v5241 = vunpack.c.l.b16 %v5090
        %v5242 = vunpack.c.l.b16 %v5091
        %v5243 = vunpack.c.l.b16 %v5092
        %v5244 = vunpack.c.l.b16 %v5093
        %v5245 = vunpack.c.l.b16 %v5094
        %v5246 = vunpack.c.l.b16 %v5095
        %v5247 = vunpack.c.l.b16 %v5096
        %v5248 = vunpack.c.l.b16 %v5097
        %v5249 = vunpack.c.l.b16 %v5098
        %v5250 = vunpack.c.l.b16 %v5099
        %v5251 = vunpack.c.l.b16 %v5100
        %v5252 = vunpack.c.l.b16 %v5101
        %v5253 = vunpack.c.l.b16 %v5102
        %v5254 = vunpack.c.l.b16 %v5103
        %v5255 = vunpack.c.l.b16 %v5104
        %v5256 = vunpack.c.l.b16 %v5105
        %v5257 = vunpack.c.l.b16 %v5106
        %v5258 = vunpack.c.l.b16 %v5107
        %v5259 = vunpack.c.l.b16 %v5108
        %v5260 = vunpack.c.l.b16 %v5109
        %v5261 = vunpack.c.l.b16 %v5110
        %v5262 = vunpack.c.l.b16 %v5111
        %v5263 = vunpack.c.l.b16 %v5112
        %v5264 = vunpack.c.l.b16 %v5113
        %v5265 = vunpack.c.l.b16 %v5114
        %v5266 = vunpack.c.l.b16 %v5115
        %v5267 = vunpack.c.l.b16 %v5116
        %v5268 = vunpack.c.l.b16 %v5117
        %v5269 = vunpack.c.l.b16 %v5118
        %v5270 = vunpack.c.l.b16 %v5119
        %v5271 = vunpack.c.l.b16 %v5120
        %v5272 = vunpack.c.l.b16 %v5121
        %v5273 = vunpack.c.l.b16 %v5122
        %v5274 = vunpack.c.l.b16 %v5123
        %v5275 = vpack.c.b16 %v5204, %v5203
        %v5276 = vpack.c.b16 %v5206, %v5205
        %v5277 = vpack.c.b16 %v5208, %v5207
        %v5278 = vpack.c.b16 %v5210, %v5209
        %v5279 = vpack.c.b16 %v5212, %v5211
        %v5280 = vpack.c.b16 %v5214, %v5213
        %v5281 = vpack.c.b16 %v5216, %v5215
        %v5282 = vpack.c.b16 %v5218, %v5217
        %v5283 = vpack.c.b16 %v5220, %v5219
        %v5284 = vpack.c.b16 %v5222, %v5221
        %v5285 = vpack.c.b16 %v5224, %v5223
        %v5286 = vpack.c.b16 %v5226, %v5225
        %v5287 = vpack.c.b16 %v5228, %v5227
        %v5288 = vpack.c.b16 %v5230, %v5229
        %v5289 = vpack.c.b16 %v5232, %v5231
        %v5290 = vpack.c.b16 %v5234, %v5233
        %v5291 = vpack.c.b16 %v5236, %v5235
        %v5292 = vpack.c.b16 %v5238, %v5237
        %v5293 = vpack.c.b16 %v5240, %v5239
        %v5294 = vpack.c.b16 %v5242, %v5241
        %v5295 = vpack.c.b16 %v5244, %v5243
        %v5296 = vpack.c.b16 %v5246, %v5245
        %v5297 = vpack.c.b16 %v5248, %v5247
        %v5298 = vpack.c.b16 %v5250, %v5249
        %v5299 = vpack.c.b16 %v5252, %v5251
        %v5300 = vpack.c.b16 %v5254, %v5253
        %v5301 = vpack.c.b16 %v5256, %v5255
        %v5302 = vpack.c.b16 %v5258, %v5257
        %v5303 = vpack.c.b16 %v5260, %v5259
        %v5304 = vpack.c.b16 %v5262, %v5261
        %v5305 = vpack.c.b16 %v5264, %v5263
        %v5306 = vpack.c.b16 %v5266, %v5265
        %v5307 = vpack.c.b16 %v5268, %v5267
        %v5308 = vpack.c.b16 %v5270, %v5269
        %v5309 = vpack.c.b16 %v5272, %v5271
        %v5310 = vpack.c.b16 %v5274, %v5273
        %v5348 = vsel %vm4146, %v5051, 0
        %5350 = vmatprep.subr.bf16.mxu0 0
        %5351 = vmatpush1.bf16.msra.mxu0 %v5275
        %5352 = vmatprep.subr.bf16.mxu0 0
        %5353 = vmatpush1.bf16.msra.mxu0 %v5276
        %5354 = vmatprep.subr.bf16.mxu0 0
        %5355 = vmatpush1.bf16.msra.mxu0 %v5277
        %5356 = vmatprep.subr.bf16.mxu0 0
        %5357 = vmatpush1.bf16.msra.mxu0 %v5278
        %5358 = vmatprep.subr.bf16.mxu0 0
        %5359 = vmatpush1.bf16.msra.mxu0 %v5279
        %5360 = vmatprep.subr.bf16.mxu0 0
        %5361 = vmatpush1.bf16.msra.mxu0 %v5280
        %5362 = vmatprep.subr.bf16.mxu0 0
        %5363 = vmatpush1.bf16.msra.mxu0 %v5281
        %5364 = vmatprep.subr.bf16.mxu0 0
        %5365 = vmatpush1.bf16.msra.mxu0 %v5282
        %5366 = vmatprep.subr.bf16.mxu0 0
        %5367 = vmatpush1.bf16.msra.mxu0 %v5283
        %5368 = vmatprep.subr.bf16.mxu0 0
        %5369 = vmatpush1.bf16.msra.mxu0 %v5284
        %5370 = vmatprep.subr.bf16.mxu0 0
        %5371 = vmatpush1.bf16.msra.mxu0 %v5285
        %5372 = vmatprep.subr.bf16.mxu0 0
        %5373 = vmatpush1.bf16.msra.mxu0 %v5286
        %5374 = vmatprep.subr.bf16.mxu0 0
        %5375 = vmatpush1.bf16.msra.mxu0 %v5287
        %5376 = vmatprep.subr.bf16.mxu0 0
        %5377 = vmatpush1.bf16.msra.mxu0 %v5288
        %5378 = vmatprep.subr.bf16.mxu0 0
        %5379 = vmatpush1.bf16.msra.mxu0 %v5289
        %5380 = vmatprep.subr.bf16.mxu0 0
        %5381 = vmatpush1.bf16.msra.mxu0 %v5290
        %5382 = vmatprep.mubr.bf16.mxu0 %v5048
        %5383 = vmatmul.mubr.bf16.gmra.mrb[0].mxu0 %v5047
        %v5384 = vpop.f32.mrb[0].mxu0
        %v5385 = vadd.f32 %v5129, %v5384
        %v5386 = vpop.f32.mrb[0].mxu0
        %v5387 = vpop.f32.mrb[0].mxu0
        %v5388 = vadd.f32 %v5129, %v5387
        %v5389 = vpop.f32.mrb[0].mxu0
        %5390 = vdwg.mxu0
        %5391 = vmatprep.subr.bf16.mxu0 0
        %5392 = vmatpush1.bf16.msra.mxu0 %v5291
        %5393 = vmatprep.subr.bf16.mxu0 0
        %5394 = vmatpush1.bf16.msra.mxu0 %v5292
        %5395 = vmatprep.subr.bf16.mxu0 0
        %5396 = vmatpush1.bf16.msra.mxu0 %v5293
        %5397 = vmatprep.subr.bf16.mxu0 0
        %5398 = vmatpush1.bf16.msra.mxu0 %v5294
        %5399 = vmatprep.subr.bf16.mxu0 0
        %5400 = vmatpush1.bf16.msra.mxu0 %v5295
        %5401 = vmatprep.subr.bf16.mxu0 0
        %5402 = vmatpush1.bf16.msra.mxu0 %v5296
        %5403 = vmatprep.subr.bf16.mxu0 0
        %5404 = vmatpush1.bf16.msra.mxu0 %v5297
        %5405 = vmatprep.subr.bf16.mxu0 0
        %5406 = vmatpush1.bf16.msra.mxu0 %v5298
        %5407 = vmatprep.subr.bf16.mxu0 0
        %5408 = vmatpush1.bf16.msra.mxu0 %v5299
        %5409 = vmatprep.subr.bf16.mxu0 0
        %5410 = vmatpush1.bf16.msra.mxu0 %v5300
        %5411 = vmatprep.subr.bf16.mxu0 0
        %5412 = vmatpush1.bf16.msra.mxu0 %v5301
        %5413 = vmatprep.subr.bf16.mxu0 0
        %5414 = vmatpush1.bf16.msra.mxu0 %v5302
        %5415 = vmatprep.subr.bf16.mxu0 0
        %5416 = vmatpush1.bf16.msra.mxu0 %v5303
        %5417 = vmatprep.subr.bf16.mxu0 0
        %5418 = vmatpush1.bf16.msra.mxu0 %v5304
        %5419 = vmatprep.subr.bf16.mxu0 0
        %5420 = vmatpush1.bf16.msra.mxu0 %v5305
        %5421 = vmatprep.subr.bf16.mxu0 0
        %5422 = vmatpush1.bf16.msra.mxu0 %v5306
        %5423 = vmatprep.mubr.bf16.mxu0 %v5050
        %5424 = vmatmul.mubr.bf16.gmra.mrb[0].mxu0 %v5049
        %v5425 = vpop.f32.mrb[0].mxu0
        %v5426 = vadd.f32 %v5385, %v5425
        %v5427 = vpop.f32.mrb[0].mxu0
        %v5428 = vpop.f32.mrb[0].mxu0
        %v5429 = vadd.f32 %v5388, %v5428
        %v5430 = vpop.f32.mrb[0].mxu0
        %5431 = vdwg.mxu0
        %5432 = vmatprep.subr.bf16.mxu0 0
        %5433 = vmatpush1.bf16.msra.mxu0 %v5307
        %5434 = vmatprep.subr.bf16.mxu0 0
        %5435 = vmatpush1.bf16.msra.mxu0 %v5308
        %5436 = vmatprep.subr.bf16.mxu0 0
        %5437 = vmatpush1.bf16.msra.mxu0 %v5309
        %5438 = vmatprep.subr.bf16.mxu0 0
        %5439 = vmatpush1.bf16.msra.mxu0 %v5310
        %5440 = vmatprep.subr.bf16.mxu0 0
        %5441 = vmatpush1.bf16.msra.mxu0 0
        %5442 = vmatprep.subr.bf16.mxu0 0
        %5443 = vmatpush1.bf16.msra.mxu0 0
        %5444 = vmatprep.subr.bf16.mxu0 0
        %5445 = vmatpush1.bf16.msra.mxu0 0
        %5446 = vmatprep.subr.bf16.mxu0 0
        %5447 = vmatpush1.bf16.msra.mxu0 0
        %5448 = vmatprep.subr.bf16.mxu0 0
        %5449 = vmatpush1.bf16.msra.mxu0 0
        %5450 = vmatprep.subr.bf16.mxu0 0
        %5451 = vmatpush1.bf16.msra.mxu0 0
        %5452 = vmatprep.subr.bf16.mxu0 0
        %5453 = vmatpush1.bf16.msra.mxu0 0
        %5454 = vmatprep.subr.bf16.mxu0 0
        %5455 = vmatpush1.bf16.msra.mxu0 0
        %5456 = vmatprep.subr.bf16.mxu0 0
        %5457 = vmatpush1.bf16.msra.mxu0 0
        %5458 = vmatprep.subr.bf16.mxu0 0
        %5459 = vmatpush1.bf16.msra.mxu0 0
        %5460 = vmatprep.subr.bf16.mxu0 0
        %5461 = vmatpush1.bf16.msra.mxu0 0
        %5462 = vmatprep.subr.bf16.mxu0 0
        %5463 = vmatpush1.bf16.msra.mxu0 0
        %5464 = vmatprep.mubr.bf16.mxu0 0
        %5465 = vmatmul.mubr.bf16.gmra.mrb[0].mxu0 %v5348
        %v5466 = vpop.f32.mrb[0].mxu0
        %v5467 = vadd.f32 %v5426, %v5466
        %v5468 = vpop.f32.mrb[0].mxu0
        %v5469 = vpop.f32.mrb[0].mxu0
        %v5470 = vadd.f32 %v5429, %v5469
        %v5471 = vpop.f32.mrb[0].mxu0
        %5472 = vdwg.mxu0
        %v5473 = vmax.f32 %v5467, 0.0
        %v5474 = vmax.f32 %v5470, 0.0
        %v5477 = vcombine.high %v5473, %v5473
        %v5479 = vunpack.c.l.s4 1983009808
        %v5480 = vunpack.c.0.s8 %v5479
        %v5481 = vlaneseq
        %v5482 = vshrl.u32 %v5481, 7
        %v5483 = vsub.s32 %v5480, %v5482
        %v5484 = vrot.slane %v5473, %v5483
        %v5486 = vunpack.c.l.s4 1983009808
        %v5487 = vunpack.c.0.s8 %v5486
        %v5488 = vlaneseq
        %v5489 = vshrl.u32 %v5488, 7
        %v5490 = vsub.s32 %v5487, %v5489
        %v5491 = vrot.slane %v5477, %v5490
        %v5492 = vcombine.high %v5484, %v5484
        %v5493 = vcombine.high %v5491, %v5491
        %v5494 = vcombine.high %v5474, %v5474
        %v5496 = vunpack.c.l.s4 1983009808
        %v5497 = vunpack.c.0.s8 %v5496
        %v5498 = vlaneseq
        %v5499 = vshrl.u32 %v5498, 7
        %v5500 = vsub.s32 %v5497, %v5499
        %v5501 = vrot.slane %v5474, %v5500
        %v5503 = vunpack.c.l.s4 1983009808
        %v5504 = vunpack.c.0.s8 %v5503
        %v5505 = vlaneseq
        %v5506 = vshrl.u32 %v5505, 7
        %v5507 = vsub.s32 %v5504, %v5506
        %v5508 = vrot.slane %v5494, %v5507
        %v5509 = vcombine.high %v5501, %v5501
        %v5510 = vcombine.high %v5508, %v5508
        %vm5519 = vcmask 1041408
        %v5520 = vsel %vm5519, %v5484, -inf
        %v5521 = vsel %vm5519, %v5491, -inf
        %v5522 = vmax.f32 %v5520, %v5521
        %v5523 = vrot.slane %v5522, 4
        %v5524 = vmax.f32 %v5522, %v5523
        %v5525 = vrot.slane %v5524, 2
        %v5526 = vmax.f32 %v5524, %v5525
        %v5527 = vrot.slane %v5526, 1
        %v5528 = vmax.f32 %v5526, %v5527
        %v5529 = vsel %vm5519, %v5492, -inf
        %v5530 = vsel %vm5519, %v5493, -inf
        %v5531 = vmax.f32 %v5529, %v5530
        %v5532 = vrot.slane %v5531, 4
        %v5533 = vmax.f32 %v5531, %v5532
        %v5534 = vrot.slane %v5533, 2
        %v5535 = vmax.f32 %v5533, %v5534
        %v5536 = vrot.slane %v5535, 1
        %v5537 = vmax.f32 %v5535, %v5536
        %v5538 = vsel %vm5519, %v5501, -inf
        %v5539 = vsel %vm5519, %v5508, -inf
        %v5540 = vmax.f32 %v5538, %v5539
        %v5541 = vrot.slane %v5540, 4
        %v5542 = vmax.f32 %v5540, %v5541
        %v5543 = vrot.slane %v5542, 2
        %v5544 = vmax.f32 %v5542, %v5543
        %v5545 = vrot.slane %v5544, 1
        %v5546 = vmax.f32 %v5544, %v5545
        %v5547 = vsel %vm5519, %v5509, -inf
        %v5548 = vsel %vm5519, %v5510, -inf
        %v5549 = vmax.f32 %v5547, %v5548
        %v5550 = vrot.slane %v5549, 4
        %v5551 = vmax.f32 %v5549, %v5550
        %v5552 = vrot.slane %v5551, 2
        %v5553 = vmax.f32 %v5551, %v5552
        %v5554 = vrot.slane %v5553, 1
        %v5555 = vmax.f32 %v5553, %v5554
        %v5556 = vld [vmem:[%s8] sm:$0xf]
        %v5557 = vpack.c.bf16 %v5528, %v5528
        %v5558 = vld [vmem:[%s7] sm:$0xff]
        %v5559 = vld [vmem:[%s7 + $0x8] sm:$0xff]
        %v5560 = vld [vmem:[%s7 + $0x10] sm:$0xff]
        %v5561 = vld [vmem:[%s7 + $0x18] sm:$0xff]
        %v5562 = vld [vmem:[%s7 + $0x20] sm:$0xff]
        %v5563 = vld [vmem:[%s7 + $0x28] sm:$0xff]
        %v5564 = vld [vmem:[%s7 + $0x30] sm:$0xff]
        %v5565 = vld [vmem:[%s7 + $0x38] sm:$0xff]
        %v5566 = vld [vmem:[%s7 + $0x40] sm:$0xff]
        %v5567 = vld [vmem:[%s7 + $0x48] sm:$0xff]
        %v5568 = vld [vmem:[%s7 + $0x50] sm:$0xff]
        %v5569 = vld [vmem:[%s7 + $0x58] sm:$0xff]
        %v5570 = vld [vmem:[%s7 + $0x60] sm:$0xff]
        %v5571 = vld [vmem:[%s7 + $0x68] sm:$0xff]
        %v5572 = vld [vmem:[%s7 + $0x70] sm:$0xff]
        %v5573 = vld [vmem:[%s7 + $0x78] sm:$0xff]
        %v5574 = vld [vmem:[%s7 + $0x80] sm:$0xff]
        %v5575 = vld [vmem:[%s7 + $0x88] sm:$0xff]
        %v5576 = vld [vmem:[%s7 + $0x90] sm:$0xff]
        %v5577 = vld [vmem:[%s7 + $0x98] sm:$0xff]
        %v5578 = vld [vmem:[%s7 + $0xa0] sm:$0xff]
        %v5579 = vld [vmem:[%s7 + $0xa8] sm:$0xff]
        %v5580 = vld [vmem:[%s7 + $0xb0] sm:$0xff]
        %v5581 = vld [vmem:[%s7 + $0xb8] sm:$0xff]
        %v5582 = vld [vmem:[%s7 + $0xc0] sm:$0xff]
        %v5583 = vld [vmem:[%s7 + $0xc8] sm:$0xff]
        %v5584 = vld [vmem:[%s7 + $0xd0] sm:$0xff]
        %v5585 = vld [vmem:[%s7 + $0xd8] sm:$0xff]
        %v5586 = vld [vmem:[%s7 + $0xe0] sm:$0xff]
        %v5587 = vld [vmem:[%s7 + $0xe8] sm:$0xff]
        %v5588 = vld [vmem:[%s7 + $0xf0] sm:$0xff]
        %v5589 = vld [vmem:[%s7 + $0xf8] sm:$0xff]
        %v5622 = vunpack.c.l.b16 %v5558
        %v5623 = vunpack.c.h.b16 %v5558
        %v5624 = vunpack.c.l.b16 %v5559
        %v5625 = vunpack.c.h.b16 %v5559
        %v5626 = vunpack.c.l.b16 %v5560
        %v5627 = vunpack.c.h.b16 %v5560
        %v5628 = vunpack.c.l.b16 %v5561
        %v5629 = vunpack.c.h.b16 %v5561
        %v5630 = vunpack.c.l.b16 %v5562
        %v5631 = vunpack.c.h.b16 %v5562
        %v5632 = vunpack.c.l.b16 %v5563
        %v5633 = vunpack.c.h.b16 %v5563
        %v5634 = vunpack.c.l.b16 %v5564
        %v5635 = vunpack.c.h.b16 %v5564
        %v5636 = vunpack.c.l.b16 %v5565
        %v5637 = vunpack.c.h.b16 %v5565
        %v5638 = vunpack.c.l.b16 %v5566
        %v5639 = vunpack.c.h.b16 %v5566
        %v5640 = vunpack.c.l.b16 %v5567
        %v5641 = vunpack.c.h.b16 %v5567
        %v5642 = vunpack.c.l.b16 %v5568
        %v5643 = vunpack.c.h.b16 %v5568
        %v5644 = vunpack.c.l.b16 %v5569
        %v5645 = vunpack.c.h.b16 %v5569
        %v5646 = vunpack.c.l.b16 %v5570
        %v5647 = vunpack.c.h.b16 %v5570
        %v5648 = vunpack.c.l.b16 %v5571
        %v5649 = vunpack.c.h.b16 %v5571
        %v5650 = vunpack.c.l.b16 %v5572
        %v5651 = vunpack.c.h.b16 %v5572
        %v5652 = vunpack.c.l.b16 %v5573
        %v5653 = vunpack.c.h.b16 %v5573
        %v5654 = vunpack.c.l.b16 %v5574
        %v5655 = vunpack.c.h.b16 %v5574
        %v5656 = vunpack.c.l.b16 %v5575
        %v5657 = vunpack.c.h.b16 %v5575
        %v5658 = vunpack.c.l.b16 %v5576
        %v5659 = vunpack.c.h.b16 %v5576
        %v5660 = vunpack.c.l.b16 %v5577
        %v5661 = vunpack.c.h.b16 %v5577
        %v5662 = vunpack.c.l.b16 %v5578
        %v5663 = vunpack.c.h.b16 %v5578
        %v5664 = vunpack.c.l.b16 %v5579
        %v5665 = vunpack.c.h.b16 %v5579
        %v5666 = vunpack.c.l.b16 %v5580
        %v5667 = vunpack.c.h.b16 %v5580
        %v5668 = vunpack.c.l.b16 %v5581
        %v5669 = vunpack.c.h.b16 %v5581
        %v5670 = vunpack.c.l.b16 %v5582
        %v5671 = vunpack.c.h.b16 %v5582
        %v5672 = vunpack.c.l.b16 %v5583
        %v5673 = vunpack.c.h.b16 %v5583
        %v5674 = vunpack.c.l.b16 %v5584
        %v5675 = vunpack.c.h.b16 %v5584
        %v5676 = vunpack.c.l.b16 %v5585
        %v5677 = vunpack.c.h.b16 %v5585
        %v5678 = vunpack.c.l.b16 %v5586
        %v5679 = vunpack.c.h.b16 %v5586
        %v5680 = vunpack.c.l.b16 %v5587
        %v5681 = vunpack.c.h.b16 %v5587
        %v5682 = vunpack.c.l.b16 %v5588
        %v5683 = vunpack.c.h.b16 %v5588
        %v5684 = vunpack.c.l.b16 %v5589
        %v5685 = vunpack.c.h.b16 %v5589
        %v5686 = vpack.c.b16 %v5626, %v5622
        %v5687 = vpack.c.b16 %v5627, %v5623
        %v5688 = vpack.c.b16 %v5628, %v5624
        %v5689 = vpack.c.b16 %v5629, %v5625
        %v5690 = vpack.c.b16 %v5634, %v5630
        %v5691 = vpack.c.b16 %v5635, %v5631
        %v5692 = vpack.c.b16 %v5636, %v5632
        %v5693 = vpack.c.b16 %v5637, %v5633
        %v5694 = vpack.c.b16 %v5642, %v5638
        %v5695 = vpack.c.b16 %v5643, %v5639
        %v5696 = vpack.c.b16 %v5644, %v5640
        %v5697 = vpack.c.b16 %v5645, %v5641
        %v5698 = vpack.c.b16 %v5650, %v5646
        %v5699 = vpack.c.b16 %v5651, %v5647
        %v5700 = vpack.c.b16 %v5652, %v5648
        %v5701 = vpack.c.b16 %v5653, %v5649
        %v5702 = vpack.c.b16 %v5658, %v5654
        %v5703 = vpack.c.b16 %v5659, %v5655
        %v5704 = vpack.c.b16 %v5660, %v5656
        %v5705 = vpack.c.b16 %v5661, %v5657
        %v5706 = vpack.c.b16 %v5666, %v5662
        %v5707 = vpack.c.b16 %v5667, %v5663
        %v5708 = vpack.c.b16 %v5668, %v5664
        %v5709 = vpack.c.b16 %v5669, %v5665
        %v5710 = vpack.c.b16 %v5674, %v5670
        %v5711 = vpack.c.b16 %v5675, %v5671
        %v5712 = vpack.c.b16 %v5676, %v5672
        %v5713 = vpack.c.b16 %v5677, %v5673
        %v5714 = vpack.c.b16 %v5682, %v5678
        %v5715 = vpack.c.b16 %v5683, %v5679
        %v5716 = vpack.c.b16 %v5684, %v5680
        %v5717 = vpack.c.b16 %v5685, %v5681
        %5750 = vmatprep.subr.bf16.mxu0 %v5687
        %5751 = vmatpush1.bf16.msra.mxu0 %v5686
        %5752 = vmatprep.subr.bf16.mxu0 %v5691
        %5753 = vmatpush1.bf16.msra.mxu0 %v5690
        %5754 = vmatprep.subr.bf16.mxu0 %v5695
        %5755 = vmatpush1.bf16.msra.mxu0 %v5694
        %5756 = vmatprep.subr.bf16.mxu0 %v5699
        %5757 = vmatpush1.bf16.msra.mxu0 %v5698
        %5758 = vmatprep.subr.bf16.mxu0 %v5703
        %5759 = vmatpush1.bf16.msra.mxu0 %v5702
        %5760 = vmatprep.subr.bf16.mxu0 %v5707
        %5761 = vmatpush1.bf16.msra.mxu0 %v5706
        %5762 = vmatprep.subr.bf16.mxu0 %v5711
        %5763 = vmatpush1.bf16.msra.mxu0 %v5710
        %5764 = vmatprep.subr.bf16.mxu0 %v5715
        %5765 = vmatpush1.bf16.msra.mxu0 %v5714
        %5766 = vmatprep.subr.bf16.mxu0 0
        %5767 = vmatpush1.bf16.msra.mxu0 0
        %5768 = vmatprep.subr.bf16.mxu0 0
        %5769 = vmatpush1.bf16.msra.mxu0 0
        %5770 = vmatprep.subr.bf16.mxu0 0
        %5771 = vmatpush1.bf16.msra.mxu0 0
        %5772 = vmatprep.subr.bf16.mxu0 0
        %5773 = vmatpush1.bf16.msra.mxu0 0
        %5774 = vmatprep.subr.bf16.mxu0 0
        %5775 = vmatpush1.bf16.msra.mxu0 0
        %5776 = vmatprep.subr.bf16.mxu0 0
        %5777 = vmatpush1.bf16.msra.mxu0 0
        %5778 = vmatprep.subr.bf16.mxu0 0
        %5779 = vmatpush1.bf16.msra.mxu0 0
        %5780 = vmatprep.subr.bf16.mxu0 0
        %5781 = vmatpush1.bf16.msra.mxu0 0
        %5782 = vmatprep.mubr.bf16.mxu0 0
        %5783 = vmatmul.mubr.bf16.gmra.mrb[0].mxu0 %v5557
        %v5784 = vpop.f32.mrb[0].mxu0
        %v5785 = vadd.f32 0.0, %v5784
        %v5786 = vpop.f32.mrb[0].mxu0
        %v5787 = vadd.f32 0.0, %v5786
        %v5788 = vpop.f32.mrb[0].mxu0
        %v5789 = vpop.f32.mrb[0].mxu0
        %5790 = vdwg.mxu0
        %5791 = vmatprep.subr.bf16.mxu0 %v5689
        %5792 = vmatpush1.bf16.msra.mxu0 %v5688
        %5793 = vmatprep.subr.bf16.mxu0 %v5693
        %5794 = vmatpush1.bf16.msra.mxu0 %v5692
        %5795 = vmatprep.subr.bf16.mxu0 %v5697
        %5796 = vmatpush1.bf16.msra.mxu0 %v5696
        %5797 = vmatprep.subr.bf16.mxu0 %v5701
        %5798 = vmatpush1.bf16.msra.mxu0 %v5700
        %5799 = vmatprep.subr.bf16.mxu0 %v5705
        %5800 = vmatpush1.bf16.msra.mxu0 %v5704
        %5801 = vmatprep.subr.bf16.mxu0 %v5709
        %5802 = vmatpush1.bf16.msra.mxu0 %v5708
        %5803 = vmatprep.subr.bf16.mxu0 %v5713
        %5804 = vmatpush1.bf16.msra.mxu0 %v5712
        %5805 = vmatprep.subr.bf16.mxu0 %v5717
        %5806 = vmatpush1.bf16.msra.mxu0 %v5716
        %5807 = vmatprep.subr.bf16.mxu0 0
        %5808 = vmatpush1.bf16.msra.mxu0 0
        %5809 = vmatprep.subr.bf16.mxu0 0
        %5810 = vmatpush1.bf16.msra.mxu0 0
        %5811 = vmatprep.subr.bf16.mxu0 0
        %5812 = vmatpush1.bf16.msra.mxu0 0
        %5813 = vmatprep.subr.bf16.mxu0 0
        %5814 = vmatpush1.bf16.msra.mxu0 0
        %5815 = vmatprep.subr.bf16.mxu0 0
        %5816 = vmatpush1.bf16.msra.mxu0 0
        %5817 = vmatprep.subr.bf16.mxu0 0
        %5818 = vmatpush1.bf16.msra.mxu0 0
        %5819 = vmatprep.subr.bf16.mxu0 0
        %5820 = vmatpush1.bf16.msra.mxu0 0
        %5821 = vmatprep.subr.bf16.mxu0 0
        %5822 = vmatpush1.bf16.msra.mxu0 0
        %5823 = vmatprep.mubr.bf16.mxu0 0
        %5824 = vmatmul.mubr.bf16.gmra.mrb[0].mxu0 %v5557
        %v5825 = vpop.f32.mrb[0].mxu0
        %v5826 = vadd.f32 0.0, %v5825
        %v5827 = vpop.f32.mrb[0].mxu0
        %v5828 = vadd.f32 0.0, %v5827
        %v5829 = vpop.f32.mrb[0].mxu0
        %v5830 = vpop.f32.mrb[0].mxu0
        %5831 = vdwg.mxu0
        %v5836 = vcombine.low %v5785, %v5787
        %v5837 = vcombine.low %v5826, %v5828
        %v5839 = vunpack.c.l.s4 1966171168
        %v5840 = vunpack.c.0.s8 %v5839
        %v5841 = vlaneseq
        %v5842 = vshrl.u32 %v5841, 7
        %v5843 = vsub.s32 %v5840, %v5842
        %v5844 = vrot.slane %v5836, %v5843
        %v5846 = vunpack.c.l.s4 1966171168
        %v5847 = vunpack.c.0.s8 %v5846
        %v5848 = vlaneseq
        %v5849 = vshrl.u32 %v5848, 7
        %v5850 = vsub.s32 %v5847, %v5849
        %v5851 = vrot.slane %v5837, %v5850
        %v5852 = vcombine.low %v5844, %v5851
        %v5854 = vunpack.c.l.s4 1966171168
        %v5855 = vunpack.c.0.s8 %v5854
        %v5856 = vlaneseq
        %v5857 = vshrl.u32 %v5856, 7
        %v5858 = vsub.s32 %v5855, %v5857
        %v5859 = vrot.slane %v5852, %v5858
        %v5861 = vadd.f32 %v5556, %v5859
        %v5862 = vpack.c.bf16 %v5537, %v5537
        %v5863 = vld [vmem:[%s7 + $0x100] sm:$0xff]
        %v5864 = vld [vmem:[%s7 + $0x108] sm:$0xff]
        %v5865 = vld [vmem:[%s7 + $0x110] sm:$0xff]
        %v5866 = vld [vmem:[%s7 + $0x118] sm:$0xff]
        %v5867 = vld [vmem:[%s7 + $0x120] sm:$0xff]
        %v5868 = vld [vmem:[%s7 + $0x128] sm:$0xff]
        %v5869 = vld [vmem:[%s7 + $0x130] sm:$0xff]
        %v5870 = vld [vmem:[%s7 + $0x138] sm:$0xff]
        %v5871 = vld [vmem:[%s7 + $0x140] sm:$0xff]
        %v5872 = vld [vmem:[%s7 + $0x148] sm:$0xff]
        %v5873 = vld [vmem:[%s7 + $0x150] sm:$0xff]
        %v5874 = vld [vmem:[%s7 + $0x158] sm:$0xff]
        %v5875 = vld [vmem:[%s7 + $0x160] sm:$0xff]
        %v5876 = vld [vmem:[%s7 + $0x168] sm:$0xff]
        %v5877 = vld [vmem:[%s7 + $0x170] sm:$0xff]
        %v5878 = vld [vmem:[%s7 + $0x178] sm:$0xff]
        %v5879 = vld [vmem:[%s7 + $0x180] sm:$0xff]
        %v5880 = vld [vmem:[%s7 + $0x188] sm:$0xff]
        %v5881 = vld [vmem:[%s7 + $0x190] sm:$0xff]
        %v5882 = vld [vmem:[%s7 + $0x198] sm:$0xff]
        %v5883 = vld [vmem:[%s7 + $0x1a0] sm:$0xff]
        %v5884 = vld [vmem:[%s7 + $0x1a8] sm:$0xff]
        %v5885 = vld [vmem:[%s7 + $0x1b0] sm:$0xff]
        %v5886 = vld [vmem:[%s7 + $0x1b8] sm:$0xff]
        %v5887 = vld [vmem:[%s7 + $0x1c0] sm:$0xff]
        %v5888 = vld [vmem:[%s7 + $0x1c8] sm:$0xff]
        %v5889 = vld [vmem:[%s7 + $0x1d0] sm:$0xff]
        %v5890 = vld [vmem:[%s7 + $0x1d8] sm:$0xff]
        %v5891 = vld [vmem:[%s7 + $0x1e0] sm:$0xff]
        %v5892 = vld [vmem:[%s7 + $0x1e8] sm:$0xff]
        %v5893 = vld [vmem:[%s7 + $0x1f0] sm:$0xff]
        %v5894 = vld [vmem:[%s7 + $0x1f8] sm:$0xff]
        %v5927 = vunpack.c.l.b16 %v5863
        %v5928 = vunpack.c.h.b16 %v5863
        %v5929 = vunpack.c.l.b16 %v5864
        %v5930 = vunpack.c.h.b16 %v5864
        %v5931 = vunpack.c.l.b16 %v5865
        %v5932 = vunpack.c.h.b16 %v5865
        %v5933 = vunpack.c.l.b16 %v5866
        %v5934 = vunpack.c.h.b16 %v5866
        %v5935 = vunpack.c.l.b16 %v5867
        %v5936 = vunpack.c.h.b16 %v5867
        %v5937 = vunpack.c.l.b16 %v5868
        %v5938 = vunpack.c.h.b16 %v5868
        %v5939 = vunpack.c.l.b16 %v5869
        %v5940 = vunpack.c.h.b16 %v5869
        %v5941 = vunpack.c.l.b16 %v5870
        %v5942 = vunpack.c.h.b16 %v5870
        %v5943 = vunpack.c.l.b16 %v5871
        %v5944 = vunpack.c.h.b16 %v5871
        %v5945 = vunpack.c.l.b16 %v5872
        %v5946 = vunpack.c.h.b16 %v5872
        %v5947 = vunpack.c.l.b16 %v5873
        %v5948 = vunpack.c.h.b16 %v5873
        %v5949 = vunpack.c.l.b16 %v5874
        %v5950 = vunpack.c.h.b16 %v5874
        %v5951 = vunpack.c.l.b16 %v5875
        %v5952 = vunpack.c.h.b16 %v5875
        %v5953 = vunpack.c.l.b16 %v5876
        %v5954 = vunpack.c.h.b16 %v5876
        %v5955 = vunpack.c.l.b16 %v5877
        %v5956 = vunpack.c.h.b16 %v5877
        %v5957 = vunpack.c.l.b16 %v5878
        %v5958 = vunpack.c.h.b16 %v5878
        %v5959 = vunpack.c.l.b16 %v5879
        %v5960 = vunpack.c.h.b16 %v5879
        %v5961 = vunpack.c.l.b16 %v5880
        %v5962 = vunpack.c.h.b16 %v5880
        %v5963 = vunpack.c.l.b16 %v5881
        %v5964 = vunpack.c.h.b16 %v5881
        %v5965 = vunpack.c.l.b16 %v5882
        %v5966 = vunpack.c.h.b16 %v5882
        %v5967 = vunpack.c.l.b16 %v5883
        %v5968 = vunpack.c.h.b16 %v5883
        %v5969 = vunpack.c.l.b16 %v5884
        %v5970 = vunpack.c.h.b16 %v5884
        %v5971 = vunpack.c.l.b16 %v5885
        %v5972 = vunpack.c.h.b16 %v5885
        %v5973 = vunpack.c.l.b16 %v5886
        %v5974 = vunpack.c.h.b16 %v5886
        %v5975 = vunpack.c.l.b16 %v5887
        %v5976 = vunpack.c.h.b16 %v5887
        %v5977 = vunpack.c.l.b16 %v5888
        %v5978 = vunpack.c.h.b16 %v5888
        %v5979 = vunpack.c.l.b16 %v5889
        %v5980 = vunpack.c.h.b16 %v5889
        %v5981 = vunpack.c.l.b16 %v5890
        %v5982 = vunpack.c.h.b16 %v5890
        %v5983 = vunpack.c.l.b16 %v5891
        %v5984 = vunpack.c.h.b16 %v5891
        %v5985 = vunpack.c.l.b16 %v5892
        %v5986 = vunpack.c.h.b16 %v5892
        %v5987 = vunpack.c.l.b16 %v5893
        %v5988 = vunpack.c.h.b16 %v5893
        %v5989 = vunpack.c.l.b16 %v5894
        %v5990 = vunpack.c.h.b16 %v5894
        %v5991 = vpack.c.b16 %v5931, %v5927
        %v5992 = vpack.c.b16 %v5932, %v5928
        %v5993 = vpack.c.b16 %v5933, %v5929
        %v5994 = vpack.c.b16 %v5934, %v5930
        %v5995 = vpack.c.b16 %v5939, %v5935
        %v5996 = vpack.c.b16 %v5940, %v5936
        %v5997 = vpack.c.b16 %v5941, %v5937
        %v5998 = vpack.c.b16 %v5942, %v5938
        %v5999 = vpack.c.b16 %v5947, %v5943
        %v6000 = vpack.c.b16 %v5948, %v5944
        %v6001 = vpack.c.b16 %v5949, %v5945
        %v6002 = vpack.c.b16 %v5950, %v5946
        %v6003 = vpack.c.b16 %v5955, %v5951
        %v6004 = vpack.c.b16 %v5956, %v5952
        %v6005 = vpack.c.b16 %v5957, %v5953
        %v6006 = vpack.c.b16 %v5958, %v5954
        %v6007 = vpack.c.b16 %v5963, %v5959
        %v6008 = vpack.c.b16 %v5964, %v5960
        %v6009 = vpack.c.b16 %v5965, %v5961
        %v6010 = vpack.c.b16 %v5966, %v5962
        %v6011 = vpack.c.b16 %v5971, %v5967
        %v6012 = vpack.c.b16 %v5972, %v5968
        %v6013 = vpack.c.b16 %v5973, %v5969
        %v6014 = vpack.c.b16 %v5974, %v5970
        %v6015 = vpack.c.b16 %v5979, %v5975
        %v6016 = vpack.c.b16 %v5980, %v5976
        %v6017 = vpack.c.b16 %v5981, %v5977
        %v6018 = vpack.c.b16 %v5982, %v5978
        %v6019 = vpack.c.b16 %v5987, %v5983
        %v6020 = vpack.c.b16 %v5988, %v5984
        %v6021 = vpack.c.b16 %v5989, %v5985
        %v6022 = vpack.c.b16 %v5990, %v5986
        %6055 = vmatprep.subr.bf16.mxu0 %v5992
        %6056 = vmatpush1.bf16.msra.mxu0 %v5991
        %6057 = vmatprep.subr.bf16.mxu0 %v5996
        %6058 = vmatpush1.bf16.msra.mxu0 %v5995
        %6059 = vmatprep.subr.bf16.mxu0 %v6000
        %6060 = vmatpush1.bf16.msra.mxu0 %v5999
        %6061 = vmatprep.subr.bf16.mxu0 %v6004
        %6062 = vmatpush1.bf16.msra.mxu0 %v6003
        %6063 = vmatprep.subr.bf16.mxu0 %v6008
        %6064 = vmatpush1.bf16.msra.mxu0 %v6007
        %6065 = vmatprep.subr.bf16.mxu0 %v6012
        %6066 = vmatpush1.bf16.msra.mxu0 %v6011
        %6067 = vmatprep.subr.bf16.mxu0 %v6016
        %6068 = vmatpush1.bf16.msra.mxu0 %v6015
        %6069 = vmatprep.subr.bf16.mxu0 %v6020
        %6070 = vmatpush1.bf16.msra.mxu0 %v6019
        %6071 = vmatprep.subr.bf16.mxu0 0
        %6072 = vmatpush1.bf16.msra.mxu0 0
        %6073 = vmatprep.subr.bf16.mxu0 0
        %6074 = vmatpush1.bf16.msra.mxu0 0
        %6075 = vmatprep.subr.bf16.mxu0 0
        %6076 = vmatpush1.bf16.msra.mxu0 0
        %6077 = vmatprep.subr.bf16.mxu0 0
        %6078 = vmatpush1.bf16.msra.mxu0 0
        %6079 = vmatprep.subr.bf16.mxu0 0
        %6080 = vmatpush1.bf16.msra.mxu0 0
        %6081 = vmatprep.subr.bf16.mxu0 0
        %6082 = vmatpush1.bf16.msra.mxu0 0
        %6083 = vmatprep.subr.bf16.mxu0 0
        %6084 = vmatpush1.bf16.msra.mxu0 0
        %6085 = vmatprep.subr.bf16.mxu0 0
        %6086 = vmatpush1.bf16.msra.mxu0 0
        %6087 = vmatprep.mubr.bf16.mxu0 0
        %6088 = vmatmul.mubr.bf16.gmra.mrb[0].mxu0 %v5862
        %v6089 = vpop.f32.mrb[0].mxu0
        %v6090 = vadd.f32 0.0, %v6089
        %v6091 = vpop.f32.mrb[0].mxu0
        %v6092 = vadd.f32 0.0, %v6091
        %v6093 = vpop.f32.mrb[0].mxu0
        %v6094 = vpop.f32.mrb[0].mxu0
        %6095 = vdwg.mxu0
        %6096 = vmatprep.subr.bf16.mxu0 %v5994
        %6097 = vmatpush1.bf16.msra.mxu0 %v5993
        %6098 = vmatprep.subr.bf16.mxu0 %v5998
        %6099 = vmatpush1.bf16.msra.mxu0 %v5997
        %6100 = vmatprep.subr.bf16.mxu0 %v6002
        %6101 = vmatpush1.bf16.msra.mxu0 %v6001
        %6102 = vmatprep.subr.bf16.mxu0 %v6006
        %6103 = vmatpush1.bf16.msra.mxu0 %v6005
        %6104 = vmatprep.subr.bf16.mxu0 %v6010
        %6105 = vmatpush1.bf16.msra.mxu0 %v6009
        %6106 = vmatprep.subr.bf16.mxu0 %v6014
        %6107 = vmatpush1.bf16.msra.mxu0 %v6013
        %6108 = vmatprep.subr.bf16.mxu0 %v6018
        %6109 = vmatpush1.bf16.msra.mxu0 %v6017
        %6110 = vmatprep.subr.bf16.mxu0 %v6022
        %6111 = vmatpush1.bf16.msra.mxu0 %v6021
        %6112 = vmatprep.subr.bf16.mxu0 0
        %6113 = vmatpush1.bf16.msra.mxu0 0
        %6114 = vmatprep.subr.bf16.mxu0 0
        %6115 = vmatpush1.bf16.msra.mxu0 0
        %6116 = vmatprep.subr.bf16.mxu0 0
        %6117 = vmatpush1.bf16.msra.mxu0 0
        %6118 = vmatprep.subr.bf16.mxu0 0
        %6119 = vmatpush1.bf16.msra.mxu0 0
        %6120 = vmatprep.subr.bf16.mxu0 0
        %6121 = vmatpush1.bf16.msra.mxu0 0
        %6122 = vmatprep.subr.bf16.mxu0 0
        %6123 = vmatpush1.bf16.msra.mxu0 0
        %6124 = vmatprep.subr.bf16.mxu0 0
        %6125 = vmatpush1.bf16.msra.mxu0 0
        %6126 = vmatprep.subr.bf16.mxu0 0
        %6127 = vmatpush1.bf16.msra.mxu0 0
        %6128 = vmatprep.mubr.bf16.mxu0 0
        %6129 = vmatmul.mubr.bf16.gmra.mrb[0].mxu0 %v5862
        %v6130 = vpop.f32.mrb[0].mxu0
        %v6131 = vadd.f32 0.0, %v6130
        %v6132 = vpop.f32.mrb[0].mxu0
        %v6133 = vadd.f32 0.0, %v6132
        %v6134 = vpop.f32.mrb[0].mxu0
        %v6135 = vpop.f32.mrb[0].mxu0
        %6136 = vdwg.mxu0
        %v6141 = vcombine.low %v6090, %v6092
        %v6142 = vcombine.low %v6131, %v6133
        %v6144 = vunpack.c.l.s4 1966171168
        %v6145 = vunpack.c.0.s8 %v6144
        %v6146 = vlaneseq
        %v6147 = vshrl.u32 %v6146, 7
        %v6148 = vsub.s32 %v6145, %v6147
        %v6149 = vrot.slane %v6141, %v6148
        %v6151 = vunpack.c.l.s4 1966171168
        %v6152 = vunpack.c.0.s8 %v6151
        %v6153 = vlaneseq
        %v6154 = vshrl.u32 %v6153, 7
        %v6155 = vsub.s32 %v6152, %v6154
        %v6156 = vrot.slane %v6142, %v6155
        %v6157 = vcombine.low %v6149, %v6156
        %v6159 = vunpack.c.l.s4 1966171168
        %v6160 = vunpack.c.0.s8 %v6159
        %v6161 = vlaneseq
        %v6162 = vshrl.u32 %v6161, 7
        %v6163 = vsub.s32 %v6160, %v6162
        %v6164 = vrot.slane %v6157, %v6163
        %v6166 = vadd.f32 %v5861, %v6164
        %v6167 = vpack.c.bf16 %v5546, %v5546
        %v6168 = vld [vmem:[%s7 + $0x200] sm:$0xff]
        %v6169 = vld [vmem:[%s7 + $0x208] sm:$0xff]
        %v6170 = vld [vmem:[%s7 + $0x210] sm:$0xff]
        %v6171 = vld [vmem:[%s7 + $0x218] sm:$0xff]
        %v6172 = vld [vmem:[%s7 + $0x220] sm:$0xff]
        %v6173 = vld [vmem:[%s7 + $0x228] sm:$0xff]
        %v6174 = vld [vmem:[%s7 + $0x230] sm:$0xff]
        %v6175 = vld [vmem:[%s7 + $0x238] sm:$0xff]
        %v6176 = vld [vmem:[%s7 + $0x240] sm:$0xff]
        %v6177 = vld [vmem:[%s7 + $0x248] sm:$0xff]
        %v6178 = vld [vmem:[%s7 + $0x250] sm:$0xff]
        %v6179 = vld [vmem:[%s7 + $0x258] sm:$0xff]
        %v6180 = vld [vmem:[%s7 + $0x260] sm:$0xff]
        %v6181 = vld [vmem:[%s7 + $0x268] sm:$0xff]
        %v6182 = vld [vmem:[%s7 + $0x270] sm:$0xff]
        %v6183 = vld [vmem:[%s7 + $0x278] sm:$0xff]
        %v6184 = vld [vmem:[%s7 + $0x280] sm:$0xff]
        %v6185 = vld [vmem:[%s7 + $0x288] sm:$0xff]
        %v6186 = vld [vmem:[%s7 + $0x290] sm:$0xff]
        %v6187 = vld [vmem:[%s7 + $0x298] sm:$0xff]
        %v6188 = vld [vmem:[%s7 + $0x2a0] sm:$0xff]
        %v6189 = vld [vmem:[%s7 + $0x2a8] sm:$0xff]
        %v6190 = vld [vmem:[%s7 + $0x2b0] sm:$0xff]
        %v6191 = vld [vmem:[%s7 + $0x2b8] sm:$0xff]
        %v6192 = vld [vmem:[%s7 + $0x2c0] sm:$0xff]
        %v6193 = vld [vmem:[%s7 + $0x2c8] sm:$0xff]
        %v6194 = vld [vmem:[%s7 + $0x2d0] sm:$0xff]
        %v6195 = vld [vmem:[%s7 + $0x2d8] sm:$0xff]
        %v6196 = vld [vmem:[%s7 + $0x2e0] sm:$0xff]
        %v6197 = vld [vmem:[%s7 + $0x2e8] sm:$0xff]
        %v6198 = vld [vmem:[%s7 + $0x2f0] sm:$0xff]
        %v6199 = vld [vmem:[%s7 + $0x2f8] sm:$0xff]
        %v6232 = vunpack.c.l.b16 %v6168
        %v6233 = vunpack.c.h.b16 %v6168
        %v6234 = vunpack.c.l.b16 %v6169
        %v6235 = vunpack.c.h.b16 %v6169
        %v6236 = vunpack.c.l.b16 %v6170
        %v6237 = vunpack.c.h.b16 %v6170
        %v6238 = vunpack.c.l.b16 %v6171
        %v6239 = vunpack.c.h.b16 %v6171
        %v6240 = vunpack.c.l.b16 %v6172
        %v6241 = vunpack.c.h.b16 %v6172
        %v6242 = vunpack.c.l.b16 %v6173
        %v6243 = vunpack.c.h.b16 %v6173
        %v6244 = vunpack.c.l.b16 %v6174
        %v6245 = vunpack.c.h.b16 %v6174
        %v6246 = vunpack.c.l.b16 %v6175
        %v6247 = vunpack.c.h.b16 %v6175
        %v6248 = vunpack.c.l.b16 %v6176
        %v6249 = vunpack.c.h.b16 %v6176
        %v6250 = vunpack.c.l.b16 %v6177
        %v6251 = vunpack.c.h.b16 %v6177
        %v6252 = vunpack.c.l.b16 %v6178
        %v6253 = vunpack.c.h.b16 %v6178
        %v6254 = vunpack.c.l.b16 %v6179
        %v6255 = vunpack.c.h.b16 %v6179
        %v6256 = vunpack.c.l.b16 %v6180
        %v6257 = vunpack.c.h.b16 %v6180
        %v6258 = vunpack.c.l.b16 %v6181
        %v6259 = vunpack.c.h.b16 %v6181
        %v6260 = vunpack.c.l.b16 %v6182
        %v6261 = vunpack.c.h.b16 %v6182
        %v6262 = vunpack.c.l.b16 %v6183
        %v6263 = vunpack.c.h.b16 %v6183
        %v6264 = vunpack.c.l.b16 %v6184
        %v6265 = vunpack.c.h.b16 %v6184
        %v6266 = vunpack.c.l.b16 %v6185
        %v6267 = vunpack.c.h.b16 %v6185
        %v6268 = vunpack.c.l.b16 %v6186
        %v6269 = vunpack.c.h.b16 %v6186
        %v6270 = vunpack.c.l.b16 %v6187
        %v6271 = vunpack.c.h.b16 %v6187
        %v6272 = vunpack.c.l.b16 %v6188
        %v6273 = vunpack.c.h.b16 %v6188
        %v6274 = vunpack.c.l.b16 %v6189
        %v6275 = vunpack.c.h.b16 %v6189
        %v6276 = vunpack.c.l.b16 %v6190
        %v6277 = vunpack.c.h.b16 %v6190
        %v6278 = vunpack.c.l.b16 %v6191
        %v6279 = vunpack.c.h.b16 %v6191
        %v6280 = vunpack.c.l.b16 %v6192
        %v6281 = vunpack.c.h.b16 %v6192
        %v6282 = vunpack.c.l.b16 %v6193
        %v6283 = vunpack.c.h.b16 %v6193
        %v6284 = vunpack.c.l.b16 %v6194
        %v6285 = vunpack.c.h.b16 %v6194
        %v6286 = vunpack.c.l.b16 %v6195
        %v6287 = vunpack.c.h.b16 %v6195
        %v6288 = vunpack.c.l.b16 %v6196
        %v6289 = vunpack.c.h.b16 %v6196
        %v6290 = vunpack.c.l.b16 %v6197
        %v6291 = vunpack.c.h.b16 %v6197
        %v6292 = vunpack.c.l.b16 %v6198
        %v6293 = vunpack.c.h.b16 %v6198
        %v6294 = vunpack.c.l.b16 %v6199
        %v6295 = vunpack.c.h.b16 %v6199
        %v6296 = vpack.c.b16 %v6236, %v6232
        %v6297 = vpack.c.b16 %v6237, %v6233
        %v6298 = vpack.c.b16 %v6238, %v6234
        %v6299 = vpack.c.b16 %v6239, %v6235
        %v6300 = vpack.c.b16 %v6244, %v6240
        %v6301 = vpack.c.b16 %v6245, %v6241
        %v6302 = vpack.c.b16 %v6246, %v6242
        %v6303 = vpack.c.b16 %v6247, %v6243
        %v6304 = vpack.c.b16 %v6252, %v6248
        %v6305 = vpack.c.b16 %v6253, %v6249
        %v6306 = vpack.c.b16 %v6254, %v6250
        %v6307 = vpack.c.b16 %v6255, %v6251
        %v6308 = vpack.c.b16 %v6260, %v6256
        %v6309 = vpack.c.b16 %v6261, %v6257
        %v6310 = vpack.c.b16 %v6262, %v6258
        %v6311 = vpack.c.b16 %v6263, %v6259
        %v6312 = vpack.c.b16 %v6268, %v6264
        %v6313 = vpack.c.b16 %v6269, %v6265
        %v6314 = vpack.c.b16 %v6270, %v6266
        %v6315 = vpack.c.b16 %v6271, %v6267
        %v6316 = vpack.c.b16 %v6276, %v6272
        %v6317 = vpack.c.b16 %v6277, %v6273
        %v6318 = vpack.c.b16 %v6278, %v6274
        %v6319 = vpack.c.b16 %v6279, %v6275
        %v6320 = vpack.c.b16 %v6284, %v6280
        %v6321 = vpack.c.b16 %v6285, %v6281
        %v6322 = vpack.c.b16 %v6286, %v6282
        %v6323 = vpack.c.b16 %v6287, %v6283
        %v6324 = vpack.c.b16 %v6292, %v6288
        %v6325 = vpack.c.b16 %v6293, %v6289
        %v6326 = vpack.c.b16 %v6294, %v6290
        %v6327 = vpack.c.b16 %v6295, %v6291
        %6360 = vmatprep.subr.bf16.mxu0 %v6297
        %6361 = vmatpush1.bf16.msra.mxu0 %v6296
        %6362 = vmatprep.subr.bf16.mxu0 %v6301
        %6363 = vmatpush1.bf16.msra.mxu0 %v6300
        %6364 = vmatprep.subr.bf16.mxu0 %v6305
        %6365 = vmatpush1.bf16.msra.mxu0 %v6304
        %6366 = vmatprep.subr.bf16.mxu0 %v6309
        %6367 = vmatpush1.bf16.msra.mxu0 %v6308
        %6368 = vmatprep.subr.bf16.mxu0 %v6313
        %6369 = vmatpush1.bf16.msra.mxu0 %v6312
        %6370 = vmatprep.subr.bf16.mxu0 %v6317
        %6371 = vmatpush1.bf16.msra.mxu0 %v6316
        %6372 = vmatprep.subr.bf16.mxu0 %v6321
        %6373 = vmatpush1.bf16.msra.mxu0 %v6320
        %6374 = vmatprep.subr.bf16.mxu0 %v6325
        %6375 = vmatpush1.bf16.msra.mxu0 %v6324
        %6376 = vmatprep.subr.bf16.mxu0 0
        %6377 = vmatpush1.bf16.msra.mxu0 0
        %6378 = vmatprep.subr.bf16.mxu0 0
        %6379 = vmatpush1.bf16.msra.mxu0 0
        %6380 = vmatprep.subr.bf16.mxu0 0
        %6381 = vmatpush1.bf16.msra.mxu0 0
        %6382 = vmatprep.subr.bf16.mxu0 0
        %6383 = vmatpush1.bf16.msra.mxu0 0
        %6384 = vmatprep.subr.bf16.mxu0 0
        %6385 = vmatpush1.bf16.msra.mxu0 0
        %6386 = vmatprep.subr.bf16.mxu0 0
        %6387 = vmatpush1.bf16.msra.mxu0 0
        %6388 = vmatprep.subr.bf16.mxu0 0
        %6389 = vmatpush1.bf16.msra.mxu0 0
        %6390 = vmatprep.subr.bf16.mxu0 0
        %6391 = vmatpush1.bf16.msra.mxu0 0
        %6392 = vmatprep.mubr.bf16.mxu0 0
        %6393 = vmatmul.mubr.bf16.gmra.mrb[0].mxu0 %v6167
        %v6394 = vpop.f32.mrb[0].mxu0
        %v6395 = vadd.f32 0.0, %v6394
        %v6396 = vpop.f32.mrb[0].mxu0
        %v6397 = vadd.f32 0.0, %v6396
        %v6398 = vpop.f32.mrb[0].mxu0
        %v6399 = vpop.f32.mrb[0].mxu0
        %6400 = vdwg.mxu0
        %6401 = vmatprep.subr.bf16.mxu0 %v6299
        %6402 = vmatpush1.bf16.msra.mxu0 %v6298
        %6403 = vmatprep.subr.bf16.mxu0 %v6303
        %6404 = vmatpush1.bf16.msra.mxu0 %v6302
        %6405 = vmatprep.subr.bf16.mxu0 %v6307
        %6406 = vmatpush1.bf16.msra.mxu0 %v6306
        %6407 = vmatprep.subr.bf16.mxu0 %v6311
        %6408 = vmatpush1.bf16.msra.mxu0 %v6310
        %6409 = vmatprep.subr.bf16.mxu0 %v6315
        %6410 = vmatpush1.bf16.msra.mxu0 %v6314
        %6411 = vmatprep.subr.bf16.mxu0 %v6319
        %6412 = vmatpush1.bf16.msra.mxu0 %v6318
        %6413 = vmatprep.subr.bf16.mxu0 %v6323
        %6414 = vmatpush1.bf16.msra.mxu0 %v6322
        %6415 = vmatprep.subr.bf16.mxu0 %v6327
        %6416 = vmatpush1.bf16.msra.mxu0 %v6326
        %6417 = vmatprep.subr.bf16.mxu0 0
        %6418 = vmatpush1.bf16.msra.mxu0 0
        %6419 = vmatprep.subr.bf16.mxu0 0
        %6420 = vmatpush1.bf16.msra.mxu0 0
        %6421 = vmatprep.subr.bf16.mxu0 0
        %6422 = vmatpush1.bf16.msra.mxu0 0
        %6423 = vmatprep.subr.bf16.mxu0 0
        %6424 = vmatpush1.bf16.msra.mxu0 0
        %6425 = vmatprep.subr.bf16.mxu0 0
        %6426 = vmatpush1.bf16.msra.mxu0 0
        %6427 = vmatprep.subr.bf16.mxu0 0
        %6428 = vmatpush1.bf16.msra.mxu0 0
        %6429 = vmatprep.subr.bf16.mxu0 0
        %6430 = vmatpush1.bf16.msra.mxu0 0
        %6431 = vmatprep.subr.bf16.mxu0 0
        %6432 = vmatpush1.bf16.msra.mxu0 0
        %6433 = vmatprep.mubr.bf16.mxu0 0
        %6434 = vmatmul.mubr.bf16.gmra.mrb[0].mxu0 %v6167
        %v6435 = vpop.f32.mrb[0].mxu0
        %v6436 = vadd.f32 0.0, %v6435
        %v6437 = vpop.f32.mrb[0].mxu0
        %v6438 = vadd.f32 0.0, %v6437
        %v6439 = vpop.f32.mrb[0].mxu0
        %v6440 = vpop.f32.mrb[0].mxu0
        %6441 = vdwg.mxu0
        %v6446 = vcombine.low %v6395, %v6397
        %v6447 = vcombine.low %v6436, %v6438
        %v6449 = vunpack.c.l.s4 1966171168
        %v6450 = vunpack.c.0.s8 %v6449
        %v6451 = vlaneseq
        %v6452 = vshrl.u32 %v6451, 7
        %v6453 = vsub.s32 %v6450, %v6452
        %v6454 = vrot.slane %v6446, %v6453
        %v6456 = vunpack.c.l.s4 1966171168
        %v6457 = vunpack.c.0.s8 %v6456
        %v6458 = vlaneseq
        %v6459 = vshrl.u32 %v6458, 7
        %v6460 = vsub.s32 %v6457, %v6459
        %v6461 = vrot.slane %v6447, %v6460
        %v6462 = vcombine.low %v6454, %v6461
        %v6464 = vunpack.c.l.s4 1966171168
        %v6465 = vunpack.c.0.s8 %v6464
        %v6466 = vlaneseq
        %v6467 = vshrl.u32 %v6466, 7
        %v6468 = vsub.s32 %v6465, %v6467
        %v6469 = vrot.slane %v6462, %v6468
        %v6471 = vadd.f32 %v6166, %v6469
        %v6472 = vpack.c.bf16 %v5555, %v5555
        %v6473 = vld [vmem:[%s7 + $0x300] sm:$0xff]
        %v6474 = vld [vmem:[%s7 + $0x308] sm:$0xff]
        %v6475 = vld [vmem:[%s7 + $0x310] sm:$0xff]
        %v6476 = vld [vmem:[%s7 + $0x318] sm:$0xff]
        %v6477 = vld [vmem:[%s7 + $0x320] sm:$0xff]
        %v6478 = vld [vmem:[%s7 + $0x328] sm:$0xff]
        %v6479 = vld [vmem:[%s7 + $0x330] sm:$0xff]
        %v6480 = vld [vmem:[%s7 + $0x338] sm:$0xff]
        %v6481 = vld [vmem:[%s7 + $0x340] sm:$0xff]
        %v6482 = vld [vmem:[%s7 + $0x348] sm:$0xff]
        %v6483 = vld [vmem:[%s7 + $0x350] sm:$0xff]
        %v6484 = vld [vmem:[%s7 + $0x358] sm:$0xff]
        %v6485 = vld [vmem:[%s7 + $0x360] sm:$0xff]
        %v6486 = vld [vmem:[%s7 + $0x368] sm:$0xff]
        %v6487 = vld [vmem:[%s7 + $0x370] sm:$0xff]
        %v6488 = vld [vmem:[%s7 + $0x378] sm:$0xff]
        %v6489 = vld [vmem:[%s7 + $0x380] sm:$0xff]
        %v6490 = vld [vmem:[%s7 + $0x388] sm:$0xff]
        %v6491 = vld [vmem:[%s7 + $0x390] sm:$0xff]
        %v6492 = vld [vmem:[%s7 + $0x398] sm:$0xff]
        %v6493 = vld [vmem:[%s7 + $0x3a0] sm:$0xff]
        %v6494 = vld [vmem:[%s7 + $0x3a8] sm:$0xff]
        %v6495 = vld [vmem:[%s7 + $0x3b0] sm:$0xff]
        %v6496 = vld [vmem:[%s7 + $0x3b8] sm:$0xff]
        %v6497 = vld [vmem:[%s7 + $0x3c0] sm:$0xff]
        %v6498 = vld [vmem:[%s7 + $0x3c8] sm:$0xff]
        %v6499 = vld [vmem:[%s7 + $0x3d0] sm:$0xff]
        %v6500 = vld [vmem:[%s7 + $0x3d8] sm:$0xff]
        %v6501 = vld [vmem:[%s7 + $0x3e0] sm:$0xff]
        %v6502 = vld [vmem:[%s7 + $0x3e8] sm:$0xff]
        %v6503 = vld [vmem:[%s7 + $0x3f0] sm:$0xff]
        %v6504 = vld [vmem:[%s7 + $0x3f8] sm:$0xff]
        %v6537 = vunpack.c.l.b16 %v6473
        %v6538 = vunpack.c.h.b16 %v6473
        %v6539 = vunpack.c.l.b16 %v6474
        %v6540 = vunpack.c.h.b16 %v6474
        %v6541 = vunpack.c.l.b16 %v6475
        %v6542 = vunpack.c.h.b16 %v6475
        %v6543 = vunpack.c.l.b16 %v6476
        %v6544 = vunpack.c.h.b16 %v6476
        %v6545 = vunpack.c.l.b16 %v6477
        %v6546 = vunpack.c.h.b16 %v6477
        %v6547 = vunpack.c.l.b16 %v6478
        %v6548 = vunpack.c.h.b16 %v6478
        %v6549 = vunpack.c.l.b16 %v6479
        %v6550 = vunpack.c.h.b16 %v6479
        %v6551 = vunpack.c.l.b16 %v6480
        %v6552 = vunpack.c.h.b16 %v6480
        %v6553 = vunpack.c.l.b16 %v6481
        %v6554 = vunpack.c.h.b16 %v6481
        %v6555 = vunpack.c.l.b16 %v6482
        %v6556 = vunpack.c.h.b16 %v6482
        %v6557 = vunpack.c.l.b16 %v6483
        %v6558 = vunpack.c.h.b16 %v6483
        %v6559 = vunpack.c.l.b16 %v6484
        %v6560 = vunpack.c.h.b16 %v6484
        %v6561 = vunpack.c.l.b16 %v6485
        %v6562 = vunpack.c.h.b16 %v6485
        %v6563 = vunpack.c.l.b16 %v6486
        %v6564 = vunpack.c.h.b16 %v6486
        %v6565 = vunpack.c.l.b16 %v6487
        %v6566 = vunpack.c.h.b16 %v6487
        %v6567 = vunpack.c.l.b16 %v6488
        %v6568 = vunpack.c.h.b16 %v6488
        %v6569 = vunpack.c.l.b16 %v6489
        %v6570 = vunpack.c.h.b16 %v6489
        %v6571 = vunpack.c.l.b16 %v6490
        %v6572 = vunpack.c.h.b16 %v6490
        %v6573 = vunpack.c.l.b16 %v6491
        %v6574 = vunpack.c.h.b16 %v6491
        %v6575 = vunpack.c.l.b16 %v6492
        %v6576 = vunpack.c.h.b16 %v6492
        %v6577 = vunpack.c.l.b16 %v6493
        %v6578 = vunpack.c.h.b16 %v6493
        %v6579 = vunpack.c.l.b16 %v6494
        %v6580 = vunpack.c.h.b16 %v6494
        %v6581 = vunpack.c.l.b16 %v6495
        %v6582 = vunpack.c.h.b16 %v6495
        %v6583 = vunpack.c.l.b16 %v6496
        %v6584 = vunpack.c.h.b16 %v6496
        %v6585 = vunpack.c.l.b16 %v6497
        %v6586 = vunpack.c.h.b16 %v6497
        %v6587 = vunpack.c.l.b16 %v6498
        %v6588 = vunpack.c.h.b16 %v6498
        %v6589 = vunpack.c.l.b16 %v6499
        %v6590 = vunpack.c.h.b16 %v6499
        %v6591 = vunpack.c.l.b16 %v6500
        %v6592 = vunpack.c.h.b16 %v6500
        %v6593 = vunpack.c.l.b16 %v6501
        %v6594 = vunpack.c.h.b16 %v6501
        %v6595 = vunpack.c.l.b16 %v6502
        %v6596 = vunpack.c.h.b16 %v6502
        %v6597 = vunpack.c.l.b16 %v6503
        %v6598 = vunpack.c.h.b16 %v6503
        %v6599 = vunpack.c.l.b16 %v6504
        %v6600 = vunpack.c.h.b16 %v6504
        %v6601 = vpack.c.b16 %v6541, %v6537
        %v6602 = vpack.c.b16 %v6542, %v6538
        %v6603 = vpack.c.b16 %v6543, %v6539
        %v6604 = vpack.c.b16 %v6544, %v6540
        %v6605 = vpack.c.b16 %v6549, %v6545
        %v6606 = vpack.c.b16 %v6550, %v6546
        %v6607 = vpack.c.b16 %v6551, %v6547
        %v6608 = vpack.c.b16 %v6552, %v6548
        %v6609 = vpack.c.b16 %v6557, %v6553
        %v6610 = vpack.c.b16 %v6558, %v6554
        %v6611 = vpack.c.b16 %v6559, %v6555
        %v6612 = vpack.c.b16 %v6560, %v6556
        %v6613 = vpack.c.b16 %v6565, %v6561
        %v6614 = vpack.c.b16 %v6566, %v6562
        %v6615 = vpack.c.b16 %v6567, %v6563
        %v6616 = vpack.c.b16 %v6568, %v6564
        %v6617 = vpack.c.b16 %v6573, %v6569
        %v6618 = vpack.c.b16 %v6574, %v6570
        %v6619 = vpack.c.b16 %v6575, %v6571
        %v6620 = vpack.c.b16 %v6576, %v6572
        %v6621 = vpack.c.b16 %v6581, %v6577
        %v6622 = vpack.c.b16 %v6582, %v6578
        %v6623 = vpack.c.b16 %v6583, %v6579
        %v6624 = vpack.c.b16 %v6584, %v6580
        %v6625 = vpack.c.b16 %v6589, %v6585
        %v6626 = vpack.c.b16 %v6590, %v6586
        %v6627 = vpack.c.b16 %v6591, %v6587
        %v6628 = vpack.c.b16 %v6592, %v6588
        %v6629 = vpack.c.b16 %v6597, %v6593
        %v6630 = vpack.c.b16 %v6598, %v6594
        %v6631 = vpack.c.b16 %v6599, %v6595
        %v6632 = vpack.c.b16 %v6600, %v6596
        %6665 = vmatprep.subr.bf16.mxu0 %v6602
        %6666 = vmatpush1.bf16.msra.mxu0 %v6601
        %6667 = vmatprep.subr.bf16.mxu0 %v6606
        %6668 = vmatpush1.bf16.msra.mxu0 %v6605
        %6669 = vmatprep.subr.bf16.mxu0 %v6610
        %6670 = vmatpush1.bf16.msra.mxu0 %v6609
        %6671 = vmatprep.subr.bf16.mxu0 %v6614
        %6672 = vmatpush1.bf16.msra.mxu0 %v6613
        %6673 = vmatprep.subr.bf16.mxu0 %v6618
        %6674 = vmatpush1.bf16.msra.mxu0 %v6617
        %6675 = vmatprep.subr.bf16.mxu0 %v6622
        %6676 = vmatpush1.bf16.msra.mxu0 %v6621
        %6677 = vmatprep.subr.bf16.mxu0 %v6626
        %6678 = vmatpush1.bf16.msra.mxu0 %v6625
        %6679 = vmatprep.subr.bf16.mxu0 %v6630
        %6680 = vmatpush1.bf16.msra.mxu0 %v6629
        %6681 = vmatprep.subr.bf16.mxu0 0
        %6682 = vmatpush1.bf16.msra.mxu0 0
        %6683 = vmatprep.subr.bf16.mxu0 0
        %6684 = vmatpush1.bf16.msra.mxu0 0
        %6685 = vmatprep.subr.bf16.mxu0 0
        %6686 = vmatpush1.bf16.msra.mxu0 0
        %6687 = vmatprep.subr.bf16.mxu0 0
        %6688 = vmatpush1.bf16.msra.mxu0 0
        %6689 = vmatprep.subr.bf16.mxu0 0
        %6690 = vmatpush1.bf16.msra.mxu0 0
        %6691 = vmatprep.subr.bf16.mxu0 0
        %6692 = vmatpush1.bf16.msra.mxu0 0
        %6693 = vmatprep.subr.bf16.mxu0 0
        %6694 = vmatpush1.bf16.msra.mxu0 0
        %6695 = vmatprep.subr.bf16.mxu0 0
        %6696 = vmatpush1.bf16.msra.mxu0 0
        %6697 = vmatprep.mubr.bf16.mxu0 0
        %6698 = vmatmul.mubr.bf16.gmra.mrb[0].mxu0 %v6472
        %v6699 = vpop.f32.mrb[0].mxu0
        %v6700 = vadd.f32 0.0, %v6699
        %v6701 = vpop.f32.mrb[0].mxu0
        %v6702 = vadd.f32 0.0, %v6701
        %v6703 = vpop.f32.mrb[0].mxu0
        %v6704 = vpop.f32.mrb[0].mxu0
        %6705 = vdwg.mxu0
        %6706 = vmatprep.subr.bf16.mxu0 %v6604
        %6707 = vmatpush1.bf16.msra.mxu0 %v6603
        %6708 = vmatprep.subr.bf16.mxu0 %v6608
        %6709 = vmatpush1.bf16.msra.mxu0 %v6607
        %6710 = vmatprep.subr.bf16.mxu0 %v6612
        %6711 = vmatpush1.bf16.msra.mxu0 %v6611
        %6712 = vmatprep.subr.bf16.mxu0 %v6616
        %6713 = vmatpush1.bf16.msra.mxu0 %v6615
        %6714 = vmatprep.subr.bf16.mxu0 %v6620
        %6715 = vmatpush1.bf16.msra.mxu0 %v6619
        %6716 = vmatprep.subr.bf16.mxu0 %v6624
        %6717 = vmatpush1.bf16.msra.mxu0 %v6623
        %6718 = vmatprep.subr.bf16.mxu0 %v6628
        %6719 = vmatpush1.bf16.msra.mxu0 %v6627
        %6720 = vmatprep.subr.bf16.mxu0 %v6632
        %6721 = vmatpush1.bf16.msra.mxu0 %v6631
        %6722 = vmatprep.subr.bf16.mxu0 0
        %6723 = vmatpush1.bf16.msra.mxu0 0
        %6724 = vmatprep.subr.bf16.mxu0 0
        %6725 = vmatpush1.bf16.msra.mxu0 0
        %6726 = vmatprep.subr.bf16.mxu0 0
        %6727 = vmatpush1.bf16.msra.mxu0 0
        %6728 = vmatprep.subr.bf16.mxu0 0
        %6729 = vmatpush1.bf16.msra.mxu0 0
        %6730 = vmatprep.subr.bf16.mxu0 0
        %6731 = vmatpush1.bf16.msra.mxu0 0
        %6732 = vmatprep.subr.bf16.mxu0 0
        %6733 = vmatpush1.bf16.msra.mxu0 0
        %6734 = vmatprep.subr.bf16.mxu0 0
        %6735 = vmatpush1.bf16.msra.mxu0 0
        %6736 = vmatprep.subr.bf16.mxu0 0
        %6737 = vmatpush1.bf16.msra.mxu0 0
        %6738 = vmatprep.mubr.bf16.mxu0 0
        %6739 = vmatmul.mubr.bf16.gmra.mrb[0].mxu0 %v6472
        %v6740 = vpop.f32.mrb[0].mxu0
        %v6741 = vadd.f32 0.0, %v6740
        %v6742 = vpop.f32.mrb[0].mxu0
        %v6743 = vadd.f32 0.0, %v6742
        %v6744 = vpop.f32.mrb[0].mxu0
        %v6745 = vpop.f32.mrb[0].mxu0
        %6746 = vdwg.mxu0
        %v6751 = vcombine.low %v6700, %v6702
        %v6752 = vcombine.low %v6741, %v6743
        %v6754 = vunpack.c.l.s4 1966171168
        %v6755 = vunpack.c.0.s8 %v6754
        %v6756 = vlaneseq
        %v6757 = vshrl.u32 %v6756, 7
        %v6758 = vsub.s32 %v6755, %v6757
        %v6759 = vrot.slane %v6751, %v6758
        %v6761 = vunpack.c.l.s4 1966171168
        %v6762 = vunpack.c.0.s8 %v6761
        %v6763 = vlaneseq
        %v6764 = vshrl.u32 %v6763, 7
        %v6765 = vsub.s32 %v6762, %v6764
        %v6766 = vrot.slane %v6752, %v6765
        %v6767 = vcombine.low %v6759, %v6766
        %v6769 = vunpack.c.l.s4 1966171168
        %v6770 = vunpack.c.0.s8 %v6769
        %v6771 = vlaneseq
        %v6772 = vshrl.u32 %v6771, 7
        %v6773 = vsub.s32 %v6770, %v6772
        %v6774 = vrot.slane %v6767, %v6773
        %v6776 = vadd.f32 %v6471, %v6774
        %v6777 = vmax.f32 %v6776, 0.0
        %v6779 = vlaneseq
        %v6780 = vshrl.u32 %v6779, 7
        %v6781 = vsub.s32 0, %v6780
        %v6782 = vrot.slane %v6777, %v6781
        %v6783 = vlaneseq
        %v6784 = vshrl.u32 %v6783, 7
        %v6785 = vsub.s32 1, %v6784
        %v6786 = vrot.slane %v6777, %v6785
        %v6787 = vlaneseq
        %v6788 = vshrl.u32 %v6787, 7
        %v6789 = vsub.s32 2, %v6788
        %v6790 = vrot.slane %v6777, %v6789
        %v6791 = vlaneseq
        %v6792 = vshrl.u32 %v6791, 7
        %v6793 = vsub.s32 3, %v6792
        %v6794 = vrot.slane %v6777, %v6793
        %v6799 = vpack.c.bf16 %v6782, %v6782
        %v6800 = vpack.c.bf16 %v6786, %v6786
        %v6801 = vpack.c.bf16 %v6790, %v6790
        %v6802 = vpack.c.bf16 %v6794, %v6794
        %v6803 = vld [vmem:[%s9] sm:$0xf]
        %v6804 = vld [vmem:[%s9 + $0x4] sm:$0xf]
        %v6805 = vld [vmem:[%s9 + $0x8] sm:$0xf]
        %v6806 = vld [vmem:[%s9 + $0xc] sm:$0xf]
        %v6807 = vld [vmem:[%s9 + $0x10] sm:$0xf]
        %v6808 = vld [vmem:[%s9 + $0x14] sm:$0xf]
        %v6809 = vld [vmem:[%s9 + $0x18] sm:$0xf]
        %v6810 = vld [vmem:[%s9 + $0x1c] sm:$0xf]
        %v6811 = vld [vmem:[%s9 + $0x20] sm:$0xf]
        %v6812 = vld [vmem:[%s9 + $0x24] sm:$0xf]
        %v6813 = vld [vmem:[%s9 + $0x28] sm:$0xf]
        %v6814 = vld [vmem:[%s9 + $0x2c] sm:$0xf]
        %v6815 = vld [vmem:[%s9 + $0x30] sm:$0xf]
        %v6816 = vld [vmem:[%s9 + $0x34] sm:$0xf]
        %v6817 = vld [vmem:[%s9 + $0x38] sm:$0xf]
        %v6818 = vld [vmem:[%s9 + $0x3c] sm:$0xf]
        %v6819 = vld [vmem:[%s9 + $0x40] sm:$0xf]
        %v6820 = vld [vmem:[%s9 + $0x44] sm:$0xf]
        %v6821 = vld [vmem:[%s9 + $0x48] sm:$0xf]
        %v6822 = vld [vmem:[%s9 + $0x4c] sm:$0xf]
        %v6823 = vld [vmem:[%s9 + $0x50] sm:$0xf]
        %v6824 = vld [vmem:[%s9 + $0x54] sm:$0xf]
        %v6825 = vld [vmem:[%s9 + $0x58] sm:$0xf]
        %v6826 = vld [vmem:[%s9 + $0x5c] sm:$0xf]
        %v6827 = vld [vmem:[%s9 + $0x60] sm:$0xf]
        %v6828 = vld [vmem:[%s9 + $0x64] sm:$0xf]
        %v6829 = vld [vmem:[%s9 + $0x68] sm:$0xf]
        %v6830 = vld [vmem:[%s9 + $0x6c] sm:$0xf]
        %v6831 = vld [vmem:[%s9 + $0x70] sm:$0xf]
        %v6832 = vld [vmem:[%s9 + $0x74] sm:$0xf]
        %v6833 = vld [vmem:[%s9 + $0x78] sm:$0xf]
        %v6834 = vld [vmem:[%s9 + $0x7c] sm:$0xf]
        %v6835 = vld [vmem:[%s9 + $0x80] sm:$0xf]
        %v6836 = vld [vmem:[%s9 + $0x84] sm:$0xf]
        %v6837 = vld [vmem:[%s9 + $0x88] sm:$0xf]
        %v6838 = vld [vmem:[%s9 + $0x8c] sm:$0xf]
        %v6839 = vld [vmem:[%s9 + $0x90] sm:$0xf]
        %v6840 = vld [vmem:[%s9 + $0x94] sm:$0xf]
        %v6841 = vld [vmem:[%s9 + $0x98] sm:$0xf]
        %v6842 = vld [vmem:[%s9 + $0x9c] sm:$0xf]
        %v6843 = vld [vmem:[%s9 + $0xa0] sm:$0xf]
        %v6844 = vld [vmem:[%s9 + $0xa4] sm:$0xf]
        %v6845 = vld [vmem:[%s9 + $0xa8] sm:$0xf]
        %v6846 = vld [vmem:[%s9 + $0xac] sm:$0xf]
        %v6847 = vld [vmem:[%s9 + $0xb0] sm:$0xf]
        %v6848 = vld [vmem:[%s9 + $0xb4] sm:$0xf]
        %v6849 = vld [vmem:[%s9 + $0xb8] sm:$0xf]
        %v6850 = vld [vmem:[%s9 + $0xbc] sm:$0xf]
        %v6851 = vld [vmem:[%s9 + $0xc0] sm:$0xf]
        %v6852 = vld [vmem:[%s9 + $0xc4] sm:$0xf]
        %v6853 = vld [vmem:[%s9 + $0xc8] sm:$0xf]
        %v6854 = vld [vmem:[%s9 + $0xcc] sm:$0xf]
        %v6855 = vld [vmem:[%s9 + $0xd0] sm:$0xf]
        %v6856 = vld [vmem:[%s9 + $0xd4] sm:$0xf]
        %v6857 = vld [vmem:[%s9 + $0xd8] sm:$0xf]
        %v6858 = vld [vmem:[%s9 + $0xdc] sm:$0xf]
        %v6859 = vld [vmem:[%s9 + $0xe0] sm:$0xf]
        %v6860 = vld [vmem:[%s9 + $0xe4] sm:$0xf]
        %v6861 = vld [vmem:[%s9 + $0xe8] sm:$0xf]
        %v6862 = vld [vmem:[%s9 + $0xec] sm:$0xf]
        %v6863 = vld [vmem:[%s9 + $0xf0] sm:$0xf]
        %v6864 = vld [vmem:[%s9 + $0xf4] sm:$0xf]
        %v6865 = vld [vmem:[%s9 + $0xf8] sm:$0xf]
        %v6866 = vld [vmem:[%s9 + $0xfc] sm:$0xf]
        %v6867 = vld [vmem:[%s10] sm:$0x1]
        %v6932 = vunpack.c.l.b16 %v6803
        %v6933 = vunpack.c.l.b16 %v6804
        %v6934 = vunpack.c.l.b16 %v6805
        %v6935 = vunpack.c.l.b16 %v6806
        %v6936 = vunpack.c.l.b16 %v6807
        %v6937 = vunpack.c.l.b16 %v6808
        %v6938 = vunpack.c.l.b16 %v6809
        %v6939 = vunpack.c.l.b16 %v6810
        %v6940 = vunpack.c.l.b16 %v6811
        %v6941 = vunpack.c.l.b16 %v6812
        %v6942 = vunpack.c.l.b16 %v6813
        %v6943 = vunpack.c.l.b16 %v6814
        %v6944 = vunpack.c.l.b16 %v6815
        %v6945 = vunpack.c.l.b16 %v6816
        %v6946 = vunpack.c.l.b16 %v6817
        %v6947 = vunpack.c.l.b16 %v6818
        %v6948 = vunpack.c.l.b16 %v6819
        %v6949 = vunpack.c.l.b16 %v6820
        %v6950 = vunpack.c.l.b16 %v6821
        %v6951 = vunpack.c.l.b16 %v6822
        %v6952 = vunpack.c.l.b16 %v6823
        %v6953 = vunpack.c.l.b16 %v6824
        %v6954 = vunpack.c.l.b16 %v6825
        %v6955 = vunpack.c.l.b16 %v6826
        %v6956 = vunpack.c.l.b16 %v6827
        %v6957 = vunpack.c.l.b16 %v6828
        %v6958 = vunpack.c.l.b16 %v6829
        %v6959 = vunpack.c.l.b16 %v6830
        %v6960 = vunpack.c.l.b16 %v6831
        %v6961 = vunpack.c.l.b16 %v6832
        %v6962 = vunpack.c.l.b16 %v6833
        %v6963 = vunpack.c.l.b16 %v6834
        %v6964 = vunpack.c.l.b16 %v6835
        %v6965 = vunpack.c.l.b16 %v6836
        %v6966 = vunpack.c.l.b16 %v6837
        %v6967 = vunpack.c.l.b16 %v6838
        %v6968 = vunpack.c.l.b16 %v6839
        %v6969 = vunpack.c.l.b16 %v6840
        %v6970 = vunpack.c.l.b16 %v6841
        %v6971 = vunpack.c.l.b16 %v6842
        %v6972 = vunpack.c.l.b16 %v6843
        %v6973 = vunpack.c.l.b16 %v6844
        %v6974 = vunpack.c.l.b16 %v6845
        %v6975 = vunpack.c.l.b16 %v6846
        %v6976 = vunpack.c.l.b16 %v6847
        %v6977 = vunpack.c.l.b16 %v6848
        %v6978 = vunpack.c.l.b16 %v6849
        %v6979 = vunpack.c.l.b16 %v6850
        %v6980 = vunpack.c.l.b16 %v6851
        %v6981 = vunpack.c.l.b16 %v6852
        %v6982 = vunpack.c.l.b16 %v6853
        %v6983 = vunpack.c.l.b16 %v6854
        %v6984 = vunpack.c.l.b16 %v6855
        %v6985 = vunpack.c.l.b16 %v6856
        %v6986 = vunpack.c.l.b16 %v6857
        %v6987 = vunpack.c.l.b16 %v6858
        %v6988 = vunpack.c.l.b16 %v6859
        %v6989 = vunpack.c.l.b16 %v6860
        %v6990 = vunpack.c.l.b16 %v6861
        %v6991 = vunpack.c.l.b16 %v6862
        %v6992 = vunpack.c.l.b16 %v6863
        %v6993 = vunpack.c.l.b16 %v6864
        %v6994 = vunpack.c.l.b16 %v6865
        %v6995 = vunpack.c.l.b16 %v6866
        %v6996 = vpack.c.b16 %v6933, %v6932
        %v6997 = vpack.c.b16 %v6935, %v6934
        %v6998 = vpack.c.b16 %v6937, %v6936
        %v6999 = vpack.c.b16 %v6939, %v6938
        %v7000 = vpack.c.b16 %v6941, %v6940
        %v7001 = vpack.c.b16 %v6943, %v6942
        %v7002 = vpack.c.b16 %v6945, %v6944
        %v7003 = vpack.c.b16 %v6947, %v6946
        %v7004 = vpack.c.b16 %v6949, %v6948
        %v7005 = vpack.c.b16 %v6951, %v6950
        %v7006 = vpack.c.b16 %v6953, %v6952
        %v7007 = vpack.c.b16 %v6955, %v6954
        %v7008 = vpack.c.b16 %v6957, %v6956
        %v7009 = vpack.c.b16 %v6959, %v6958
        %v7010 = vpack.c.b16 %v6961, %v6960
        %v7011 = vpack.c.b16 %v6963, %v6962
        %v7012 = vpack.c.b16 %v6965, %v6964
        %v7013 = vpack.c.b16 %v6967, %v6966
        %v7014 = vpack.c.b16 %v6969, %v6968
        %v7015 = vpack.c.b16 %v6971, %v6970
        %v7016 = vpack.c.b16 %v6973, %v6972
        %v7017 = vpack.c.b16 %v6975, %v6974
        %v7018 = vpack.c.b16 %v6977, %v6976
        %v7019 = vpack.c.b16 %v6979, %v6978
        %v7020 = vpack.c.b16 %v6981, %v6980
        %v7021 = vpack.c.b16 %v6983, %v6982
        %v7022 = vpack.c.b16 %v6985, %v6984
        %v7023 = vpack.c.b16 %v6987, %v6986
        %v7024 = vpack.c.b16 %v6989, %v6988
        %v7025 = vpack.c.b16 %v6991, %v6990
        %v7026 = vpack.c.b16 %v6993, %v6992
        %v7027 = vpack.c.b16 %v6995, %v6994
        %7060 = vmatprep.subr.bf16.mxu0 0
        %7061 = vmatpush1.bf16.msra.mxu0 %v6996
        %7062 = vmatprep.subr.bf16.mxu0 0
        %7063 = vmatpush1.bf16.msra.mxu0 %v6997
        %7064 = vmatprep.subr.bf16.mxu0 0
        %7065 = vmatpush1.bf16.msra.mxu0 %v6998
        %7066 = vmatprep.subr.bf16.mxu0 0
        %7067 = vmatpush1.bf16.msra.mxu0 %v6999
        %7068 = vmatprep.subr.bf16.mxu0 0
        %7069 = vmatpush1.bf16.msra.mxu0 %v7000
        %7070 = vmatprep.subr.bf16.mxu0 0
        %7071 = vmatpush1.bf16.msra.mxu0 %v7001
        %7072 = vmatprep.subr.bf16.mxu0 0
        %7073 = vmatpush1.bf16.msra.mxu0 %v7002
        %7074 = vmatprep.subr.bf16.mxu0 0
        %7075 = vmatpush1.bf16.msra.mxu0 %v7003
        %7076 = vmatprep.subr.bf16.mxu0 0
        %7077 = vmatpush1.bf16.msra.mxu0 %v7004
        %7078 = vmatprep.subr.bf16.mxu0 0
        %7079 = vmatpush1.bf16.msra.mxu0 %v7005
        %7080 = vmatprep.subr.bf16.mxu0 0
        %7081 = vmatpush1.bf16.msra.mxu0 %v7006
        %7082 = vmatprep.subr.bf16.mxu0 0
        %7083 = vmatpush1.bf16.msra.mxu0 %v7007
        %7084 = vmatprep.subr.bf16.mxu0 0
        %7085 = vmatpush1.bf16.msra.mxu0 %v7008
        %7086 = vmatprep.subr.bf16.mxu0 0
        %7087 = vmatpush1.bf16.msra.mxu0 %v7009
        %7088 = vmatprep.subr.bf16.mxu0 0
        %7089 = vmatpush1.bf16.msra.mxu0 %v7010
        %7090 = vmatprep.subr.bf16.mxu0 0
        %7091 = vmatpush1.bf16.msra.mxu0 %v7011
        %7092 = vmatprep.mubr.bf16.mxu0 %v6800
        %7093 = vmatmul.mubr.bf16.gmra.mrb[0].mxu0 %v6799
        %v7094 = vpop.f32.mrb[0].mxu0
        %v7095 = vadd.f32 %v6867, %v7094
        %v7096 = vpop.f32.mrb[0].mxu0
        %v7097 = vpop.f32.mrb[0].mxu0
        %v7098 = vpop.f32.mrb[0].mxu0
        %7099 = vdwg.mxu0
        %7100 = vmatprep.subr.bf16.mxu0 0
        %7101 = vmatpush1.bf16.msra.mxu0 %v7012
        %7102 = vmatprep.subr.bf16.mxu0 0
        %7103 = vmatpush1.bf16.msra.mxu0 %v7013
        %7104 = vmatprep.subr.bf16.mxu0 0
        %7105 = vmatpush1.bf16.msra.mxu0 %v7014
        %7106 = vmatprep.subr.bf16.mxu0 0
        %7107 = vmatpush1.bf16.msra.mxu0 %v7015
        %7108 = vmatprep.subr.bf16.mxu0 0
        %7109 = vmatpush1.bf16.msra.mxu0 %v7016
        %7110 = vmatprep.subr.bf16.mxu0 0
        %7111 = vmatpush1.bf16.msra.mxu0 %v7017
        %7112 = vmatprep.subr.bf16.mxu0 0
        %7113 = vmatpush1.bf16.msra.mxu0 %v7018
        %7114 = vmatprep.subr.bf16.mxu0 0
        %7115 = vmatpush1.bf16.msra.mxu0 %v7019
        %7116 = vmatprep.subr.bf16.mxu0 0
        %7117 = vmatpush1.bf16.msra.mxu0 %v7020
        %7118 = vmatprep.subr.bf16.mxu0 0
        %7119 = vmatpush1.bf16.msra.mxu0 %v7021
        %7120 = vmatprep.subr.bf16.mxu0 0
        %7121 = vmatpush1.bf16.msra.mxu0 %v7022
        %7122 = vmatprep.subr.bf16.mxu0 0
        %7123 = vmatpush1.bf16.msra.mxu0 %v7023
        %7124 = vmatprep.subr.bf16.mxu0 0
        %7125 = vmatpush1.bf16.msra.mxu0 %v7024
        %7126 = vmatprep.subr.bf16.mxu0 0
        %7127 = vmatpush1.bf16.msra.mxu0 %v7025
        %7128 = vmatprep.subr.bf16.mxu0 0
        %7129 = vmatpush1.bf16.msra.mxu0 %v7026
        %7130 = vmatprep.subr.bf16.mxu0 0
        %7131 = vmatpush1.bf16.msra.mxu0 %v7027
        %7132 = vmatprep.mubr.bf16.mxu0 %v6802
        %7133 = vmatmul.mubr.bf16.gmra.mrb[0].mxu0 %v6801
        %v7134 = vpop.f32.mrb[0].mxu0
        %v7135 = vadd.f32 %v7095, %v7134
        %v7136 = vpop.f32.mrb[0].mxu0
        %v7137 = vpop.f32.mrb[0].mxu0
        %v7138 = vpop.f32.mrb[0].mxu0
        %7139 = vdwg.mxu0
        %7140 = vst [vmem:[%s397] sm:$0x1] %v7135
        %s7141 = sand.u32 %s285, 1
        %s7142 = scalar_lea.sflag [#allocation6], %s7141
        %s7143 = sand.u32 %s285, 1
        %s7144 = scalar_lea.vmem [#allocation5], %s7143
        // Predicated region
        $region77: #{simple_cnn_forward.1} parent=63 // pred_check
          %p7145 = pneg %p295
        $region78: #{simple_cnn_forward.1} parent=63 // pred_check_branch
          %7147 = sbr.rel (%p7145) target = $region80
        $region79: #{simple_cnn_forward.1} parent=63 // pred_region
          %s7148 = sadd.s32 %s29, %s30
          %s7150 = ssub.s32 16, 16
          %7151 = vsyncadd %s7142, %s7150
          %s7152 = smul.addr %s7148, 16
          %s7153 = scalar_lea.hbm %s11, %s7152
          %s7155 = sshll.u32 %s7144, 4
          %s7156 = int_to_ptr.vmem [resolvable:$true] %s7155
          %7158 = dma.vmem_to_hbm [thread:$0]  %s7156, 16, %s7153, %s7142
        $region80: #{simple_cnn_forward.1} parent=63 // pred_fallthru
          _
      $region64: #{simple_cnn_forward.1} parent=5 // pred_fallthru
        _
      %p7159 = scmp.le.s32.totalorder 2, %s20
      // Predicated region
      $region81: #{simple_cnn_forward.1} parent=5 // pred_check
        %p7160 = pneg %p7159
      $region82: #{simple_cnn_forward.1} parent=5 // pred_check_branch
        %7162 = sbr.rel (%p7160) target = $region84
      $region83: #{simple_cnn_forward.1} parent=5 // pred_region
        %s7163 = ssub.s32 %s20, 2
        // Predicated region
        $region85: #{simple_cnn_forward.1} parent=83 // pred_check
          %p7164 = pneg %p301
        $region86: #{simple_cnn_forward.1} parent=83 // pred_check_branch
          %7166 = sbr.rel (%p7164) target = $region88
        $region87: #{simple_cnn_forward.1} parent=83 // pred_region
          %s7167 = sand.u32 %s286, 1
          %s7168 = scalar_lea.sflag [#allocation6], %s7167
          %s7169 = sand.u32 %s286, 1
          %s7170 = scalar_lea.vmem [#allocation5], %s7169
          %7171 = dma.done %s7168, 16
        $region88: #{simple_cnn_forward.1} parent=83 // pred_fallthru
          _
      $region84: #{simple_cnn_forward.1} parent=5 // pred_fallthru
        _
    $region6: #{simple_cnn_forward.1} parent=1 // loop_footer
      %s24 = sadd.s32 1, %s20
    $region7: #{simple_cnn_forward.1} parent=1 // loop_footer_branch
      %19 = sbr.rel target = $region3
    $region8: #{simple_cnn_forward.1} parent=1 // loop_exit
      _
    %7172 = vsyncpa [#allocation6], 1
    %s7173 = scalar_lea.sflag [#allocation6], 1
    %7174 = vsyncpa %s7173, 1

</llo_original>
